<compile_context>
chip_gen: v7x
topology: tpu7x:2x2x1
jax: 0.10.0
libtpu: 0.0.40
codegen_flags: <defaults>
</compile_context>

<pallas_src>
import functools

import jax
import jax.numpy as jnp
from jax import lax
from jax.experimental import pallas as pl
from jax.experimental.pallas import tpu as pltpu

# ---- small, TPU-lane-aligned hyperparameters (PyTorch: 1000/256/512/20/32) ---
INPUT_DIM = 100   # vocab size
EMB_DIM   = 128   # multiple of 128 lanes
HID_DIM   = 128   # multiple of 128 lanes
N_LAYERS  = 2
SEQ_LEN   = 8
BATCH     = 8     # multiple of 8 sublanes


# ----------------------- fused 2-layer LSTM kernel ------------------------
def _lstm_stack_kernel(x_ref, wih0_ref, whh0_ref, b0_ref,
                       wih1_ref, whh1_ref, b1_ref,
                       hN_ref, cN_ref, seq_sc, xw_sc, *, seq_len, batch, hid):
    """Runs both LSTM layers over all timesteps in a single invocation.

    x_ref    : (T*B, E)      embedded input, flattened time-major
    wih*_ref : (IN, 4H)      fused input weights  (W_ih^T), gate order i,f,g,o
    whh*_ref : (H, 4H)       fused hidden weights (W_hh^T)
    b*_ref   : (1, 4H)       combined bias (b_ih + b_hh)
    hN_ref   : (2, B, H)     final hidden state per layer
    cN_ref   : (2, B, H)     final cell state per layer
    seq_sc   : (T*B, H)      VMEM scratch: layer-0 outputs consumed by layer 1
    xw_sc    : (T*B, 4H)     VMEM scratch: hoisted input projection
    """
    T, B, H = seq_len, batch, hid

    def run_layer(layer_idx, x_all, wih_ref, whh_ref, b_ref, out_seq_ref):
        # Hoisted input projection: ONE batched matmul over all T*B rows.
        # Parked in VMEM scratch so it is not held live in vregs across the
        # serial loop (128 KiB would otherwise eat half the register file).
        xw_sc[...] = (jnp.dot(x_all, wih_ref[...],
                              preferred_element_type=jnp.float32)
                      + b_ref[...])

        whh = whh_ref[...]                             # (H, 4H)
        h = jnp.zeros((B, H), jnp.float32)
        c = jnp.zeros((B, H), jnp.float32)

        # Statically unrolled recurrence: only h @ W_hh is sequential work,
        # and it is a single (B,H)@(H,4H) matmul per step.
        for t in range(T):
            row = t * B                                # static, sublane-aligned
            pre = xw_sc[row:row + B, :] + jnp.dot(
                h, whh, preferred_element_type=jnp.float32)   # (B, 4H)
            # Gate slices are 128-lane aligned (H == 128) -> free re-views.
            i_g = jax.nn.sigmoid(pre[:, 0 * H:1 * H])
            f_g = jax.nn.sigmoid(pre[:, 1 * H:2 * H])
            g_g = jnp.tanh(pre[:, 2 * H:3 * H])
            o_g = jax.nn.sigmoid(pre[:, 3 * H:4 * H])
            c = f_g * c + i_g * g_g
            h = o_g * jnp.tanh(c)
            if out_seq_ref is not None:
                out_seq_ref[row:row + B, :] = h        # stays in VMEM for layer 1

        # Final states written exactly once (not overwritten every step).
        hN_ref[layer_idx] = h
        cN_ref[layer_idx] = c

    run_layer(0, x_ref[...], wih0_ref, whh0_ref, b0_ref, seq_sc)
    # inter-layer dropout: eval-mode identity
    run_layer(1, seq_sc[...], wih1_ref, whh1_ref, b1_ref, None)


# ------------------------------ Encoder -----------------------------------
def init_params(key):
    """Raw parameters in PyTorch nn.LSTM layout (used by the pure-JAX ref)."""
    params = {}
    k_emb, key = jax.random.split(key)
    params["embedding"] = jax.random.normal(
        k_emb, (INPUT_DIM, EMB_DIM), jnp.float32) * 0.1
    bound = 1.0 / jnp.sqrt(HID_DIM)
    in_dims = [EMB_DIM] + [HID_DIM] * (N_LAYERS - 1)
    for l in range(N_LAYERS):
        for name, shape in [
            (f"w_ih_l{l}", (4 * HID_DIM, in_dims[l])),
            (f"w_hh_l{l}", (4 * HID_DIM, HID_DIM)),
            (f"b_ih_l{l}", (4 * HID_DIM,)),
            (f"b_hh_l{l}", (4 * HID_DIM,)),
        ]:
            k, key = jax.random.split(key)
            params[name] = jax.random.uniform(
                k, shape, jnp.float32, -bound, bound)
    return params


def prepare_params(params):
    """One-time conversion to kernel layout (done at init, NOT per forward):
    fused transposed weights (IN, 4H) and combined (1, 4H) biases."""
    H = HID_DIM
    kp = {"embedding": params["embedding"].astype(jnp.float32)}
    for l in range(N_LAYERS):
        kp[f"wih{l}"] = params[f"w_ih_l{l}"].T.astype(jnp.float32)   # (IN, 4H)
        kp[f"whh{l}"] = params[f"w_hh_l{l}"].T.astype(jnp.float32)   # (H, 4H)
        b = params[f"b_ih_l{l}"] + params[f"b_hh_l{l}"]              # (4H,)
        kp[f"b{l}"] = b.reshape(1, 4 * H).astype(jnp.float32)        # (1, 4H)
    return kp


@jax.jit
def encoder_forward(src, kp):
    """src: (T, B) int32. Returns (hidden, cell), each (N_LAYERS, B, HID_DIM)."""
    T, B = src.shape
    embedded = jnp.take(kp["embedding"], src, axis=0)  # (T, B, E)
    # dropout: eval-mode identity
    x2d = embedded.reshape(T * B, EMB_DIM)             # flatten outside the kernel

    kern = functools.partial(_lstm_stack_kernel,
                             seq_len=T, batch=B, hid=HID_DIM)
    vmem = pl.BlockSpec(memory_space=pltpu.MemorySpace.VMEM)
    h_n, c_n = pl.pallas_call(
        kern,
        out_shape=(
            jax.ShapeDtypeStruct((N_LAYERS, B, HID_DIM), jnp.float32),
            jax.ShapeDtypeStruct((N_LAYERS, B, HID_DIM), jnp.float32),
        ),
        in_specs=[vmem] * 7,
        out_specs=(vmem, vmem),
        scratch_shapes=[
            pltpu.VMEM((T * B, HID_DIM), jnp.float32),      # layer-0 outputs
            pltpu.VMEM((T * B, 4 * HID_DIM), jnp.float32),  # hoisted x @ W_ih
        ],
    )(x2d, kp["wih0"], kp["whh0"], kp["b0"],
      kp["wih1"], kp["whh1"], kp["b1"])
    return h_n, c_n


# --------------------------- pure-JAX reference ----------------------------
def lstm_layer_ref(x, w_ih, w_hh, b_ih, b_hh):
    T, B, _ = x.shape
    H = w_hh.shape[1]

    def step(carry, x_t):
        h, c = carry
        gates = x_t @ w_ih.T + h @ w_hh.T + b_ih + b_hh
        i, f, g, o = jnp.split(gates, 4, axis=-1)
        i, f, o = jax.nn.sigmoid(i), jax.nn.sigmoid(f), jax.nn.sigmoid(o)
        g = jnp.tanh(g)
        c = f * c + i * g
        h = o * jnp.tanh(c)
        return (h, c), h

    init = (jnp.zeros((B, H), jnp.float32), jnp.zeros((B, H), jnp.float32))
    (h_n, c_n), outs = lax.scan(step, init, x)
    return outs, h_n, c_n


def encoder_ref(src, params):
    x = jnp.take(params["embedding"], src, axis=0)
    hs, cs = [], []
    for l in range(N_LAYERS):
        x, h_n, c_n = lstm_layer_ref(
            x,
            params[f"w_ih_l{l}"], params[f"w_hh_l{l}"],
            params[f"b_ih_l{l}"], params[f"b_hh_l{l}"])
        hs.append(h_n)
        cs.append(c_n)
    return jnp.stack(hs, axis=0), jnp.stack(cs, axis=0)


# --------------------------------- main ------------------------------------
if __name__ == "__main__":
    key = jax.random.PRNGKey(0)
    k_src, k_params = jax.random.split(key)

    src = jax.random.randint(k_src, (SEQ_LEN, BATCH), 1, INPUT_DIM,
                             dtype=jnp.int32)
    params = init_params(k_params)
    kparams = prepare_params(params)   # one-time layout conversion

    hidden, cell = encoder_forward(src, kparams)
    hidden, cell = jax.block_until_ready((hidden, cell))

    h_ref, c_ref = encoder_ref(src, params)
    assert hidden.shape == (N_LAYERS, BATCH, HID_DIM)
    assert cell.shape == (N_LAYERS, BATCH, HID_DIM)
    assert jnp.allclose(hidden, h_ref, atol=1e-4, rtol=1e-4)
    assert jnp.allclose(cell, c_ref, atol=1e-4, rtol=1e-4)

    print("KERNEL_OK")
</pallas_src>

<mosaic_0001>
module attributes {stable_mosaic.version = 11 : i64} {
  func.func @_lstm_stack_kernel(%arg0: memref<64x128xf32, #tpu.memory_space<vmem>>, %arg1: memref<128x512xf32, #tpu.memory_space<vmem>>, %arg2: memref<128x512xf32, #tpu.memory_space<vmem>>, %arg3: memref<1x512xf32, #tpu.memory_space<vmem>>, %arg4: memref<128x512xf32, #tpu.memory_space<vmem>>, %arg5: memref<128x512xf32, #tpu.memory_space<vmem>>, %arg6: memref<1x512xf32, #tpu.memory_space<vmem>>, %arg7: memref<2x8x128xf32, #tpu.memory_space<vmem>>, %arg8: memref<2x8x128xf32, #tpu.memory_space<vmem>>, %arg9: memref<64x128xf32, #tpu.memory_space<vmem>>, %arg10: memref<64x512xf32, #tpu.memory_space<vmem>>) attributes {dimension_semantics = [], scalar_prefetch = 0 : i64, scratch_operands = 2 : i64, tpu.core_type = #tpu.core_type<tc>} {
    %c0 = arith.constant 0 : index
    %c0_0 = arith.constant 0 : index
    %0 = vector.load %arg0[%c0, %c0_0] : memref<64x128xf32, #tpu.memory_space<vmem>>, vector<64x128xf32>
    %c0_1 = arith.constant 0 : index
    %c0_2 = arith.constant 0 : index
    %1 = vector.load %arg1[%c0_1, %c0_2] : memref<128x512xf32, #tpu.memory_space<vmem>>, vector<128x512xf32>
    %cst = arith.constant dense<0.000000e+00> : vector<64x512xf32>
    %2 = tpu.matmul %0, %1, %cst {dimension_numbers = #tpu.dot_dimension_numbers<[1], [0], [0], [1], [0, 0, 1, 1], [], []>} : vector<64x128xf32>, vector<128x512xf32>, vector<64x512xf32> -> vector<64x512xf32>
    %c0_3 = arith.constant 0 : index
    %c0_4 = arith.constant 0 : index
    %3 = vector.load %arg3[%c0_3, %c0_4] : memref<1x512xf32, #tpu.memory_space<vmem>>, vector<1x512xf32>
    %4 = vector.broadcast %3 : vector<1x512xf32> to vector<64x512xf32>
    %5 = arith.addf %2, %4 : vector<64x512xf32>
    %c0_5 = arith.constant 0 : index
    %c0_6 = arith.constant 0 : index
    %6 = vector.load %arg10[%c0_5, %c0_6] : memref<64x512xf32, #tpu.memory_space<vmem>>, vector<64x512xf32>
    tpu.vector_store %arg10[%c0_5, %c0_6], %5 {strides = array<i32>} : memref<64x512xf32, #tpu.memory_space<vmem>>, vector<64x512xf32>,
    %c0_7 = arith.constant 0 : index
    %c0_8 = arith.constant 0 : index
    %7 = vector.load %arg2[%c0_7, %c0_8] : memref<128x512xf32, #tpu.memory_space<vmem>>, vector<128x512xf32>
    %cst_9 = arith.constant 0.000000e+00 : f32
    %8 = vector.broadcast %cst_9 : f32 to vector<8x128xf32>
    %cst_10 = arith.constant 0.000000e+00 : f32
    %9 = vector.broadcast %cst_10 : f32 to vector<8x128xf32>
    %c0_11 = arith.constant 0 : index
    %c0_12 = arith.constant 0 : index
    %10 = vector.load %arg10[%c0_11, %c0_12] : memref<64x512xf32, #tpu.memory_space<vmem>>, vector<8x512xf32>
    %cst_13 = arith.constant dense<0.000000e+00> : vector<8x512xf32>
    %11 = tpu.matmul %8, %7, %cst_13 {dimension_numbers = #tpu.dot_dimension_numbers<[1], [0], [0], [1], [0, 0, 1, 1], [], []>} : vector<8x128xf32>, vector<128x512xf32>, vector<8x512xf32> -> vector<8x512xf32>
    %12 = arith.addf %10, %11 : vector<8x512xf32>
    %13 = vector.extract_strided_slice %12 {offsets = [0, 0], sizes = [8, 128], strides = [1, 1]} : vector<8x512xf32> to vector<8x128xf32>
    %14 = arith.negf %13 : vector<8x128xf32>
    %15 = math.exp %14 : vector<8x128xf32>
    %cst_14 = arith.constant 1.000000e+00 : f32
    %16 = vector.broadcast %cst_14 : f32 to vector<8x128xf32>
    %17 = arith.addf %16, %15 : vector<8x128xf32>
    %18 = arith.divf %16, %17 : vector<8x128xf32>
    %19 = vector.extract_strided_slice %12 {offsets = [0, 128], sizes = [8, 128], strides = [1, 1]} : vector<8x512xf32> to vector<8x128xf32>
    %20 = arith.negf %19 : vector<8x128xf32>
    %21 = math.exp %20 : vector<8x128xf32>
    %cst_15 = arith.constant 1.000000e+00 : f32
    %22 = vector.broadcast %cst_15 : f32 to vector<8x128xf32>
    %23 = arith.addf %22, %21 : vector<8x128xf32>
    %24 = arith.divf %22, %23 : vector<8x128xf32>
    %25 = vector.extract_strided_slice %12 {offsets = [0, 256], sizes = [8, 128], strides = [1, 1]} : vector<8x512xf32> to vector<8x128xf32>
    %26 = math.tanh %25 : vector<8x128xf32>
    %27 = vector.extract_strided_slice %12 {offsets = [0, 384], sizes = [8, 128], strides = [1, 1]} : vector<8x512xf32> to vector<8x128xf32>
    %28 = arith.negf %27 : vector<8x128xf32>
    %29 = math.exp %28 : vector<8x128xf32>
    %cst_16 = arith.constant 1.000000e+00 : f32
    %30 = vector.broadcast %cst_16 : f32 to vector<8x128xf32>
    %31 = arith.addf %30, %29 : vector<8x128xf32>
    %32 = arith.divf %30, %31 : vector<8x128xf32>
    %33 = arith.mulf %24, %9 : vector<8x128xf32>
    %34 = arith.mulf %18, %26 : vector<8x128xf32>
    %35 = arith.addf %33, %34 : vector<8x128xf32>
    %36 = math.tanh %35 : vector<8x128xf32>
    %37 = arith.mulf %32, %36 : vector<8x128xf32>
    %c0_17 = arith.constant 0 : index
    %c0_18 = arith.constant 0 : index
    %38 = vector.load %arg9[%c0_17, %c0_18] : memref<64x128xf32, #tpu.memory_space<vmem>>, vector<8x128xf32>
    tpu.vector_store %arg9[%c0_17, %c0_18], %37 {strides = array<i32>} : memref<64x128xf32, #tpu.memory_space<vmem>>, vector<8x128xf32>,
    %c8 = arith.constant 8 : index
    %c0_19 = arith.constant 0 : index
    %39 = vector.load %arg10[%c8, %c0_19] : memref<64x512xf32, #tpu.memory_space<vmem>>, vector<8x512xf32>
    %cst_20 = arith.constant dense<0.000000e+00> : vector<8x512xf32>
    %40 = tpu.matmul %37, %7, %cst_20 {dimension_numbers = #tpu.dot_dimension_numbers<[1], [0], [0], [1], [0, 0, 1, 1], [], []>} : vector<8x128xf32>, vector<128x512xf32>, vector<8x512xf32> -> vector<8x512xf32>
    %41 = arith.addf %39, %40 : vector<8x512xf32>
    %42 = vector.extract_strided_slice %41 {offsets = [0, 0], sizes = [8, 128], strides = [1, 1]} : vector<8x512xf32> to vector<8x128xf32>
    %43 = arith.negf %42 : vector<8x128xf32>
    %44 = math.exp %43 : vector<8x128xf32>
    %cst_21 = arith.constant 1.000000e+00 : f32
    %45 = vector.broadcast %cst_21 : f32 to vector<8x128xf32>
    %46 = arith.addf %45, %44 : vector<8x128xf32>
    %47 = arith.divf %45, %46 : vector<8x128xf32>
    %48 = vector.extract_strided_slice %41 {offsets = [0, 128], sizes = [8, 128], strides = [1, 1]} : vector<8x512xf32> to vector<8x128xf32>
    %49 = arith.negf %48 : vector<8x128xf32>
    %50 = math.exp %49 : vector<8x128xf32>
    %cst_22 = arith.constant 1.000000e+00 : f32
    %51 = vector.broadcast %cst_22 : f32 to vector<8x128xf32>
    %52 = arith.addf %51, %50 : vector<8x128xf32>
    %53 = arith.divf %51, %52 : vector<8x128xf32>
    %54 = vector.extract_strided_slice %41 {offsets = [0, 256], sizes = [8, 128], strides = [1, 1]} : vector<8x512xf32> to vector<8x128xf32>
    %55 = math.tanh %54 : vector<8x128xf32>
    %56 = vector.extract_strided_slice %41 {offsets = [0, 384], sizes = [8, 128], strides = [1, 1]} : vector<8x512xf32> to vector<8x128xf32>
    %57 = arith.negf %56 : vector<8x128xf32>
    %58 = math.exp %57 : vector<8x128xf32>
    %cst_23 = arith.constant 1.000000e+00 : f32
    %59 = vector.broadcast %cst_23 : f32 to vector<8x128xf32>
    %60 = arith.addf %59, %58 : vector<8x128xf32>
    %61 = arith.divf %59, %60 : vector<8x128xf32>
    %62 = arith.mulf %53, %35 : vector<8x128xf32>
    %63 = arith.mulf %47, %55 : vector<8x128xf32>
    %64 = arith.addf %62, %63 : vector<8x128xf32>
    %65 = math.tanh %64 : vector<8x128xf32>
    %66 = arith.mulf %61, %65 : vector<8x128xf32>
    %c8_24 = arith.constant 8 : index
    %c0_25 = arith.constant 0 : index
    %67 = vector.load %arg9[%c8_24, %c0_25] : memref<64x128xf32, #tpu.memory_space<vmem>>, vector<8x128xf32>
    tpu.vector_store %arg9[%c8_24, %c0_25], %66 {strides = array<i32>} : memref<64x128xf32, #tpu.memory_space<vmem>>, vector<8x128xf32>,
    %c16 = arith.constant 16 : index
    %c0_26 = arith.constant 0 : index
    %68 = vector.load %arg10[%c16, %c0_26] : memref<64x512xf32, #tpu.memory_space<vmem>>, vector<8x512xf32>
    %cst_27 = arith.constant dense<0.000000e+00> : vector<8x512xf32>
    %69 = tpu.matmul %66, %7, %cst_27 {dimension_numbers = #tpu.dot_dimension_numbers<[1], [0], [0], [1], [0, 0, 1, 1], [], []>} : vector<8x128xf32>, vector<128x512xf32>, vector<8x512xf32> -> vector<8x512xf32>
    %70 = arith.addf %68, %69 : vector<8x512xf32>
    %71 = vector.extract_strided_slice %70 {offsets = [0, 0], sizes = [8, 128], strides = [1, 1]} : vector<8x512xf32> to vector<8x128xf32>
    %72 = arith.negf %71 : vector<8x128xf32>
    %73 = math.exp %72 : vector<8x128xf32>
    %cst_28 = arith.constant 1.000000e+00 : f32
    %74 = vector.broadcast %cst_28 : f32 to vector<8x128xf32>
    %75 = arith.addf %74, %73 : vector<8x128xf32>
    %76 = arith.divf %74, %75 : vector<8x128xf32>
    %77 = vector.extract_strided_slice %70 {offsets = [0, 128], sizes = [8, 128], strides = [1, 1]} : vector<8x512xf32> to vector<8x128xf32>
    %78 = arith.negf %77 : vector<8x128xf32>
    %79 = math.exp %78 : vector<8x128xf32>
    %cst_29 = arith.constant 1.000000e+00 : f32
    %80 = vector.broadcast %cst_29 : f32 to vector<8x128xf32>
    %81 = arith.addf %80, %79 : vector<8x128xf32>
    %82 = arith.divf %80, %81 : vector<8x128xf32>
    %83 = vector.extract_strided_slice %70 {offsets = [0, 256], sizes = [8, 128], strides = [1, 1]} : vector<8x512xf32> to vector<8x128xf32>
    %84 = math.tanh %83 : vector<8x128xf32>
    %85 = vector.extract_strided_slice %70 {offsets = [0, 384], sizes = [8, 128], strides = [1, 1]} : vector<8x512xf32> to vector<8x128xf32>
    %86 = arith.negf %85 : vector<8x128xf32>
    %87 = math.exp %86 : vector<8x128xf32>
    %cst_30 = arith.constant 1.000000e+00 : f32
    %88 = vector.broadcast %cst_30 : f32 to vector<8x128xf32>
    %89 = arith.addf %88, %87 : vector<8x128xf32>
    %90 = arith.divf %88, %89 : vector<8x128xf32>
    %91 = arith.mulf %82, %64 : vector<8x128xf32>
    %92 = arith.mulf %76, %84 : vector<8x128xf32>
    %93 = arith.addf %91, %92 : vector<8x128xf32>
    %94 = math.tanh %93 : vector<8x128xf32>
    %95 = arith.mulf %90, %94 : vector<8x128xf32>
    %c16_31 = arith.constant 16 : index
    %c0_32 = arith.constant 0 : index
    %96 = vector.load %arg9[%c16_31, %c0_32] : memref<64x128xf32, #tpu.memory_space<vmem>>, vector<8x128xf32>
    tpu.vector_store %arg9[%c16_31, %c0_32], %95 {strides = array<i32>} : memref<64x128xf32, #tpu.memory_space<vmem>>, vector<8x128xf32>,
    %c24 = arith.constant 24 : index
    %c0_33 = arith.constant 0 : index
    %97 = vector.load %arg10[%c24, %c0_33] : memref<64x512xf32, #tpu.memory_space<vmem>>, vector<8x512xf32>
    %cst_34 = arith.constant dense<0.000000e+00> : vector<8x512xf32>
    %98 = tpu.matmul %95, %7, %cst_34 {dimension_numbers = #tpu.dot_dimension_numbers<[1], [0], [0], [1], [0, 0, 1, 1], [], []>} : vector<8x128xf32>, vector<128x512xf32>, vector<8x512xf32> -> vector<8x512xf32>
    %99 = arith.addf %97, %98 : vector<8x512xf32>
    %100 = vector.extract_strided_slice %99 {offsets = [0, 0], sizes = [8, 128], strides = [1, 1]} : vector<8x512xf32> to vector<8x128xf32>
    %101 = arith.negf %100 : vector<8x128xf32>
    %102 = math.exp %101 : vector<8x128xf32>
    %cst_35 = arith.constant 1.000000e+00 : f32
    %103 = vector.broadcast %cst_35 : f32 to vector<8x128xf32>
    %104 = arith.addf %103, %102 : vector<8x128xf32>
    %105 = arith.divf %103, %104 : vector<8x128xf32>
    %106 = vector.extract_strided_slice %99 {offsets = [0, 128], sizes = [8, 128], strides = [1, 1]} : vector<8x512xf32> to vector<8x128xf32>
    %107 = arith.negf %106 : vector<8x128xf32>
    %108 = math.exp %107 : vector<8x128xf32>
    %cst_36 = arith.constant 1.000000e+00 : f32
    %109 = vector.broadcast %cst_36 : f32 to vector<8x128xf32>
    %110 = arith.addf %109, %108 : vector<8x128xf32>
    %111 = arith.divf %109, %110 : vector<8x128xf32>
    %112 = vector.extract_strided_slice %99 {offsets = [0, 256], sizes = [8, 128], strides = [1, 1]} : vector<8x512xf32> to vector<8x128xf32>
    %113 = math.tanh %112 : vector<8x128xf32>
    %114 = vector.extract_strided_slice %99 {offsets = [0, 384], sizes = [8, 128], strides = [1, 1]} : vector<8x512xf32> to vector<8x128xf32>
    %115 = arith.negf %114 : vector<8x128xf32>
    %116 = math.exp %115 : vector<8x128xf32>
    %cst_37 = arith.constant 1.000000e+00 : f32
    %117 = vector.broadcast %cst_37 : f32 to vector<8x128xf32>
    %118 = arith.addf %117, %116 : vector<8x128xf32>
    %119 = arith.divf %117, %118 : vector<8x128xf32>
    %120 = arith.mulf %111, %93 : vector<8x128xf32>
    %121 = arith.mulf %105, %113 : vector<8x128xf32>
    %122 = arith.addf %120, %121 : vector<8x128xf32>
    %123 = math.tanh %122 : vector<8x128xf32>
    %124 = arith.mulf %119, %123 : vector<8x128xf32>
    %c24_38 = arith.constant 24 : index
    %c0_39 = arith.constant 0 : index
    %125 = vector.load %arg9[%c24_38, %c0_39] : memref<64x128xf32, #tpu.memory_space<vmem>>, vector<8x128xf32>
    tpu.vector_store %arg9[%c24_38, %c0_39], %124 {strides = array<i32>} : memref<64x128xf32, #tpu.memory_space<vmem>>, vector<8x128xf32>,
    %c32 = arith.constant 32 : index
    %c0_40 = arith.constant 0 : index
    %126 = vector.load %arg10[%c32, %c0_40] : memref<64x512xf32, #tpu.memory_space<vmem>>, vector<8x512xf32>
    %cst_41 = arith.constant dense<0.000000e+00> : vector<8x512xf32>
    %127 = tpu.matmul %124, %7, %cst_41 {dimension_numbers = #tpu.dot_dimension_numbers<[1], [0], [0], [1], [0, 0, 1, 1], [], []>} : vector<8x128xf32>, vector<128x512xf32>, vector<8x512xf32> -> vector<8x512xf32>
    %128 = arith.addf %126, %127 : vector<8x512xf32>
    %129 = vector.extract_strided_slice %128 {offsets = [0, 0], sizes = [8, 128], strides = [1, 1]} : vector<8x512xf32> to vector<8x128xf32>
    %130 = arith.negf %129 : vector<8x128xf32>
    %131 = math.exp %130 : vector<8x128xf32>
    %cst_42 = arith.constant 1.000000e+00 : f32
    %132 = vector.broadcast %cst_42 : f32 to vector<8x128xf32>
    %133 = arith.addf %132, %131 : vector<8x128xf32>
    %134 = arith.divf %132, %133 : vector<8x128xf32>
    %135 = vector.extract_strided_slice %128 {offsets = [0, 128], sizes = [8, 128], strides = [1, 1]} : vector<8x512xf32> to vector<8x128xf32>
    %136 = arith.negf %135 : vector<8x128xf32>
    %137 = math.exp %136 : vector<8x128xf32>
    %cst_43 = arith.constant 1.000000e+00 : f32
    %138 = vector.broadcast %cst_43 : f32 to vector<8x128xf32>
    %139 = arith.addf %138, %137 : vector<8x128xf32>
    %140 = arith.divf %138, %139 : vector<8x128xf32>
    %141 = vector.extract_strided_slice %128 {offsets = [0, 256], sizes = [8, 128], strides = [1, 1]} : vector<8x512xf32> to vector<8x128xf32>
    %142 = math.tanh %141 : vector<8x128xf32>
    %143 = vector.extract_strided_slice %128 {offsets = [0, 384], sizes = [8, 128], strides = [1, 1]} : vector<8x512xf32> to vector<8x128xf32>
    %144 = arith.negf %143 : vector<8x128xf32>
    %145 = math.exp %144 : vector<8x128xf32>
    %cst_44 = arith.constant 1.000000e+00 : f32
    %146 = vector.broadcast %cst_44 : f32 to vector<8x128xf32>
    %147 = arith.addf %146, %145 : vector<8x128xf32>
    %148 = arith.divf %146, %147 : vector<8x128xf32>
    %149 = arith.mulf %140, %122 : vector<8x128xf32>
    %150 = arith.mulf %134, %142 : vector<8x128xf32>
    %151 = arith.addf %149, %150 : vector<8x128xf32>
    %152 = math.tanh %151 : vector<8x128xf32>
    %153 = arith.mulf %148, %152 : vector<8x128xf32>
    %c32_45 = arith.constant 32 : index
    %c0_46 = arith.constant 0 : index
    %154 = vector.load %arg9[%c32_45, %c0_46] : memref<64x128xf32, #tpu.memory_space<vmem>>, vector<8x128xf32>
    tpu.vector_store %arg9[%c32_45, %c0_46], %153 {strides = array<i32>} : memref<64x128xf32, #tpu.memory_space<vmem>>, vector<8x128xf32>,
    %c40 = arith.constant 40 : index
    %c0_47 = arith.constant 0 : index
    %155 = vector.load %arg10[%c40, %c0_47] : memref<64x512xf32, #tpu.memory_space<vmem>>, vector<8x512xf32>
    %cst_48 = arith.constant dense<0.000000e+00> : vector<8x512xf32>
    %156 = tpu.matmul %153, %7, %cst_48 {dimension_numbers = #tpu.dot_dimension_numbers<[1], [0], [0], [1], [0, 0, 1, 1], [], []>} : vector<8x128xf32>, vector<128x512xf32>, vector<8x512xf32> -> vector<8x512xf32>
    %157 = arith.addf %155, %156 : vector<8x512xf32>
    %158 = vector.extract_strided_slice %157 {offsets = [0, 0], sizes = [8, 128], strides = [1, 1]} : vector<8x512xf32> to vector<8x128xf32>
    %159 = arith.negf %158 : vector<8x128xf32>
    %160 = math.exp %159 : vector<8x128xf32>
    %cst_49 = arith.constant 1.000000e+00 : f32
    %161 = vector.broadcast %cst_49 : f32 to vector<8x128xf32>
    %162 = arith.addf %161, %160 : vector<8x128xf32>
    %163 = arith.divf %161, %162 : vector<8x128xf32>
    %164 = vector.extract_strided_slice %157 {offsets = [0, 128], sizes = [8, 128], strides = [1, 1]} : vector<8x512xf32> to vector<8x128xf32>
    %165 = arith.negf %164 : vector<8x128xf32>
    %166 = math.exp %165 : vector<8x128xf32>
    %cst_50 = arith.constant 1.000000e+00 : f32
    %167 = vector.broadcast %cst_50 : f32 to vector<8x128xf32>
    %168 = arith.addf %167, %166 : vector<8x128xf32>
    %169 = arith.divf %167, %168 : vector<8x128xf32>
    %170 = vector.extract_strided_slice %157 {offsets = [0, 256], sizes = [8, 128], strides = [1, 1]} : vector<8x512xf32> to vector<8x128xf32>
    %171 = math.tanh %170 : vector<8x128xf32>
    %172 = vector.extract_strided_slice %157 {offsets = [0, 384], sizes = [8, 128], strides = [1, 1]} : vector<8x512xf32> to vector<8x128xf32>
    %173 = arith.negf %172 : vector<8x128xf32>
    %174 = math.exp %173 : vector<8x128xf32>
    %cst_51 = arith.constant 1.000000e+00 : f32
    %175 = vector.broadcast %cst_51 : f32 to vector<8x128xf32>
    %176 = arith.addf %175, %174 : vector<8x128xf32>
    %177 = arith.divf %175, %176 : vector<8x128xf32>
    %178 = arith.mulf %169, %151 : vector<8x128xf32>
    %179 = arith.mulf %163, %171 : vector<8x128xf32>
    %180 = arith.addf %178, %179 : vector<8x128xf32>
    %181 = math.tanh %180 : vector<8x128xf32>
    %182 = arith.mulf %177, %181 : vector<8x128xf32>
    %c40_52 = arith.constant 40 : index
    %c0_53 = arith.constant 0 : index
    %183 = vector.load %arg9[%c40_52, %c0_53] : memref<64x128xf32, #tpu.memory_space<vmem>>, vector<8x128xf32>
    tpu.vector_store %arg9[%c40_52, %c0_53], %182 {strides = array<i32>} : memref<64x128xf32, #tpu.memory_space<vmem>>, vector<8x128xf32>,
    %c48 = arith.constant 48 : index
    %c0_54 = arith.constant 0 : index
    %184 = vector.load %arg10[%c48, %c0_54] : memref<64x512xf32, #tpu.memory_space<vmem>>, vector<8x512xf32>
    %cst_55 = arith.constant dense<0.000000e+00> : vector<8x512xf32>
    %185 = tpu.matmul %182, %7, %cst_55 {dimension_numbers = #tpu.dot_dimension_numbers<[1], [0], [0], [1], [0, 0, 1, 1], [], []>} : vector<8x128xf32>, vector<128x512xf32>, vector<8x512xf32> -> vector<8x512xf32>
    %186 = arith.addf %184, %185 : vector<8x512xf32>
    %187 = vector.extract_strided_slice %186 {offsets = [0, 0], sizes = [8, 128], strides = [1, 1]} : vector<8x512xf32> to vector<8x128xf32>
    %188 = arith.negf %187 : vector<8x128xf32>
    %189 = math.exp %188 : vector<8x128xf32>
    %cst_56 = arith.constant 1.000000e+00 : f32
    %190 = vector.broadcast %cst_56 : f32 to vector<8x128xf32>
    %191 = arith.addf %190, %189 : vector<8x128xf32>
    %192 = arith.divf %190, %191 : vector<8x128xf32>
    %193 = vector.extract_strided_slice %186 {offsets = [0, 128], sizes = [8, 128], strides = [1, 1]} : vector<8x512xf32> to vector<8x128xf32>
    %194 = arith.negf %193 : vector<8x128xf32>
    %195 = math.exp %194 : vector<8x128xf32>
    %cst_57 = arith.constant 1.000000e+00 : f32
    %196 = vector.broadcast %cst_57 : f32 to vector<8x128xf32>
    %197 = arith.addf %196, %195 : vector<8x128xf32>
    %198 = arith.divf %196, %197 : vector<8x128xf32>
    %199 = vector.extract_strided_slice %186 {offsets = [0, 256], sizes = [8, 128], strides = [1, 1]} : vector<8x512xf32> to vector<8x128xf32>
    %200 = math.tanh %199 : vector<8x128xf32>
    %201 = vector.extract_strided_slice %186 {offsets = [0, 384], sizes = [8, 128], strides = [1, 1]} : vector<8x512xf32> to vector<8x128xf32>
    %202 = arith.negf %201 : vector<8x128xf32>
    %203 = math.exp %202 : vector<8x128xf32>
    %cst_58 = arith.constant 1.000000e+00 : f32
    %204 = vector.broadcast %cst_58 : f32 to vector<8x128xf32>
    %205 = arith.addf %204, %203 : vector<8x128xf32>
    %206 = arith.divf %204, %205 : vector<8x128xf32>
    %207 = arith.mulf %198, %180 : vector<8x128xf32>
    %208 = arith.mulf %192, %200 : vector<8x128xf32>
    %209 = arith.addf %207, %208 : vector<8x128xf32>
    %210 = math.tanh %209 : vector<8x128xf32>
    %211 = arith.mulf %206, %210 : vector<8x128xf32>
    %c48_59 = arith.constant 48 : index
    %c0_60 = arith.constant 0 : index
    %212 = vector.load %arg9[%c48_59, %c0_60] : memref<64x128xf32, #tpu.memory_space<vmem>>, vector<8x128xf32>
    tpu.vector_store %arg9[%c48_59, %c0_60], %211 {strides = array<i32>} : memref<64x128xf32, #tpu.memory_space<vmem>>, vector<8x128xf32>,
    %c56 = arith.constant 56 : index
    %c0_61 = arith.constant 0 : index
    %213 = vector.load %arg10[%c56, %c0_61] : memref<64x512xf32, #tpu.memory_space<vmem>>, vector<8x512xf32>
    %cst_62 = arith.constant dense<0.000000e+00> : vector<8x512xf32>
    %214 = tpu.matmul %211, %7, %cst_62 {dimension_numbers = #tpu.dot_dimension_numbers<[1], [0], [0], [1], [0, 0, 1, 1], [], []>} : vector<8x128xf32>, vector<128x512xf32>, vector<8x512xf32> -> vector<8x512xf32>
    %215 = arith.addf %213, %214 : vector<8x512xf32>
    %216 = vector.extract_strided_slice %215 {offsets = [0, 0], sizes = [8, 128], strides = [1, 1]} : vector<8x512xf32> to vector<8x128xf32>
    %217 = arith.negf %216 : vector<8x128xf32>
    %218 = math.exp %217 : vector<8x128xf32>
    %cst_63 = arith.constant 1.000000e+00 : f32
    %219 = vector.broadcast %cst_63 : f32 to vector<8x128xf32>
    %220 = arith.addf %219, %218 : vector<8x128xf32>
    %221 = arith.divf %219, %220 : vector<8x128xf32>
    %222 = vector.extract_strided_slice %215 {offsets = [0, 128], sizes = [8, 128], strides = [1, 1]} : vector<8x512xf32> to vector<8x128xf32>
    %223 = arith.negf %222 : vector<8x128xf32>
    %224 = math.exp %223 : vector<8x128xf32>
    %cst_64 = arith.constant 1.000000e+00 : f32
    %225 = vector.broadcast %cst_64 : f32 to vector<8x128xf32>
    %226 = arith.addf %225, %224 : vector<8x128xf32>
    %227 = arith.divf %225, %226 : vector<8x128xf32>
    %228 = vector.extract_strided_slice %215 {offsets = [0, 256], sizes = [8, 128], strides = [1, 1]} : vector<8x512xf32> to vector<8x128xf32>
    %229 = math.tanh %228 : vector<8x128xf32>
    %230 = vector.extract_strided_slice %215 {offsets = [0, 384], sizes = [8, 128], strides = [1, 1]} : vector<8x512xf32> to vector<8x128xf32>
    %231 = arith.negf %230 : vector<8x128xf32>
    %232 = math.exp %231 : vector<8x128xf32>
    %cst_65 = arith.constant 1.000000e+00 : f32
    %233 = vector.broadcast %cst_65 : f32 to vector<8x128xf32>
    %234 = arith.addf %233, %232 : vector<8x128xf32>
    %235 = arith.divf %233, %234 : vector<8x128xf32>
    %236 = arith.mulf %227, %209 : vector<8x128xf32>
    %237 = arith.mulf %221, %229 : vector<8x128xf32>
    %238 = arith.addf %236, %237 : vector<8x128xf32>
    %239 = math.tanh %238 : vector<8x128xf32>
    %240 = arith.mulf %235, %239 : vector<8x128xf32>
    %c56_66 = arith.constant 56 : index
    %c0_67 = arith.constant 0 : index
    %241 = vector.load %arg9[%c56_66, %c0_67] : memref<64x128xf32, #tpu.memory_space<vmem>>, vector<8x128xf32>
    tpu.vector_store %arg9[%c56_66, %c0_67], %240 {strides = array<i32>} : memref<64x128xf32, #tpu.memory_space<vmem>>, vector<8x128xf32>,
    %c0_68 = arith.constant 0 : index
    %c0_69 = arith.constant 0 : index
    %c0_70 = arith.constant 0 : index
    %242 = vector.load %arg7[%c0_68, %c0_69, %c0_70] : memref<2x8x128xf32, #tpu.memory_space<vmem>>, vector<1x8x128xf32>
    %243 = vector.shape_cast %242 : vector<1x8x128xf32> to vector<8x128xf32>
    %244 = vector.shape_cast %240 : vector<8x128xf32> to vector<1x8x128xf32>
    tpu.vector_store %arg7[%c0_68, %c0_69, %c0_70], %244 {strides = array<i32>} : memref<2x8x128xf32, #tpu.memory_space<vmem>>, vector<1x8x128xf32>,
    %c0_71 = arith.constant 0 : index
    %c0_72 = arith.constant 0 : index
    %c0_73 = arith.constant 0 : index
    %245 = vector.load %arg8[%c0_71, %c0_72, %c0_73] : memref<2x8x128xf32, #tpu.memory_space<vmem>>, vector<1x8x128xf32>
    %246 = vector.shape_cast %245 : vector<1x8x128xf32> to vector<8x128xf32>
    %247 = vector.shape_cast %238 : vector<8x128xf32> to vector<1x8x128xf32>
    tpu.vector_store %arg8[%c0_71, %c0_72, %c0_73], %247 {strides = array<i32>} : memref<2x8x128xf32, #tpu.memory_space<vmem>>, vector<1x8x128xf32>,
    %c0_74 = arith.constant 0 : index
    %c0_75 = arith.constant 0 : index
    %248 = vector.load %arg9[%c0_74, %c0_75] : memref<64x128xf32, #tpu.memory_space<vmem>>, vector<64x128xf32>
    %c0_76 = arith.constant 0 : index
    %c0_77 = arith.constant 0 : index
    %249 = vector.load %arg4[%c0_76, %c0_77] : memref<128x512xf32, #tpu.memory_space<vmem>>, vector<128x512xf32>
    %cst_78 = arith.constant dense<0.000000e+00> : vector<64x512xf32>
    %250 = tpu.matmul %248, %249, %cst_78 {dimension_numbers = #tpu.dot_dimension_numbers<[1], [0], [0], [1], [0, 0, 1, 1], [], []>} : vector<64x128xf32>, vector<128x512xf32>, vector<64x512xf32> -> vector<64x512xf32>
    %c0_79 = arith.constant 0 : index
    %c0_80 = arith.constant 0 : index
    %251 = vector.load %arg6[%c0_79, %c0_80] : memref<1x512xf32, #tpu.memory_space<vmem>>, vector<1x512xf32>
    %252 = vector.broadcast %251 : vector<1x512xf32> to vector<64x512xf32>
    %253 = arith.addf %250, %252 : vector<64x512xf32>
    %c0_81 = arith.constant 0 : index
    %c0_82 = arith.constant 0 : index
    %254 = vector.load %arg10[%c0_81, %c0_82] : memref<64x512xf32, #tpu.memory_space<vmem>>, vector<64x512xf32>
    tpu.vector_store %arg10[%c0_81, %c0_82], %253 {strides = array<i32>} : memref<64x512xf32, #tpu.memory_space<vmem>>, vector<64x512xf32>,
    %c0_83 = arith.constant 0 : index
    %c0_84 = arith.constant 0 : index
    %255 = vector.load %arg5[%c0_83, %c0_84] : memref<128x512xf32, #tpu.memory_space<vmem>>, vector<128x512xf32>
    %cst_85 = arith.constant 0.000000e+00 : f32
    %256 = vector.broadcast %cst_85 : f32 to vector<8x128xf32>
    %cst_86 = arith.constant 0.000000e+00 : f32
    %257 = vector.broadcast %cst_86 : f32 to vector<8x128xf32>
    %c0_87 = arith.constant 0 : index
    %c0_88 = arith.constant 0 : index
    %258 = vector.load %arg10[%c0_87, %c0_88] : memref<64x512xf32, #tpu.memory_space<vmem>>, vector<8x512xf32>
    %cst_89 = arith.constant dense<0.000000e+00> : vector<8x512xf32>
    %259 = tpu.matmul %256, %255, %cst_89 {dimension_numbers = #tpu.dot_dimension_numbers<[1], [0], [0], [1], [0, 0, 1, 1], [], []>} : vector<8x128xf32>, vector<128x512xf32>, vector<8x512xf32> -> vector<8x512xf32>
    %260 = arith.addf %258, %259 : vector<8x512xf32>
    %261 = vector.extract_strided_slice %260 {offsets = [0, 0], sizes = [8, 128], strides = [1, 1]} : vector<8x512xf32> to vector<8x128xf32>
    %262 = arith.negf %261 : vector<8x128xf32>
    %263 = math.exp %262 : vector<8x128xf32>
    %cst_90 = arith.constant 1.000000e+00 : f32
    %264 = vector.broadcast %cst_90 : f32 to vector<8x128xf32>
    %265 = arith.addf %264, %263 : vector<8x128xf32>
    %266 = arith.divf %264, %265 : vector<8x128xf32>
    %267 = vector.extract_strided_slice %260 {offsets = [0, 128], sizes = [8, 128], strides = [1, 1]} : vector<8x512xf32> to vector<8x128xf32>
    %268 = arith.negf %267 : vector<8x128xf32>
    %269 = math.exp %268 : vector<8x128xf32>
    %cst_91 = arith.constant 1.000000e+00 : f32
    %270 = vector.broadcast %cst_91 : f32 to vector<8x128xf32>
    %271 = arith.addf %270, %269 : vector<8x128xf32>
    %272 = arith.divf %270, %271 : vector<8x128xf32>
    %273 = vector.extract_strided_slice %260 {offsets = [0, 256], sizes = [8, 128], strides = [1, 1]} : vector<8x512xf32> to vector<8x128xf32>
    %274 = math.tanh %273 : vector<8x128xf32>
    %275 = vector.extract_strided_slice %260 {offsets = [0, 384], sizes = [8, 128], strides = [1, 1]} : vector<8x512xf32> to vector<8x128xf32>
    %276 = arith.negf %275 : vector<8x128xf32>
    %277 = math.exp %276 : vector<8x128xf32>
    %cst_92 = arith.constant 1.000000e+00 : f32
    %278 = vector.broadcast %cst_92 : f32 to vector<8x128xf32>
    %279 = arith.addf %278, %277 : vector<8x128xf32>
    %280 = arith.divf %278, %279 : vector<8x128xf32>
    %281 = arith.mulf %272, %257 : vector<8x128xf32>
    %282 = arith.mulf %266, %274 : vector<8x128xf32>
    %283 = arith.addf %281, %282 : vector<8x128xf32>
    %284 = math.tanh %283 : vector<8x128xf32>
    %285 = arith.mulf %280, %284 : vector<8x128xf32>
    %c8_93 = arith.constant 8 : index
    %c0_94 = arith.constant 0 : index
    %286 = vector.load %arg10[%c8_93, %c0_94] : memref<64x512xf32, #tpu.memory_space<vmem>>, vector<8x512xf32>
    %cst_95 = arith.constant dense<0.000000e+00> : vector<8x512xf32>
    %287 = tpu.matmul %285, %255, %cst_95 {dimension_numbers = #tpu.dot_dimension_numbers<[1], [0], [0], [1], [0, 0, 1, 1], [], []>} : vector<8x128xf32>, vector<128x512xf32>, vector<8x512xf32> -> vector<8x512xf32>
    %288 = arith.addf %286, %287 : vector<8x512xf32>
    %289 = vector.extract_strided_slice %288 {offsets = [0, 0], sizes = [8, 128], strides = [1, 1]} : vector<8x512xf32> to vector<8x128xf32>
    %290 = arith.negf %289 : vector<8x128xf32>
    %291 = math.exp %290 : vector<8x128xf32>
    %cst_96 = arith.constant 1.000000e+00 : f32
    %292 = vector.broadcast %cst_96 : f32 to vector<8x128xf32>
    %293 = arith.addf %292, %291 : vector<8x128xf32>
    %294 = arith.divf %292, %293 : vector<8x128xf32>
    %295 = vector.extract_strided_slice %288 {offsets = [0, 128], sizes = [8, 128], strides = [1, 1]} : vector<8x512xf32> to vector<8x128xf32>
    %296 = arith.negf %295 : vector<8x128xf32>
    %297 = math.exp %296 : vector<8x128xf32>
    %cst_97 = arith.constant 1.000000e+00 : f32
    %298 = vector.broadcast %cst_97 : f32 to vector<8x128xf32>
    %299 = arith.addf %298, %297 : vector<8x128xf32>
    %300 = arith.divf %298, %299 : vector<8x128xf32>
    %301 = vector.extract_strided_slice %288 {offsets = [0, 256], sizes = [8, 128], strides = [1, 1]} : vector<8x512xf32> to vector<8x128xf32>
    %302 = math.tanh %301 : vector<8x128xf32>
    %303 = vector.extract_strided_slice %288 {offsets = [0, 384], sizes = [8, 128], strides = [1, 1]} : vector<8x512xf32> to vector<8x128xf32>
    %304 = arith.negf %303 : vector<8x128xf32>
    %305 = math.exp %304 : vector<8x128xf32>
    %cst_98 = arith.constant 1.000000e+00 : f32
    %306 = vector.broadcast %cst_98 : f32 to vector<8x128xf32>
    %307 = arith.addf %306, %305 : vector<8x128xf32>
    %308 = arith.divf %306, %307 : vector<8x128xf32>
    %309 = arith.mulf %300, %283 : vector<8x128xf32>
    %310 = arith.mulf %294, %302 : vector<8x128xf32>
    %311 = arith.addf %309, %310 : vector<8x128xf32>
    %312 = math.tanh %311 : vector<8x128xf32>
    %313 = arith.mulf %308, %312 : vector<8x128xf32>
    %c16_99 = arith.constant 16 : index
    %c0_100 = arith.constant 0 : index
    %314 = vector.load %arg10[%c16_99, %c0_100] : memref<64x512xf32, #tpu.memory_space<vmem>>, vector<8x512xf32>
    %cst_101 = arith.constant dense<0.000000e+00> : vector<8x512xf32>
    %315 = tpu.matmul %313, %255, %cst_101 {dimension_numbers = #tpu.dot_dimension_numbers<[1], [0], [0], [1], [0, 0, 1, 1], [], []>} : vector<8x128xf32>, vector<128x512xf32>, vector<8x512xf32> -> vector<8x512xf32>
    %316 = arith.addf %314, %315 : vector<8x512xf32>
    %317 = vector.extract_strided_slice %316 {offsets = [0, 0], sizes = [8, 128], strides = [1, 1]} : vector<8x512xf32> to vector<8x128xf32>
    %318 = arith.negf %317 : vector<8x128xf32>
    %319 = math.exp %318 : vector<8x128xf32>
    %cst_102 = arith.constant 1.000000e+00 : f32
    %320 = vector.broadcast %cst_102 : f32 to vector<8x128xf32>
    %321 = arith.addf %320, %319 : vector<8x128xf32>
    %322 = arith.divf %320, %321 : vector<8x128xf32>
    %323 = vector.extract_strided_slice %316 {offsets = [0, 128], sizes = [8, 128], strides = [1, 1]} : vector<8x512xf32> to vector<8x128xf32>
    %324 = arith.negf %323 : vector<8x128xf32>
    %325 = math.exp %324 : vector<8x128xf32>
    %cst_103 = arith.constant 1.000000e+00 : f32
    %326 = vector.broadcast %cst_103 : f32 to vector<8x128xf32>
    %327 = arith.addf %326, %325 : vector<8x128xf32>
    %328 = arith.divf %326, %327 : vector<8x128xf32>
    %329 = vector.extract_strided_slice %316 {offsets = [0, 256], sizes = [8, 128], strides = [1, 1]} : vector<8x512xf32> to vector<8x128xf32>
    %330 = math.tanh %329 : vector<8x128xf32>
    %331 = vector.extract_strided_slice %316 {offsets = [0, 384], sizes = [8, 128], strides = [1, 1]} : vector<8x512xf32> to vector<8x128xf32>
    %332 = arith.negf %331 : vector<8x128xf32>
    %333 = math.exp %332 : vector<8x128xf32>
    %cst_104 = arith.constant 1.000000e+00 : f32
    %334 = vector.broadcast %cst_104 : f32 to vector<8x128xf32>
    %335 = arith.addf %334, %333 : vector<8x128xf32>
    %336 = arith.divf %334, %335 : vector<8x128xf32>
    %337 = arith.mulf %328, %311 : vector<8x128xf32>
    %338 = arith.mulf %322, %330 : vector<8x128xf32>
    %339 = arith.addf %337, %338 : vector<8x128xf32>
    %340 = math.tanh %339 : vector<8x128xf32>
    %341 = arith.mulf %336, %340 : vector<8x128xf32>
    %c24_105 = arith.constant 24 : index
    %c0_106 = arith.constant 0 : index
    %342 = vector.load %arg10[%c24_105, %c0_106] : memref<64x512xf32, #tpu.memory_space<vmem>>, vector<8x512xf32>
    %cst_107 = arith.constant dense<0.000000e+00> : vector<8x512xf32>
    %343 = tpu.matmul %341, %255, %cst_107 {dimension_numbers = #tpu.dot_dimension_numbers<[1], [0], [0], [1], [0, 0, 1, 1], [], []>} : vector<8x128xf32>, vector<128x512xf32>, vector<8x512xf32> -> vector<8x512xf32>
    %344 = arith.addf %342, %343 : vector<8x512xf32>
    %345 = vector.extract_strided_slice %344 {offsets = [0, 0], sizes = [8, 128], strides = [1, 1]} : vector<8x512xf32> to vector<8x128xf32>
    %346 = arith.negf %345 : vector<8x128xf32>
    %347 = math.exp %346 : vector<8x128xf32>
    %cst_108 = arith.constant 1.000000e+00 : f32
    %348 = vector.broadcast %cst_108 : f32 to vector<8x128xf32>
    %349 = arith.addf %348, %347 : vector<8x128xf32>
    %350 = arith.divf %348, %349 : vector<8x128xf32>
    %351 = vector.extract_strided_slice %344 {offsets = [0, 128], sizes = [8, 128], strides = [1, 1]} : vector<8x512xf32> to vector<8x128xf32>
    %352 = arith.negf %351 : vector<8x128xf32>
    %353 = math.exp %352 : vector<8x128xf32>
    %cst_109 = arith.constant 1.000000e+00 : f32
    %354 = vector.broadcast %cst_109 : f32 to vector<8x128xf32>
    %355 = arith.addf %354, %353 : vector<8x128xf32>
    %356 = arith.divf %354, %355 : vector<8x128xf32>
    %357 = vector.extract_strided_slice %344 {offsets = [0, 256], sizes = [8, 128], strides = [1, 1]} : vector<8x512xf32> to vector<8x128xf32>
    %358 = math.tanh %357 : vector<8x128xf32>
    %359 = vector.extract_strided_slice %344 {offsets = [0, 384], sizes = [8, 128], strides = [1, 1]} : vector<8x512xf32> to vector<8x128xf32>
    %360 = arith.negf %359 : vector<8x128xf32>
    %361 = math.exp %360 : vector<8x128xf32>
    %cst_110 = arith.constant 1.000000e+00 : f32
    %362 = vector.broadcast %cst_110 : f32 to vector<8x128xf32>
    %363 = arith.addf %362, %361 : vector<8x128xf32>
    %364 = arith.divf %362, %363 : vector<8x128xf32>
    %365 = arith.mulf %356, %339 : vector<8x128xf32>
    %366 = arith.mulf %350, %358 : vector<8x128xf32>
    %367 = arith.addf %365, %366 : vector<8x128xf32>
    %368 = math.tanh %367 : vector<8x128xf32>
    %369 = arith.mulf %364, %368 : vector<8x128xf32>
    %c32_111 = arith.constant 32 : index
    %c0_112 = arith.constant 0 : index
    %370 = vector.load %arg10[%c32_111, %c0_112] : memref<64x512xf32, #tpu.memory_space<vmem>>, vector<8x512xf32>
    %cst_113 = arith.constant dense<0.000000e+00> : vector<8x512xf32>
    %371 = tpu.matmul %369, %255, %cst_113 {dimension_numbers = #tpu.dot_dimension_numbers<[1], [0], [0], [1], [0, 0, 1, 1], [], []>} : vector<8x128xf32>, vector<128x512xf32>, vector<8x512xf32> -> vector<8x512xf32>
    %372 = arith.addf %370, %371 : vector<8x512xf32>
    %373 = vector.extract_strided_slice %372 {offsets = [0, 0], sizes = [8, 128], strides = [1, 1]} : vector<8x512xf32> to vector<8x128xf32>
    %374 = arith.negf %373 : vector<8x128xf32>
    %375 = math.exp %374 : vector<8x128xf32>
    %cst_114 = arith.constant 1.000000e+00 : f32
    %376 = vector.broadcast %cst_114 : f32 to vector<8x128xf32>
    %377 = arith.addf %376, %375 : vector<8x128xf32>
    %378 = arith.divf %376, %377 : vector<8x128xf32>
    %379 = vector.extract_strided_slice %372 {offsets = [0, 128], sizes = [8, 128], strides = [1, 1]} : vector<8x512xf32> to vector<8x128xf32>
    %380 = arith.negf %379 : vector<8x128xf32>
    %381 = math.exp %380 : vector<8x128xf32>
    %cst_115 = arith.constant 1.000000e+00 : f32
    %382 = vector.broadcast %cst_115 : f32 to vector<8x128xf32>
    %383 = arith.addf %382, %381 : vector<8x128xf32>
    %384 = arith.divf %382, %383 : vector<8x128xf32>
    %385 = vector.extract_strided_slice %372 {offsets = [0, 256], sizes = [8, 128], strides = [1, 1]} : vector<8x512xf32> to vector<8x128xf32>
    %386 = math.tanh %385 : vector<8x128xf32>
    %387 = vector.extract_strided_slice %372 {offsets = [0, 384], sizes = [8, 128], strides = [1, 1]} : vector<8x512xf32> to vector<8x128xf32>
    %388 = arith.negf %387 : vector<8x128xf32>
    %389 = math.exp %388 : vector<8x128xf32>
    %cst_116 = arith.constant 1.000000e+00 : f32
    %390 = vector.broadcast %cst_116 : f32 to vector<8x128xf32>
    %391 = arith.addf %390, %389 : vector<8x128xf32>
    %392 = arith.divf %390, %391 : vector<8x128xf32>
    %393 = arith.mulf %384, %367 : vector<8x128xf32>
    %394 = arith.mulf %378, %386 : vector<8x128xf32>
    %395 = arith.addf %393, %394 : vector<8x128xf32>
    %396 = math.tanh %395 : vector<8x128xf32>
    %397 = arith.mulf %392, %396 : vector<8x128xf32>
    %c40_117 = arith.constant 40 : index
    %c0_118 = arith.constant 0 : index
    %398 = vector.load %arg10[%c40_117, %c0_118] : memref<64x512xf32, #tpu.memory_space<vmem>>, vector<8x512xf32>
    %cst_119 = arith.constant dense<0.000000e+00> : vector<8x512xf32>
    %399 = tpu.matmul %397, %255, %cst_119 {dimension_numbers = #tpu.dot_dimension_numbers<[1], [0], [0], [1], [0, 0, 1, 1], [], []>} : vector<8x128xf32>, vector<128x512xf32>, vector<8x512xf32> -> vector<8x512xf32>
    %400 = arith.addf %398, %399 : vector<8x512xf32>
    %401 = vector.extract_strided_slice %400 {offsets = [0, 0], sizes = [8, 128], strides = [1, 1]} : vector<8x512xf32> to vector<8x128xf32>
    %402 = arith.negf %401 : vector<8x128xf32>
    %403 = math.exp %402 : vector<8x128xf32>
    %cst_120 = arith.constant 1.000000e+00 : f32
    %404 = vector.broadcast %cst_120 : f32 to vector<8x128xf32>
    %405 = arith.addf %404, %403 : vector<8x128xf32>
    %406 = arith.divf %404, %405 : vector<8x128xf32>
    %407 = vector.extract_strided_slice %400 {offsets = [0, 128], sizes = [8, 128], strides = [1, 1]} : vector<8x512xf32> to vector<8x128xf32>
    %408 = arith.negf %407 : vector<8x128xf32>
    %409 = math.exp %408 : vector<8x128xf32>
    %cst_121 = arith.constant 1.000000e+00 : f32
    %410 = vector.broadcast %cst_121 : f32 to vector<8x128xf32>
    %411 = arith.addf %410, %409 : vector<8x128xf32>
    %412 = arith.divf %410, %411 : vector<8x128xf32>
    %413 = vector.extract_strided_slice %400 {offsets = [0, 256], sizes = [8, 128], strides = [1, 1]} : vector<8x512xf32> to vector<8x128xf32>
    %414 = math.tanh %413 : vector<8x128xf32>
    %415 = vector.extract_strided_slice %400 {offsets = [0, 384], sizes = [8, 128], strides = [1, 1]} : vector<8x512xf32> to vector<8x128xf32>
    %416 = arith.negf %415 : vector<8x128xf32>
    %417 = math.exp %416 : vector<8x128xf32>
    %cst_122 = arith.constant 1.000000e+00 : f32
    %418 = vector.broadcast %cst_122 : f32 to vector<8x128xf32>
    %419 = arith.addf %418, %417 : vector<8x128xf32>
    %420 = arith.divf %418, %419 : vector<8x128xf32>
    %421 = arith.mulf %412, %395 : vector<8x128xf32>
    %422 = arith.mulf %406, %414 : vector<8x128xf32>
    %423 = arith.addf %421, %422 : vector<8x128xf32>
    %424 = math.tanh %423 : vector<8x128xf32>
    %425 = arith.mulf %420, %424 : vector<8x128xf32>
    %c48_123 = arith.constant 48 : index
    %c0_124 = arith.constant 0 : index
    %426 = vector.load %arg10[%c48_123, %c0_124] : memref<64x512xf32, #tpu.memory_space<vmem>>, vector<8x512xf32>
    %cst_125 = arith.constant dense<0.000000e+00> : vector<8x512xf32>
    %427 = tpu.matmul %425, %255, %cst_125 {dimension_numbers = #tpu.dot_dimension_numbers<[1], [0], [0], [1], [0, 0, 1, 1], [], []>} : vector<8x128xf32>, vector<128x512xf32>, vector<8x512xf32> -> vector<8x512xf32>
    %428 = arith.addf %426, %427 : vector<8x512xf32>
    %429 = vector.extract_strided_slice %428 {offsets = [0, 0], sizes = [8, 128], strides = [1, 1]} : vector<8x512xf32> to vector<8x128xf32>
    %430 = arith.negf %429 : vector<8x128xf32>
    %431 = math.exp %430 : vector<8x128xf32>
    %cst_126 = arith.constant 1.000000e+00 : f32
    %432 = vector.broadcast %cst_126 : f32 to vector<8x128xf32>
    %433 = arith.addf %432, %431 : vector<8x128xf32>
    %434 = arith.divf %432, %433 : vector<8x128xf32>
    %435 = vector.extract_strided_slice %428 {offsets = [0, 128], sizes = [8, 128], strides = [1, 1]} : vector<8x512xf32> to vector<8x128xf32>
    %436 = arith.negf %435 : vector<8x128xf32>
    %437 = math.exp %436 : vector<8x128xf32>
    %cst_127 = arith.constant 1.000000e+00 : f32
    %438 = vector.broadcast %cst_127 : f32 to vector<8x128xf32>
    %439 = arith.addf %438, %437 : vector<8x128xf32>
    %440 = arith.divf %438, %439 : vector<8x128xf32>
    %441 = vector.extract_strided_slice %428 {offsets = [0, 256], sizes = [8, 128], strides = [1, 1]} : vector<8x512xf32> to vector<8x128xf32>
    %442 = math.tanh %441 : vector<8x128xf32>
    %443 = vector.extract_strided_slice %428 {offsets = [0, 384], sizes = [8, 128], strides = [1, 1]} : vector<8x512xf32> to vector<8x128xf32>
    %444 = arith.negf %443 : vector<8x128xf32>
    %445 = math.exp %444 : vector<8x128xf32>
    %cst_128 = arith.constant 1.000000e+00 : f32
    %446 = vector.broadcast %cst_128 : f32 to vector<8x128xf32>
    %447 = arith.addf %446, %445 : vector<8x128xf32>
    %448 = arith.divf %446, %447 : vector<8x128xf32>
    %449 = arith.mulf %440, %423 : vector<8x128xf32>
    %450 = arith.mulf %434, %442 : vector<8x128xf32>
    %451 = arith.addf %449, %450 : vector<8x128xf32>
    %452 = math.tanh %451 : vector<8x128xf32>
    %453 = arith.mulf %448, %452 : vector<8x128xf32>
    %c56_129 = arith.constant 56 : index
    %c0_130 = arith.constant 0 : index
    %454 = vector.load %arg10[%c56_129, %c0_130] : memref<64x512xf32, #tpu.memory_space<vmem>>, vector<8x512xf32>
    %cst_131 = arith.constant dense<0.000000e+00> : vector<8x512xf32>
    %455 = tpu.matmul %453, %255, %cst_131 {dimension_numbers = #tpu.dot_dimension_numbers<[1], [0], [0], [1], [0, 0, 1, 1], [], []>} : vector<8x128xf32>, vector<128x512xf32>, vector<8x512xf32> -> vector<8x512xf32>
    %456 = arith.addf %454, %455 : vector<8x512xf32>
    %457 = vector.extract_strided_slice %456 {offsets = [0, 0], sizes = [8, 128], strides = [1, 1]} : vector<8x512xf32> to vector<8x128xf32>
    %458 = arith.negf %457 : vector<8x128xf32>
    %459 = math.exp %458 : vector<8x128xf32>
    %cst_132 = arith.constant 1.000000e+00 : f32
    %460 = vector.broadcast %cst_132 : f32 to vector<8x128xf32>
    %461 = arith.addf %460, %459 : vector<8x128xf32>
    %462 = arith.divf %460, %461 : vector<8x128xf32>
    %463 = vector.extract_strided_slice %456 {offsets = [0, 128], sizes = [8, 128], strides = [1, 1]} : vector<8x512xf32> to vector<8x128xf32>
    %464 = arith.negf %463 : vector<8x128xf32>
    %465 = math.exp %464 : vector<8x128xf32>
    %cst_133 = arith.constant 1.000000e+00 : f32
    %466 = vector.broadcast %cst_133 : f32 to vector<8x128xf32>
    %467 = arith.addf %466, %465 : vector<8x128xf32>
    %468 = arith.divf %466, %467 : vector<8x128xf32>
    %469 = vector.extract_strided_slice %456 {offsets = [0, 256], sizes = [8, 128], strides = [1, 1]} : vector<8x512xf32> to vector<8x128xf32>
    %470 = math.tanh %469 : vector<8x128xf32>
    %471 = vector.extract_strided_slice %456 {offsets = [0, 384], sizes = [8, 128], strides = [1, 1]} : vector<8x512xf32> to vector<8x128xf32>
    %472 = arith.negf %471 : vector<8x128xf32>
    %473 = math.exp %472 : vector<8x128xf32>
    %cst_134 = arith.constant 1.000000e+00 : f32
    %474 = vector.broadcast %cst_134 : f32 to vector<8x128xf32>
    %475 = arith.addf %474, %473 : vector<8x128xf32>
    %476 = arith.divf %474, %475 : vector<8x128xf32>
    %477 = arith.mulf %468, %451 : vector<8x128xf32>
    %478 = arith.mulf %462, %470 : vector<8x128xf32>
    %479 = arith.addf %477, %478 : vector<8x128xf32>
    %480 = math.tanh %479 : vector<8x128xf32>
    %481 = arith.mulf %476, %480 : vector<8x128xf32>
    %c1 = arith.constant 1 : index
    %c0_135 = arith.constant 0 : index
    %c0_136 = arith.constant 0 : index
    %482 = vector.load %arg7[%c1, %c0_135, %c0_136] : memref<2x8x128xf32, #tpu.memory_space<vmem>>, vector<1x8x128xf32>
    %483 = vector.shape_cast %482 : vector<1x8x128xf32> to vector<8x128xf32>
    %484 = vector.shape_cast %481 : vector<8x128xf32> to vector<1x8x128xf32>
    tpu.vector_store %arg7[%c1, %c0_135, %c0_136], %484 {strides = array<i32>} : memref<2x8x128xf32, #tpu.memory_space<vmem>>, vector<1x8x128xf32>,
    %c1_137 = arith.constant 1 : index
    %c0_138 = arith.constant 0 : index
    %c0_139 = arith.constant 0 : index
    %485 = vector.load %arg8[%c1_137, %c0_138, %c0_139] : memref<2x8x128xf32, #tpu.memory_space<vmem>>, vector<1x8x128xf32>
    %486 = vector.shape_cast %485 : vector<1x8x128xf32> to vector<8x128xf32>
    %487 = vector.shape_cast %479 : vector<8x128xf32> to vector<1x8x128xf32>
    tpu.vector_store %arg8[%c1_137, %c0_138, %c0_139], %487 {strides = array<i32>} : memref<2x8x128xf32, #tpu.memory_space<vmem>>, vector<1x8x128xf32>,
    return
  }
}

</mosaic_0001>

<llo_original>
// kernel: encoder_forward.1
$region0: #{encoder_forward.1}
  #allocation0 [shape = 'u32[]', space=smem, size = 0x4, offset = 0x4, fixed_abs, tag = 'smem constant byte address 0x4 - core index']
  #allocation1 [shape = 'u32[144,128]{1,0:T(1,128)}', space=vmem, size = 0x12000, scoped, tag = 'internal scratch']
  #allocation2 [shape = 'f32[64,128]{1,0:T(8,128)}', space=vmem, size = 0x8000, scoped, tag = 'scratch operand']
  #allocation3 [shape = 'f32[64,512]{1,0:T(8,128)}', space=vmem, size = 0x20000, scoped, tag = 'scratch operand']
  %s0 = inlined_call_operand.vmem [shape: f32[64,128], index: 0, kind: input, shape index: {}]
  %s1 = inlined_call_operand.vmem [shape: f32[128,512], index: 1, kind: input, shape index: {}]
  %s2 = inlined_call_operand.hbm [shape: f32[128,512], index: 2, kind: input, shape index: {}]
  %s3 = inlined_call_operand.vmem [shape: f32[1,512], index: 3, kind: input, shape index: {}]
  %s4 = inlined_call_operand.hbm [shape: f32[128,512], index: 4, kind: input, shape index: {}]
  %s5 = inlined_call_operand.hbm [shape: f32[128,512], index: 5, kind: input, shape index: {}]
  %s6 = inlined_call_operand.vmem [shape: f32[1,512], index: 6, kind: input, shape index: {}]
  %s7 = inlined_call_operand.hbm [shape: f32[2,8,128], index: 7, kind: output, shape index: {0}]
  %s8 = inlined_call_operand.hbm [shape: f32[2,8,128], index: 8, kind: output, shape index: {1}]
  %9 = xla_tuple %s7, %s8
  %s10 = sld [smem:[#allocation0]]
  $region58: #{encoder_forward.1} parent=0
    _
  %s12 = ssub.s32 1, %s10
  %s13 = scalar_select 0, %s12, %s10
  $region1: #{encoder_forward.1} parent=0
    #allocation4 [shape = 'u8[262144]{0}', space=vmem, size = 0x40000, scoped, tag = 'input window, operand 2, single buffered']
    #allocation5 [shape = 's32[1]{0}', space=sflag, size = 0x4, scoped, tag = 'scoped memory for encoder_forward.1']
    #allocation6 [shape = 's32[1]{0}', space=sflag, size = 0x4, scoped, tag = 'scoped memory for encoder_forward.1']
    #allocation7 [shape = 'u8[262144]{0}', space=vmem, size = 0x40000, scoped, tag = 'input window, operand 4, single buffered']
    #allocation8 [shape = 's32[1]{0}', space=sflag, size = 0x4, scoped, tag = 'scoped memory for encoder_forward.1']
    #allocation9 [shape = 'u8[262144]{0}', space=vmem, size = 0x40000, scoped, tag = 'input window, operand 5, single buffered']
    #allocation10 [shape = 'u8[8192]{0}', space=vmem, size = 0x2000, scoped, tag = 'output window, operand 0, single buffered']
    #allocation11 [shape = 'u8[8192]{0}', space=vmem, size = 0x2000, scoped, tag = 'output window, operand 1, single buffered']
    #allocation12 [shape = 's32[1]{0}', space=sflag, size = 0x4, scoped, tag = 'scoped memory for encoder_forward.1']
    %14 = vsyncpa [#allocation5], 0
    %15 = vsyncpa [#allocation8], 0
    %16 = vsyncpa [#allocation6], 0
    %17 = vsyncpa [#allocation12], 0
    // Predicated region
    $region2: #{encoder_forward.1} parent=1 // pred_check
      _
    $region3: #{encoder_forward.1} parent=1 // pred_check_branch
      %19 = sbr.rel (0) target = $region5
    $region4: #{encoder_forward.1} parent=1 // pred_region
      _
    $region5: #{encoder_forward.1} parent=1 // pred_fallthru
      _
    // Predicated region
    $region6: #{encoder_forward.1} parent=1 // pred_check
      _
    $region7: #{encoder_forward.1} parent=1 // pred_check_branch
      %21 = sbr.rel (0) target = $region9
    $region8: #{encoder_forward.1} parent=1 // pred_region
      _
    $region9: #{encoder_forward.1} parent=1 // pred_fallthru
      _
    // Predicated region
    $region10: #{encoder_forward.1} parent=1 // pred_check
      _
    $region11: #{encoder_forward.1} parent=1 // pred_check_branch
      %23 = sbr.rel (0) target = $region13
    $region12: #{encoder_forward.1} parent=1 // pred_region
      %s25 = ssub.s32 8192, 8192
      %26 = vsyncadd [#allocation5], %s25
      %s27 = sshll.u32 [#allocation4], 4
      %s28 = int_to_ptr.vmem [resolvable:$true] %s27
      %33 = dma.hbm_to_vmem [thread:$0]  %s2, 8192, %s28, [#allocation5], 512, 512, 32
    $region13: #{encoder_forward.1} parent=1 // pred_fallthru
      _
    // Predicated region
    $region14: #{encoder_forward.1} parent=1 // pred_check
      _
    $region15: #{encoder_forward.1} parent=1 // pred_check_branch
      %35 = sbr.rel (0) target = $region17
    $region16: #{encoder_forward.1} parent=1 // pred_region
      _
    $region17: #{encoder_forward.1} parent=1 // pred_fallthru
      _
    // Predicated region
    $region18: #{encoder_forward.1} parent=1 // pred_check
      _
    $region19: #{encoder_forward.1} parent=1 // pred_check_branch
      %37 = sbr.rel (0) target = $region21
    $region20: #{encoder_forward.1} parent=1 // pred_region
      %s39 = ssub.s32 8192, 8192
      %40 = vsyncadd [#allocation8], %s39
      %s41 = sshll.u32 [#allocation7], 4
      %s42 = int_to_ptr.vmem [resolvable:$true] %s41
      %47 = dma.hbm_to_vmem [thread:$0]  %s4, 8192, %s42, [#allocation8], 512, 512, 32
    $region21: #{encoder_forward.1} parent=1 // pred_fallthru
      _
    // Predicated region
    $region22: #{encoder_forward.1} parent=1 // pred_check
      _
    $region23: #{encoder_forward.1} parent=1 // pred_check_branch
      %49 = sbr.rel (0) target = $region25
    $region24: #{encoder_forward.1} parent=1 // pred_region
      %s51 = ssub.s32 8192, 8192
      %52 = vsyncadd [#allocation8], %s51
      %s53 = sshll.u32 [#allocation9], 4
      %s54 = int_to_ptr.vmem [resolvable:$true] %s53
      %59 = dma.hbm_to_vmem [thread:$0]  %s5, 8192, %s54, [#allocation8], 512, 512, 32
    $region25: #{encoder_forward.1} parent=1 // pred_fallthru
      _
    // Predicated region
    $region26: #{encoder_forward.1} parent=1 // pred_check
      _
    $region27: #{encoder_forward.1} parent=1 // pred_check_branch
      %61 = sbr.rel (0) target = $region29
    $region28: #{encoder_forward.1} parent=1 // pred_region
      _
    $region29: #{encoder_forward.1} parent=1 // pred_fallthru
      _
    // Predicated region
    $region30: #{encoder_forward.1} parent=1 // pred_check
      _
    $region31: #{encoder_forward.1} parent=1 // pred_check_branch
      %63 = sbr.rel (0) target = $region33
    $region32: #{encoder_forward.1} parent=1 // pred_region
      %64 = dma.done [#allocation5], 8192
    $region33: #{encoder_forward.1} parent=1 // pred_fallthru
      _
    // Predicated region
    $region34: #{encoder_forward.1} parent=1 // pred_check
      _
    $region35: #{encoder_forward.1} parent=1 // pred_check_branch
      %66 = sbr.rel (0) target = $region37
    $region36: #{encoder_forward.1} parent=1 // pred_region
      %67 = dma.done [#allocation8], 8192
    $region37: #{encoder_forward.1} parent=1 // pred_fallthru
      _
    // Predicated region
    $region38: #{encoder_forward.1} parent=1 // pred_check
      _
    $region39: #{encoder_forward.1} parent=1 // pred_check_branch
      %69 = sbr.rel (0) target = $region41
    $region40: #{encoder_forward.1} parent=1 // pred_region
      %70 = dma.done [#allocation8], 8192
    $region41: #{encoder_forward.1} parent=1 // pred_fallthru
      _
    %v71 = vld [vmem:[%s0] sm:$0xff]
    %v72 = vld [vmem:[%s0 + $0x8] sm:$0xff]
    %v73 = vld [vmem:[%s0 + $0x10] sm:$0xff]
    %v74 = vld [vmem:[%s0 + $0x18] sm:$0xff]
    %v75 = vld [vmem:[%s0 + $0x20] sm:$0xff]
    %v76 = vld [vmem:[%s0 + $0x28] sm:$0xff]
    %v77 = vld [vmem:[%s0 + $0x30] sm:$0xff]
    %v78 = vld [vmem:[%s0 + $0x38] sm:$0xff]
    %v79 = vld [vmem:[%s1] sm:$0xff]
    %v80 = vld [vmem:[%s1 + $0x8] sm:$0xff]
    %v81 = vld [vmem:[%s1 + $0x10] sm:$0xff]
    %v82 = vld [vmem:[%s1 + $0x18] sm:$0xff]
    %v83 = vld [vmem:[%s1 + $0x20] sm:$0xff]
    %v84 = vld [vmem:[%s1 + $0x28] sm:$0xff]
    %v85 = vld [vmem:[%s1 + $0x30] sm:$0xff]
    %v86 = vld [vmem:[%s1 + $0x38] sm:$0xff]
    %v87 = vld [vmem:[%s1 + $0x40] sm:$0xff]
    %v88 = vld [vmem:[%s1 + $0x48] sm:$0xff]
    %v89 = vld [vmem:[%s1 + $0x50] sm:$0xff]
    %v90 = vld [vmem:[%s1 + $0x58] sm:$0xff]
    %v91 = vld [vmem:[%s1 + $0x60] sm:$0xff]
    %v92 = vld [vmem:[%s1 + $0x68] sm:$0xff]
    %v93 = vld [vmem:[%s1 + $0x70] sm:$0xff]
    %v94 = vld [vmem:[%s1 + $0x78] sm:$0xff]
    %v95 = vld [vmem:[%s1 + $0x80] sm:$0xff]
    %v96 = vld [vmem:[%s1 + $0x88] sm:$0xff]
    %v97 = vld [vmem:[%s1 + $0x90] sm:$0xff]
    %v98 = vld [vmem:[%s1 + $0x98] sm:$0xff]
    %v99 = vld [vmem:[%s1 + $0xa0] sm:$0xff]
    %v100 = vld [vmem:[%s1 + $0xa8] sm:$0xff]
    %v101 = vld [vmem:[%s1 + $0xb0] sm:$0xff]
    %v102 = vld [vmem:[%s1 + $0xb8] sm:$0xff]
    %v103 = vld [vmem:[%s1 + $0xc0] sm:$0xff]
    %v104 = vld [vmem:[%s1 + $0xc8] sm:$0xff]
    %v105 = vld [vmem:[%s1 + $0xd0] sm:$0xff]
    %v106 = vld [vmem:[%s1 + $0xd8] sm:$0xff]
    %v107 = vld [vmem:[%s1 + $0xe0] sm:$0xff]
    %v108 = vld [vmem:[%s1 + $0xe8] sm:$0xff]
    %v109 = vld [vmem:[%s1 + $0xf0] sm:$0xff]
    %v110 = vld [vmem:[%s1 + $0xf8] sm:$0xff]
    %v111 = vld [vmem:[%s1 + $0x100] sm:$0xff]
    %v112 = vld [vmem:[%s1 + $0x108] sm:$0xff]
    %v113 = vld [vmem:[%s1 + $0x110] sm:$0xff]
    %v114 = vld [vmem:[%s1 + $0x118] sm:$0xff]
    %v115 = vld [vmem:[%s1 + $0x120] sm:$0xff]
    %v116 = vld [vmem:[%s1 + $0x128] sm:$0xff]
    %v117 = vld [vmem:[%s1 + $0x130] sm:$0xff]
    %v118 = vld [vmem:[%s1 + $0x138] sm:$0xff]
    %v119 = vld [vmem:[%s1 + $0x140] sm:$0xff]
    %v120 = vld [vmem:[%s1 + $0x148] sm:$0xff]
    %v121 = vld [vmem:[%s1 + $0x150] sm:$0xff]
    %v122 = vld [vmem:[%s1 + $0x158] sm:$0xff]
    %v123 = vld [vmem:[%s1 + $0x160] sm:$0xff]
    %v124 = vld [vmem:[%s1 + $0x168] sm:$0xff]
    %v125 = vld [vmem:[%s1 + $0x170] sm:$0xff]
    %v126 = vld [vmem:[%s1 + $0x178] sm:$0xff]
    %v127 = vld [vmem:[%s1 + $0x180] sm:$0xff]
    %v128 = vld [vmem:[%s1 + $0x188] sm:$0xff]
    %v129 = vld [vmem:[%s1 + $0x190] sm:$0xff]
    %v130 = vld [vmem:[%s1 + $0x198] sm:$0xff]
    %v131 = vld [vmem:[%s1 + $0x1a0] sm:$0xff]
    %v132 = vld [vmem:[%s1 + $0x1a8] sm:$0xff]
    %v133 = vld [vmem:[%s1 + $0x1b0] sm:$0xff]
    %v134 = vld [vmem:[%s1 + $0x1b8] sm:$0xff]
    %v135 = vld [vmem:[%s1 + $0x1c0] sm:$0xff]
    %v136 = vld [vmem:[%s1 + $0x1c8] sm:$0xff]
    %v137 = vld [vmem:[%s1 + $0x1d0] sm:$0xff]
    %v138 = vld [vmem:[%s1 + $0x1d8] sm:$0xff]
    %v139 = vld [vmem:[%s1 + $0x1e0] sm:$0xff]
    %v140 = vld [vmem:[%s1 + $0x1e8] sm:$0xff]
    %v141 = vld [vmem:[%s1 + $0x1f0] sm:$0xff]
    %v142 = vld [vmem:[%s1 + $0x1f8] sm:$0xff]
    %v143 = vld [vmem:[%s3] sm:$0xf]
    %v145 = vlaneseq
    %v146 = vshrl.u32 %v145, 7
    %v147 = vsub.s32 0, %v146
    %v148 = vrot.slane %v143, %v147
    %v149 = vlaneseq
    %v150 = vshrl.u32 %v149, 7
    %v151 = vsub.s32 1, %v150
    %v152 = vrot.slane %v143, %v151
    %v153 = vlaneseq
    %v154 = vshrl.u32 %v153, 7
    %v155 = vsub.s32 2, %v154
    %v156 = vrot.slane %v143, %v155
    %v157 = vlaneseq
    %v158 = vshrl.u32 %v157, 7
    %v159 = vsub.s32 3, %v158
    %v160 = vrot.slane %v143, %v159
    %165 = vmatprep.subr.mxu0 %v80
    %166 = vmatpush1.msra.mxu0 %v79
    %167 = vmatprep.subr.mxu0 %v84
    %168 = vmatpush1.msra.mxu0 %v83
    %169 = vmatprep.subr.mxu0 %v88
    %170 = vmatpush1.msra.mxu0 %v87
    %171 = vmatprep.subr.mxu0 %v92
    %172 = vmatpush1.msra.mxu0 %v91
    %173 = vmatprep.subr.mxu0 %v96
    %174 = vmatpush1.msra.mxu0 %v95
    %175 = vmatprep.subr.mxu0 %v100
    %176 = vmatpush1.msra.mxu0 %v99
    %177 = vmatprep.subr.mxu0 %v104
    %178 = vmatpush1.msra.mxu0 %v103
    %179 = vmatprep.subr.mxu0 %v108
    %180 = vmatpush1.msra.mxu0 %v107
    %181 = vmatprep.subr.mxu0 %v112
    %182 = vmatpush1.msra.mxu0 %v111
    %183 = vmatprep.subr.mxu0 %v116
    %184 = vmatpush1.msra.mxu0 %v115
    %185 = vmatprep.subr.mxu0 %v120
    %186 = vmatpush1.msra.mxu0 %v119
    %187 = vmatprep.subr.mxu0 %v124
    %188 = vmatpush1.msra.mxu0 %v123
    %189 = vmatprep.subr.mxu0 %v128
    %190 = vmatpush1.msra.mxu0 %v127
    %191 = vmatprep.subr.mxu0 %v132
    %192 = vmatpush1.msra.mxu0 %v131
    %193 = vmatprep.subr.mxu0 %v136
    %194 = vmatpush1.msra.mxu0 %v135
    %195 = vmatprep.subr.mxu0 %v140
    %196 = vmatpush1.msra.mxu0 %v139
    %197 = vmatprep.subr.mxu0 0.0
    %198 = vmatpush1.msra.mxu0 0.0
    %199 = vmatprep.subr.mxu0 0.0
    %200 = vmatpush1.msra.mxu0 0.0
    %201 = vmatprep.subr.mxu0 0.0
    %202 = vmatpush1.msra.mxu0 0.0
    %203 = vmatprep.subr.mxu0 0.0
    %204 = vmatpush1.msra.mxu0 0.0
    %205 = vmatprep.subr.mxu0 0.0
    %206 = vmatpush1.msra.mxu0 0.0
    %207 = vmatprep.subr.mxu0 0.0
    %208 = vmatpush1.msra.mxu0 0.0
    %209 = vmatprep.subr.mxu0 0.0
    %210 = vmatpush1.msra.mxu0 0.0
    %211 = vmatprep.subr.mxu0 0.0
    %212 = vmatpush1.msra.mxu0 0.0
    %213 = vmatprep.subr.mxu0 0.0
    %214 = vmatpush1.msra.mxu0 0.0
    %215 = vmatprep.subr.mxu0 0.0
    %216 = vmatpush1.msra.mxu0 0.0
    %217 = vmatprep.subr.mxu0 0.0
    %218 = vmatpush1.msra.mxu0 0.0
    %219 = vmatprep.subr.mxu0 0.0
    %220 = vmatpush1.msra.mxu0 0.0
    %221 = vmatprep.subr.mxu0 0.0
    %222 = vmatpush1.msra.mxu0 0.0
    %223 = vmatprep.subr.mxu0 0.0
    %224 = vmatpush1.msra.mxu0 0.0
    %225 = vmatprep.subr.mxu0 0.0
    %226 = vmatpush1.msra.mxu0 0.0
    %227 = vmatprep.subr.mxu0 0.0
    %228 = vmatpush1.msra.mxu0 0.0
    %229 = vmatprep.mubr.f32.mxu0 0.0
    %230 = vmatmul.mubr.f32.gmra.mrb[0].mxu0 %v71
    %v231 = vpop.f32.mrb[0].mxu0
    %v232 = vadd.f32 %v148, %v231
    %v233 = vpop.f32.mrb[0].mxu0
    %v234 = vadd.f32 %v152, %v233
    %235 = vmatprep.mubr.f32.mxu0 0.0
    %236 = vmatmul.mubr.f32.gmra.mrb[0].mxu0 %v72
    %v237 = vpop.f32.mrb[0].mxu0
    %v238 = vadd.f32 %v148, %v237
    %v239 = vpop.f32.mrb[0].mxu0
    %v240 = vadd.f32 %v152, %v239
    %241 = vmatprep.mubr.f32.mxu0 0.0
    %242 = vmatmul.mubr.f32.gmra.mrb[0].mxu0 %v73
    %v243 = vpop.f32.mrb[0].mxu0
    %v244 = vadd.f32 %v148, %v243
    %v245 = vpop.f32.mrb[0].mxu0
    %v246 = vadd.f32 %v152, %v245
    %247 = vmatprep.mubr.f32.mxu0 0.0
    %248 = vmatmul.mubr.f32.gmra.mrb[0].mxu0 %v74
    %v249 = vpop.f32.mrb[0].mxu0
    %v250 = vadd.f32 %v148, %v249
    %v251 = vpop.f32.mrb[0].mxu0
    %v252 = vadd.f32 %v152, %v251
    %253 = vmatprep.mubr.f32.mxu0 0.0
    %254 = vmatmul.mubr.f32.gmra.mrb[0].mxu0 %v75
    %v255 = vpop.f32.mrb[0].mxu0
    %v256 = vadd.f32 %v148, %v255
    %v257 = vpop.f32.mrb[0].mxu0
    %v258 = vadd.f32 %v152, %v257
    %259 = vmatprep.mubr.f32.mxu0 0.0
    %260 = vmatmul.mubr.f32.gmra.mrb[0].mxu0 %v76
    %v261 = vpop.f32.mrb[0].mxu0
    %v262 = vadd.f32 %v148, %v261
    %v263 = vpop.f32.mrb[0].mxu0
    %v264 = vadd.f32 %v152, %v263
    %265 = vmatprep.mubr.f32.mxu0 0.0
    %266 = vmatmul.mubr.f32.gmra.mrb[0].mxu0 %v77
    %v267 = vpop.f32.mrb[0].mxu0
    %v268 = vadd.f32 %v148, %v267
    %v269 = vpop.f32.mrb[0].mxu0
    %v270 = vadd.f32 %v152, %v269
    %271 = vmatprep.mubr.f32.mxu0 0.0
    %272 = vmatmul.mubr.f32.gmra.mrb[0].mxu0 %v78
    %v273 = vpop.f32.mrb[0].mxu0
    %v274 = vadd.f32 %v148, %v273
    %v275 = vpop.f32.mrb[0].mxu0
    %v276 = vadd.f32 %v152, %v275
    %277 = vdwg.mxu0
    %278 = vmatprep.subr.mxu0 %v82
    %279 = vmatpush1.msra.mxu0 %v81
    %280 = vmatprep.subr.mxu0 %v86
    %281 = vmatpush1.msra.mxu0 %v85
    %282 = vmatprep.subr.mxu0 %v90
    %283 = vmatpush1.msra.mxu0 %v89
    %284 = vmatprep.subr.mxu0 %v94
    %285 = vmatpush1.msra.mxu0 %v93
    %286 = vmatprep.subr.mxu0 %v98
    %287 = vmatpush1.msra.mxu0 %v97
    %288 = vmatprep.subr.mxu0 %v102
    %289 = vmatpush1.msra.mxu0 %v101
    %290 = vmatprep.subr.mxu0 %v106
    %291 = vmatpush1.msra.mxu0 %v105
    %292 = vmatprep.subr.mxu0 %v110
    %293 = vmatpush1.msra.mxu0 %v109
    %294 = vmatprep.subr.mxu0 %v114
    %295 = vmatpush1.msra.mxu0 %v113
    %296 = vmatprep.subr.mxu0 %v118
    %297 = vmatpush1.msra.mxu0 %v117
    %298 = vmatprep.subr.mxu0 %v122
    %299 = vmatpush1.msra.mxu0 %v121
    %300 = vmatprep.subr.mxu0 %v126
    %301 = vmatpush1.msra.mxu0 %v125
    %302 = vmatprep.subr.mxu0 %v130
    %303 = vmatpush1.msra.mxu0 %v129
    %304 = vmatprep.subr.mxu0 %v134
    %305 = vmatpush1.msra.mxu0 %v133
    %306 = vmatprep.subr.mxu0 %v138
    %307 = vmatpush1.msra.mxu0 %v137
    %308 = vmatprep.subr.mxu0 %v142
    %309 = vmatpush1.msra.mxu0 %v141
    %310 = vmatprep.subr.mxu0 0.0
    %311 = vmatpush1.msra.mxu0 0.0
    %312 = vmatprep.subr.mxu0 0.0
    %313 = vmatpush1.msra.mxu0 0.0
    %314 = vmatprep.subr.mxu0 0.0
    %315 = vmatpush1.msra.mxu0 0.0
    %316 = vmatprep.subr.mxu0 0.0
    %317 = vmatpush1.msra.mxu0 0.0
    %318 = vmatprep.subr.mxu0 0.0
    %319 = vmatpush1.msra.mxu0 0.0
    %320 = vmatprep.subr.mxu0 0.0
    %321 = vmatpush1.msra.mxu0 0.0
    %322 = vmatprep.subr.mxu0 0.0
    %323 = vmatpush1.msra.mxu0 0.0
    %324 = vmatprep.subr.mxu0 0.0
    %325 = vmatpush1.msra.mxu0 0.0
    %326 = vmatprep.subr.mxu0 0.0
    %327 = vmatpush1.msra.mxu0 0.0
    %328 = vmatprep.subr.mxu0 0.0
    %329 = vmatpush1.msra.mxu0 0.0
    %330 = vmatprep.subr.mxu0 0.0
    %331 = vmatpush1.msra.mxu0 0.0
    %332 = vmatprep.subr.mxu0 0.0
    %333 = vmatpush1.msra.mxu0 0.0
    %334 = vmatprep.subr.mxu0 0.0
    %335 = vmatpush1.msra.mxu0 0.0
    %336 = vmatprep.subr.mxu0 0.0
    %337 = vmatpush1.msra.mxu0 0.0
    %338 = vmatprep.subr.mxu0 0.0
    %339 = vmatpush1.msra.mxu0 0.0
    %340 = vmatprep.subr.mxu0 0.0
    %341 = vmatpush1.msra.mxu0 0.0
    %342 = vmatprep.mubr.f32.mxu0 0.0
    %343 = vmatmul.mubr.f32.gmra.mrb[0].mxu0 %v71
    %v344 = vpop.f32.mrb[0].mxu0
    %v345 = vadd.f32 %v156, %v344
    %v346 = vpop.f32.mrb[0].mxu0
    %v347 = vadd.f32 %v160, %v346
    %348 = vmatprep.mubr.f32.mxu0 0.0
    %349 = vmatmul.mubr.f32.gmra.mrb[0].mxu0 %v72
    %v350 = vpop.f32.mrb[0].mxu0
    %v351 = vadd.f32 %v156, %v350
    %v352 = vpop.f32.mrb[0].mxu0
    %v353 = vadd.f32 %v160, %v352
    %354 = vmatprep.mubr.f32.mxu0 0.0
    %355 = vmatmul.mubr.f32.gmra.mrb[0].mxu0 %v73
    %v356 = vpop.f32.mrb[0].mxu0
    %v357 = vadd.f32 %v156, %v356
    %v358 = vpop.f32.mrb[0].mxu0
    %v359 = vadd.f32 %v160, %v358
    %360 = vmatprep.mubr.f32.mxu0 0.0
    %361 = vmatmul.mubr.f32.gmra.mrb[0].mxu0 %v74
    %v362 = vpop.f32.mrb[0].mxu0
    %v363 = vadd.f32 %v156, %v362
    %v364 = vpop.f32.mrb[0].mxu0
    %v365 = vadd.f32 %v160, %v364
    %366 = vmatprep.mubr.f32.mxu0 0.0
    %367 = vmatmul.mubr.f32.gmra.mrb[0].mxu0 %v75
    %v368 = vpop.f32.mrb[0].mxu0
    %v369 = vadd.f32 %v156, %v368
    %v370 = vpop.f32.mrb[0].mxu0
    %v371 = vadd.f32 %v160, %v370
    %372 = vmatprep.mubr.f32.mxu0 0.0
    %373 = vmatmul.mubr.f32.gmra.mrb[0].mxu0 %v76
    %v374 = vpop.f32.mrb[0].mxu0
    %v375 = vadd.f32 %v156, %v374
    %v376 = vpop.f32.mrb[0].mxu0
    %v377 = vadd.f32 %v160, %v376
    %378 = vmatprep.mubr.f32.mxu0 0.0
    %379 = vmatmul.mubr.f32.gmra.mrb[0].mxu0 %v77
    %v380 = vpop.f32.mrb[0].mxu0
    %v381 = vadd.f32 %v156, %v380
    %v382 = vpop.f32.mrb[0].mxu0
    %v383 = vadd.f32 %v160, %v382
    %384 = vmatprep.mubr.f32.mxu0 0.0
    %385 = vmatmul.mubr.f32.gmra.mrb[0].mxu0 %v78
    %v386 = vpop.f32.mrb[0].mxu0
    %v387 = vadd.f32 %v156, %v386
    %v388 = vpop.f32.mrb[0].mxu0
    %v389 = vadd.f32 %v160, %v388
    %390 = vdwg.mxu0
    %391 = vst [vmem:[#allocation3] sm:$0xff] %v232
    %392 = vst [vmem:[#allocation3 + $0x8] sm:$0xff] %v234
    %393 = vst [vmem:[#allocation3 + $0x10] sm:$0xff] %v345
    %394 = vst [vmem:[#allocation3 + $0x18] sm:$0xff] %v347
    %395 = vst [vmem:[#allocation3 + $0x20] sm:$0xff] %v238
    %396 = vst [vmem:[#allocation3 + $0x28] sm:$0xff] %v240
    %397 = vst [vmem:[#allocation3 + $0x30] sm:$0xff] %v351
    %398 = vst [vmem:[#allocation3 + $0x38] sm:$0xff] %v353
    %399 = vst [vmem:[#allocation3 + $0x40] sm:$0xff] %v244
    %400 = vst [vmem:[#allocation3 + $0x48] sm:$0xff] %v246
    %401 = vst [vmem:[#allocation3 + $0x50] sm:$0xff] %v357
    %402 = vst [vmem:[#allocation3 + $0x58] sm:$0xff] %v359
    %403 = vst [vmem:[#allocation3 + $0x60] sm:$0xff] %v250
    %404 = vst [vmem:[#allocation3 + $0x68] sm:$0xff] %v252
    %405 = vst [vmem:[#allocation3 + $0x70] sm:$0xff] %v363
    %406 = vst [vmem:[#allocation3 + $0x78] sm:$0xff] %v365
    %407 = vst [vmem:[#allocation3 + $0x80] sm:$0xff] %v256
    %408 = vst [vmem:[#allocation3 + $0x88] sm:$0xff] %v258
    %409 = vst [vmem:[#allocation3 + $0x90] sm:$0xff] %v369
    %410 = vst [vmem:[#allocation3 + $0x98] sm:$0xff] %v371
    %411 = vst [vmem:[#allocation3 + $0xa0] sm:$0xff] %v262
    %412 = vst [vmem:[#allocation3 + $0xa8] sm:$0xff] %v264
    %413 = vst [vmem:[#allocation3 + $0xb0] sm:$0xff] %v375
    %414 = vst [vmem:[#allocation3 + $0xb8] sm:$0xff] %v377
    %415 = vst [vmem:[#allocation3 + $0xc0] sm:$0xff] %v268
    %416 = vst [vmem:[#allocation3 + $0xc8] sm:$0xff] %v270
    %417 = vst [vmem:[#allocation3 + $0xd0] sm:$0xff] %v381
    %418 = vst [vmem:[#allocation3 + $0xd8] sm:$0xff] %v383
    %419 = vst [vmem:[#allocation3 + $0xe0] sm:$0xff] %v274
    %420 = vst [vmem:[#allocation3 + $0xe8] sm:$0xff] %v276
    %421 = vst [vmem:[#allocation3 + $0xf0] sm:$0xff] %v387
    %422 = vst [vmem:[#allocation3 + $0xf8] sm:$0xff] %v389
    %v423 = vld [vmem:[#allocation4] sm:$0xff]
    %v424 = vld [vmem:[#allocation4 + $0x8] sm:$0xff]
    %v425 = vld [vmem:[#allocation4 + $0x10] sm:$0xff]
    %v426 = vld [vmem:[#allocation4 + $0x18] sm:$0xff]
    %v427 = vld [vmem:[#allocation4 + $0x20] sm:$0xff]
    %v428 = vld [vmem:[#allocation4 + $0x28] sm:$0xff]
    %v429 = vld [vmem:[#allocation4 + $0x30] sm:$0xff]
    %v430 = vld [vmem:[#allocation4 + $0x38] sm:$0xff]
    %v431 = vld [vmem:[#allocation4 + $0x40] sm:$0xff]
    %v432 = vld [vmem:[#allocation4 + $0x48] sm:$0xff]
    %v433 = vld [vmem:[#allocation4 + $0x50] sm:$0xff]
    %v434 = vld [vmem:[#allocation4 + $0x58] sm:$0xff]
    %v435 = vld [vmem:[#allocation4 + $0x60] sm:$0xff]
    %v436 = vld [vmem:[#allocation4 + $0x68] sm:$0xff]
    %v437 = vld [vmem:[#allocation4 + $0x70] sm:$0xff]
    %v438 = vld [vmem:[#allocation4 + $0x78] sm:$0xff]
    %v439 = vld [vmem:[#allocation4 + $0x80] sm:$0xff]
    %v440 = vld [vmem:[#allocation4 + $0x88] sm:$0xff]
    %v441 = vld [vmem:[#allocation4 + $0x90] sm:$0xff]
    %v442 = vld [vmem:[#allocation4 + $0x98] sm:$0xff]
    %v443 = vld [vmem:[#allocation4 + $0xa0] sm:$0xff]
    %v444 = vld [vmem:[#allocation4 + $0xa8] sm:$0xff]
    %v445 = vld [vmem:[#allocation4 + $0xb0] sm:$0xff]
    %v446 = vld [vmem:[#allocation4 + $0xb8] sm:$0xff]
    %v447 = vld [vmem:[#allocation4 + $0xc0] sm:$0xff]
    %v448 = vld [vmem:[#allocation4 + $0xc8] sm:$0xff]
    %v449 = vld [vmem:[#allocation4 + $0xd0] sm:$0xff]
    %v450 = vld [vmem:[#allocation4 + $0xd8] sm:$0xff]
    %v451 = vld [vmem:[#allocation4 + $0xe0] sm:$0xff]
    %v452 = vld [vmem:[#allocation4 + $0xe8] sm:$0xff]
    %v453 = vld [vmem:[#allocation4 + $0xf0] sm:$0xff]
    %v454 = vld [vmem:[#allocation4 + $0xf8] sm:$0xff]
    %v455 = vld [vmem:[#allocation4 + $0x100] sm:$0xff]
    %v456 = vld [vmem:[#allocation4 + $0x108] sm:$0xff]
    %v457 = vld [vmem:[#allocation4 + $0x110] sm:$0xff]
    %v458 = vld [vmem:[#allocation4 + $0x118] sm:$0xff]
    %v459 = vld [vmem:[#allocation4 + $0x120] sm:$0xff]
    %v460 = vld [vmem:[#allocation4 + $0x128] sm:$0xff]
    %v461 = vld [vmem:[#allocation4 + $0x130] sm:$0xff]
    %v462 = vld [vmem:[#allocation4 + $0x138] sm:$0xff]
    %v463 = vld [vmem:[#allocation4 + $0x140] sm:$0xff]
    %v464 = vld [vmem:[#allocation4 + $0x148] sm:$0xff]
    %v465 = vld [vmem:[#allocation4 + $0x150] sm:$0xff]
    %v466 = vld [vmem:[#allocation4 + $0x158] sm:$0xff]
    %v467 = vld [vmem:[#allocation4 + $0x160] sm:$0xff]
    %v468 = vld [vmem:[#allocation4 + $0x168] sm:$0xff]
    %v469 = vld [vmem:[#allocation4 + $0x170] sm:$0xff]
    %v470 = vld [vmem:[#allocation4 + $0x178] sm:$0xff]
    %v471 = vld [vmem:[#allocation4 + $0x180] sm:$0xff]
    %v472 = vld [vmem:[#allocation4 + $0x188] sm:$0xff]
    %v473 = vld [vmem:[#allocation4 + $0x190] sm:$0xff]
    %v474 = vld [vmem:[#allocation4 + $0x198] sm:$0xff]
    %v475 = vld [vmem:[#allocation4 + $0x1a0] sm:$0xff]
    %v476 = vld [vmem:[#allocation4 + $0x1a8] sm:$0xff]
    %v477 = vld [vmem:[#allocation4 + $0x1b0] sm:$0xff]
    %v478 = vld [vmem:[#allocation4 + $0x1b8] sm:$0xff]
    %v479 = vld [vmem:[#allocation4 + $0x1c0] sm:$0xff]
    %v480 = vld [vmem:[#allocation4 + $0x1c8] sm:$0xff]
    %v481 = vld [vmem:[#allocation4 + $0x1d0] sm:$0xff]
    %v482 = vld [vmem:[#allocation4 + $0x1d8] sm:$0xff]
    %v483 = vld [vmem:[#allocation4 + $0x1e0] sm:$0xff]
    %v484 = vld [vmem:[#allocation4 + $0x1e8] sm:$0xff]
    %v485 = vld [vmem:[#allocation4 + $0x1f0] sm:$0xff]
    %v486 = vld [vmem:[#allocation4 + $0x1f8] sm:$0xff]
    %v487 = vld [vmem:[#allocation3] sm:$0xff]
    %v488 = vld [vmem:[#allocation3 + $0x8] sm:$0xff]
    %v489 = vld [vmem:[#allocation3 + $0x10] sm:$0xff]
    %v490 = vld [vmem:[#allocation3 + $0x18] sm:$0xff]
    %491 = vmatprep.subr.mxu0 %v424
    %492 = vmatpush1.msra.mxu0 %v423
    %493 = vmatprep.subr.mxu0 %v428
    %494 = vmatpush1.msra.mxu0 %v427
    %495 = vmatprep.subr.mxu0 %v432
    %496 = vmatpush1.msra.mxu0 %v431
    %497 = vmatprep.subr.mxu0 %v436
    %498 = vmatpush1.msra.mxu0 %v435
    %499 = vmatprep.subr.mxu0 %v440
    %500 = vmatpush1.msra.mxu0 %v439
    %501 = vmatprep.subr.mxu0 %v444
    %502 = vmatpush1.msra.mxu0 %v443
    %503 = vmatprep.subr.mxu0 %v448
    %504 = vmatpush1.msra.mxu0 %v447
    %505 = vmatprep.subr.mxu0 %v452
    %506 = vmatpush1.msra.mxu0 %v451
    %507 = vmatprep.subr.mxu0 %v456
    %508 = vmatpush1.msra.mxu0 %v455
    %509 = vmatprep.subr.mxu0 %v460
    %510 = vmatpush1.msra.mxu0 %v459
    %511 = vmatprep.subr.mxu0 %v464
    %512 = vmatpush1.msra.mxu0 %v463
    %513 = vmatprep.subr.mxu0 %v468
    %514 = vmatpush1.msra.mxu0 %v467
    %515 = vmatprep.subr.mxu0 %v472
    %516 = vmatpush1.msra.mxu0 %v471
    %517 = vmatprep.subr.mxu0 %v476
    %518 = vmatpush1.msra.mxu0 %v475
    %519 = vmatprep.subr.mxu0 %v480
    %520 = vmatpush1.msra.mxu0 %v479
    %521 = vmatprep.subr.mxu0 %v484
    %522 = vmatpush1.msra.mxu0 %v483
    %523 = vmatprep.subr.mxu0 0.0
    %524 = vmatpush1.msra.mxu0 0.0
    %525 = vmatprep.subr.mxu0 0.0
    %526 = vmatpush1.msra.mxu0 0.0
    %527 = vmatprep.subr.mxu0 0.0
    %528 = vmatpush1.msra.mxu0 0.0
    %529 = vmatprep.subr.mxu0 0.0
    %530 = vmatpush1.msra.mxu0 0.0
    %531 = vmatprep.subr.mxu0 0.0
    %532 = vmatpush1.msra.mxu0 0.0
    %533 = vmatprep.subr.mxu0 0.0
    %534 = vmatpush1.msra.mxu0 0.0
    %535 = vmatprep.subr.mxu0 0.0
    %536 = vmatpush1.msra.mxu0 0.0
    %537 = vmatprep.subr.mxu0 0.0
    %538 = vmatpush1.msra.mxu0 0.0
    %539 = vmatprep.subr.mxu0 0.0
    %540 = vmatpush1.msra.mxu0 0.0
    %541 = vmatprep.subr.mxu0 0.0
    %542 = vmatpush1.msra.mxu0 0.0
    %543 = vmatprep.subr.mxu0 0.0
    %544 = vmatpush1.msra.mxu0 0.0
    %545 = vmatprep.subr.mxu0 0.0
    %546 = vmatpush1.msra.mxu0 0.0
    %547 = vmatprep.subr.mxu0 0.0
    %548 = vmatpush1.msra.mxu0 0.0
    %549 = vmatprep.subr.mxu0 0.0
    %550 = vmatpush1.msra.mxu0 0.0
    %551 = vmatprep.subr.mxu0 0.0
    %552 = vmatpush1.msra.mxu0 0.0
    %553 = vmatprep.subr.mxu0 0.0
    %554 = vmatpush1.msra.mxu0 0.0
    %555 = vmatprep.mubr.f32.mxu0 0.0
    %556 = vmatmul.mubr.f32.gmra.mrb[0].mxu0 0.0
    %v557 = vpop.f32.mrb[0].mxu0
    %v558 = vadd.f32 0.0, %v557
    %v559 = vpop.f32.mrb[0].mxu0
    %v560 = vadd.f32 0.0, %v559
    %561 = vdwg.mxu0
    %562 = vmatprep.subr.mxu0 %v426
    %563 = vmatpush1.msra.mxu0 %v425
    %564 = vmatprep.subr.mxu0 %v430
    %565 = vmatpush1.msra.mxu0 %v429
    %566 = vmatprep.subr.mxu0 %v434
    %567 = vmatpush1.msra.mxu0 %v433
    %568 = vmatprep.subr.mxu0 %v438
    %569 = vmatpush1.msra.mxu0 %v437
    %570 = vmatprep.subr.mxu0 %v442
    %571 = vmatpush1.msra.mxu0 %v441
    %572 = vmatprep.subr.mxu0 %v446
    %573 = vmatpush1.msra.mxu0 %v445
    %574 = vmatprep.subr.mxu0 %v450
    %575 = vmatpush1.msra.mxu0 %v449
    %576 = vmatprep.subr.mxu0 %v454
    %577 = vmatpush1.msra.mxu0 %v453
    %578 = vmatprep.subr.mxu0 %v458
    %579 = vmatpush1.msra.mxu0 %v457
    %580 = vmatprep.subr.mxu0 %v462
    %581 = vmatpush1.msra.mxu0 %v461
    %582 = vmatprep.subr.mxu0 %v466
    %583 = vmatpush1.msra.mxu0 %v465
    %584 = vmatprep.subr.mxu0 %v470
    %585 = vmatpush1.msra.mxu0 %v469
    %586 = vmatprep.subr.mxu0 %v474
    %587 = vmatpush1.msra.mxu0 %v473
    %588 = vmatprep.subr.mxu0 %v478
    %589 = vmatpush1.msra.mxu0 %v477
    %590 = vmatprep.subr.mxu0 %v482
    %591 = vmatpush1.msra.mxu0 %v481
    %592 = vmatprep.subr.mxu0 %v486
    %593 = vmatpush1.msra.mxu0 %v485
    %594 = vmatprep.subr.mxu0 0.0
    %595 = vmatpush1.msra.mxu0 0.0
    %596 = vmatprep.subr.mxu0 0.0
    %597 = vmatpush1.msra.mxu0 0.0
    %598 = vmatprep.subr.mxu0 0.0
    %599 = vmatpush1.msra.mxu0 0.0
    %600 = vmatprep.subr.mxu0 0.0
    %601 = vmatpush1.msra.mxu0 0.0
    %602 = vmatprep.subr.mxu0 0.0
    %603 = vmatpush1.msra.mxu0 0.0
    %604 = vmatprep.subr.mxu0 0.0
    %605 = vmatpush1.msra.mxu0 0.0
    %606 = vmatprep.subr.mxu0 0.0
    %607 = vmatpush1.msra.mxu0 0.0
    %608 = vmatprep.subr.mxu0 0.0
    %609 = vmatpush1.msra.mxu0 0.0
    %610 = vmatprep.subr.mxu0 0.0
    %611 = vmatpush1.msra.mxu0 0.0
    %612 = vmatprep.subr.mxu0 0.0
    %613 = vmatpush1.msra.mxu0 0.0
    %614 = vmatprep.subr.mxu0 0.0
    %615 = vmatpush1.msra.mxu0 0.0
    %616 = vmatprep.subr.mxu0 0.0
    %617 = vmatpush1.msra.mxu0 0.0
    %618 = vmatprep.subr.mxu0 0.0
    %619 = vmatpush1.msra.mxu0 0.0
    %620 = vmatprep.subr.mxu0 0.0
    %621 = vmatpush1.msra.mxu0 0.0
    %622 = vmatprep.subr.mxu0 0.0
    %623 = vmatpush1.msra.mxu0 0.0
    %624 = vmatprep.subr.mxu0 0.0
    %625 = vmatpush1.msra.mxu0 0.0
    %626 = vmatprep.mubr.f32.mxu0 0.0
    %627 = vmatmul.mubr.f32.gmra.mrb[0].mxu0 0.0
    %v628 = vpop.f32.mrb[0].mxu0
    %v629 = vadd.f32 0.0, %v628
    %v630 = vpop.f32.mrb[0].mxu0
    %v631 = vadd.f32 0.0, %v630
    %632 = vdwg.mxu0
    %v633 = vadd.f32 %v487, %v558
    %v634 = vadd.f32 %v488, %v560
    %v635 = vadd.f32 %v489, %v629
    %v636 = vadd.f32 %v490, %v631
    %v637 = vxor.u32 %v633, 2147483648
    %v638 = vmul.f32 %v637, 1.442695
    %v639 = vpow.pop %v638
    %v640 = vadd.f32 %v639, 1.0
    %v641 = vrcp.pop %v640
    %v642 = vmul.f32 1.0, %v641
    %v643 = vxor.u32 %v634, 2147483648
    %v644 = vmul.f32 %v643, 1.442695
    %v645 = vpow.pop %v644
    %v646 = vadd.f32 %v645, 1.0
    %v647 = vrcp.pop %v646
    %v648 = vmul.f32 1.0, %v647
    %v649 = vtanh.pop %v635
    %v650 = vxor.u32 %v636, 2147483648
    %v651 = vmul.f32 %v650, 1.442695
    %v652 = vpow.pop %v651
    %v653 = vadd.f32 %v652, 1.0
    %v654 = vrcp.pop %v653
    %v655 = vmul.f32 1.0, %v654
    %v656 = vmul.f32 %v648, 0.0
    %v657 = vmul.f32 %v642, %v649
    %v658 = vadd.f32 %v656, %v657
    %v659 = vtanh.pop %v658
    %v660 = vmul.f32 %v655, %v659
    %661 = vst [vmem:[#allocation2] sm:$0xff] %v660
    %v662 = vld [vmem:[#allocation3 + $0x20] sm:$0xff]
    %v663 = vld [vmem:[#allocation3 + $0x28] sm:$0xff]
    %v664 = vld [vmem:[#allocation3 + $0x30] sm:$0xff]
    %v665 = vld [vmem:[#allocation3 + $0x38] sm:$0xff]
    %666 = vmatprep.subr.mxu0 %v424
    %667 = vmatpush1.msra.mxu0 %v423
    %668 = vmatprep.subr.mxu0 %v428
    %669 = vmatpush1.msra.mxu0 %v427
    %670 = vmatprep.subr.mxu0 %v432
    %671 = vmatpush1.msra.mxu0 %v431
    %672 = vmatprep.subr.mxu0 %v436
    %673 = vmatpush1.msra.mxu0 %v435
    %674 = vmatprep.subr.mxu0 %v440
    %675 = vmatpush1.msra.mxu0 %v439
    %676 = vmatprep.subr.mxu0 %v444
    %677 = vmatpush1.msra.mxu0 %v443
    %678 = vmatprep.subr.mxu0 %v448
    %679 = vmatpush1.msra.mxu0 %v447
    %680 = vmatprep.subr.mxu0 %v452
    %681 = vmatpush1.msra.mxu0 %v451
    %682 = vmatprep.subr.mxu0 %v456
    %683 = vmatpush1.msra.mxu0 %v455
    %684 = vmatprep.subr.mxu0 %v460
    %685 = vmatpush1.msra.mxu0 %v459
    %686 = vmatprep.subr.mxu0 %v464
    %687 = vmatpush1.msra.mxu0 %v463
    %688 = vmatprep.subr.mxu0 %v468
    %689 = vmatpush1.msra.mxu0 %v467
    %690 = vmatprep.subr.mxu0 %v472
    %691 = vmatpush1.msra.mxu0 %v471
    %692 = vmatprep.subr.mxu0 %v476
    %693 = vmatpush1.msra.mxu0 %v475
    %694 = vmatprep.subr.mxu0 %v480
    %695 = vmatpush1.msra.mxu0 %v479
    %696 = vmatprep.subr.mxu0 %v484
    %697 = vmatpush1.msra.mxu0 %v483
    %698 = vmatprep.subr.mxu0 0.0
    %699 = vmatpush1.msra.mxu0 0.0
    %700 = vmatprep.subr.mxu0 0.0
    %701 = vmatpush1.msra.mxu0 0.0
    %702 = vmatprep.subr.mxu0 0.0
    %703 = vmatpush1.msra.mxu0 0.0
    %704 = vmatprep.subr.mxu0 0.0
    %705 = vmatpush1.msra.mxu0 0.0
    %706 = vmatprep.subr.mxu0 0.0
    %707 = vmatpush1.msra.mxu0 0.0
    %708 = vmatprep.subr.mxu0 0.0
    %709 = vmatpush1.msra.mxu0 0.0
    %710 = vmatprep.subr.mxu0 0.0
    %711 = vmatpush1.msra.mxu0 0.0
    %712 = vmatprep.subr.mxu0 0.0
    %713 = vmatpush1.msra.mxu0 0.0
    %714 = vmatprep.subr.mxu0 0.0
    %715 = vmatpush1.msra.mxu0 0.0
    %716 = vmatprep.subr.mxu0 0.0
    %717 = vmatpush1.msra.mxu0 0.0
    %718 = vmatprep.subr.mxu0 0.0
    %719 = vmatpush1.msra.mxu0 0.0
    %720 = vmatprep.subr.mxu0 0.0
    %721 = vmatpush1.msra.mxu0 0.0
    %722 = vmatprep.subr.mxu0 0.0
    %723 = vmatpush1.msra.mxu0 0.0
    %724 = vmatprep.subr.mxu0 0.0
    %725 = vmatpush1.msra.mxu0 0.0
    %726 = vmatprep.subr.mxu0 0.0
    %727 = vmatpush1.msra.mxu0 0.0
    %728 = vmatprep.subr.mxu0 0.0
    %729 = vmatpush1.msra.mxu0 0.0
    %730 = vmatprep.mubr.f32.mxu0 0.0
    %731 = vmatmul.mubr.f32.gmra.mrb[0].mxu0 %v660
    %v732 = vpop.f32.mrb[0].mxu0
    %v733 = vadd.f32 0.0, %v732
    %v734 = vpop.f32.mrb[0].mxu0
    %v735 = vadd.f32 0.0, %v734
    %736 = vdwg.mxu0
    %737 = vmatprep.subr.mxu0 %v426
    %738 = vmatpush1.msra.mxu0 %v425
    %739 = vmatprep.subr.mxu0 %v430
    %740 = vmatpush1.msra.mxu0 %v429
    %741 = vmatprep.subr.mxu0 %v434
    %742 = vmatpush1.msra.mxu0 %v433
    %743 = vmatprep.subr.mxu0 %v438
    %744 = vmatpush1.msra.mxu0 %v437
    %745 = vmatprep.subr.mxu0 %v442
    %746 = vmatpush1.msra.mxu0 %v441
    %747 = vmatprep.subr.mxu0 %v446
    %748 = vmatpush1.msra.mxu0 %v445
    %749 = vmatprep.subr.mxu0 %v450
    %750 = vmatpush1.msra.mxu0 %v449
    %751 = vmatprep.subr.mxu0 %v454
    %752 = vmatpush1.msra.mxu0 %v453
    %753 = vmatprep.subr.mxu0 %v458
    %754 = vmatpush1.msra.mxu0 %v457
    %755 = vmatprep.subr.mxu0 %v462
    %756 = vmatpush1.msra.mxu0 %v461
    %757 = vmatprep.subr.mxu0 %v466
    %758 = vmatpush1.msra.mxu0 %v465
    %759 = vmatprep.subr.mxu0 %v470
    %760 = vmatpush1.msra.mxu0 %v469
    %761 = vmatprep.subr.mxu0 %v474
    %762 = vmatpush1.msra.mxu0 %v473
    %763 = vmatprep.subr.mxu0 %v478
    %764 = vmatpush1.msra.mxu0 %v477
    %765 = vmatprep.subr.mxu0 %v482
    %766 = vmatpush1.msra.mxu0 %v481
    %767 = vmatprep.subr.mxu0 %v486
    %768 = vmatpush1.msra.mxu0 %v485
    %769 = vmatprep.subr.mxu0 0.0
    %770 = vmatpush1.msra.mxu0 0.0
    %771 = vmatprep.subr.mxu0 0.0
    %772 = vmatpush1.msra.mxu0 0.0
    %773 = vmatprep.subr.mxu0 0.0
    %774 = vmatpush1.msra.mxu0 0.0
    %775 = vmatprep.subr.mxu0 0.0
    %776 = vmatpush1.msra.mxu0 0.0
    %777 = vmatprep.subr.mxu0 0.0
    %778 = vmatpush1.msra.mxu0 0.0
    %779 = vmatprep.subr.mxu0 0.0
    %780 = vmatpush1.msra.mxu0 0.0
    %781 = vmatprep.subr.mxu0 0.0
    %782 = vmatpush1.msra.mxu0 0.0
    %783 = vmatprep.subr.mxu0 0.0
    %784 = vmatpush1.msra.mxu0 0.0
    %785 = vmatprep.subr.mxu0 0.0
    %786 = vmatpush1.msra.mxu0 0.0
    %787 = vmatprep.subr.mxu0 0.0
    %788 = vmatpush1.msra.mxu0 0.0
    %789 = vmatprep.subr.mxu0 0.0
    %790 = vmatpush1.msra.mxu0 0.0
    %791 = vmatprep.subr.mxu0 0.0
    %792 = vmatpush1.msra.mxu0 0.0
    %793 = vmatprep.subr.mxu0 0.0
    %794 = vmatpush1.msra.mxu0 0.0
    %795 = vmatprep.subr.mxu0 0.0
    %796 = vmatpush1.msra.mxu0 0.0
    %797 = vmatprep.subr.mxu0 0.0
    %798 = vmatpush1.msra.mxu0 0.0
    %799 = vmatprep.subr.mxu0 0.0
    %800 = vmatpush1.msra.mxu0 0.0
    %801 = vmatprep.mubr.f32.mxu0 0.0
    %802 = vmatmul.mubr.f32.gmra.mrb[0].mxu0 %v660
    %v803 = vpop.f32.mrb[0].mxu0
    %v804 = vadd.f32 0.0, %v803
    %v805 = vpop.f32.mrb[0].mxu0
    %v806 = vadd.f32 0.0, %v805
    %807 = vdwg.mxu0
    %v808 = vadd.f32 %v662, %v733
    %v809 = vadd.f32 %v663, %v735
    %v810 = vadd.f32 %v664, %v804
    %v811 = vadd.f32 %v665, %v806
    %v812 = vxor.u32 %v808, 2147483648
    %v813 = vmul.f32 %v812, 1.442695
    %v814 = vpow.pop %v813
    %v815 = vadd.f32 %v814, 1.0
    %v816 = vrcp.pop %v815
    %v817 = vmul.f32 1.0, %v816
    %v818 = vxor.u32 %v809, 2147483648
    %v819 = vmul.f32 %v818, 1.442695
    %v820 = vpow.pop %v819
    %v821 = vadd.f32 %v820, 1.0
    %v822 = vrcp.pop %v821
    %v823 = vmul.f32 1.0, %v822
    %v824 = vtanh.pop %v810
    %v825 = vxor.u32 %v811, 2147483648
    %v826 = vmul.f32 %v825, 1.442695
    %v827 = vpow.pop %v826
    %v828 = vadd.f32 %v827, 1.0
    %v829 = vrcp.pop %v828
    %v830 = vmul.f32 1.0, %v829
    %v831 = vmul.f32 %v823, %v658
    %v832 = vmul.f32 %v817, %v824
    %v833 = vadd.f32 %v831, %v832
    %v834 = vtanh.pop %v833
    %v835 = vmul.f32 %v830, %v834
    %836 = vst [vmem:[#allocation2 + $0x8] sm:$0xff] %v835
    %v837 = vld [vmem:[#allocation3 + $0x40] sm:$0xff]
    %v838 = vld [vmem:[#allocation3 + $0x48] sm:$0xff]
    %v839 = vld [vmem:[#allocation3 + $0x50] sm:$0xff]
    %v840 = vld [vmem:[#allocation3 + $0x58] sm:$0xff]
    %841 = vmatprep.subr.mxu0 %v424
    %842 = vmatpush1.msra.mxu0 %v423
    %843 = vmatprep.subr.mxu0 %v428
    %844 = vmatpush1.msra.mxu0 %v427
    %845 = vmatprep.subr.mxu0 %v432
    %846 = vmatpush1.msra.mxu0 %v431
    %847 = vmatprep.subr.mxu0 %v436
    %848 = vmatpush1.msra.mxu0 %v435
    %849 = vmatprep.subr.mxu0 %v440
    %850 = vmatpush1.msra.mxu0 %v439
    %851 = vmatprep.subr.mxu0 %v444
    %852 = vmatpush1.msra.mxu0 %v443
    %853 = vmatprep.subr.mxu0 %v448
    %854 = vmatpush1.msra.mxu0 %v447
    %855 = vmatprep.subr.mxu0 %v452
    %856 = vmatpush1.msra.mxu0 %v451
    %857 = vmatprep.subr.mxu0 %v456
    %858 = vmatpush1.msra.mxu0 %v455
    %859 = vmatprep.subr.mxu0 %v460
    %860 = vmatpush1.msra.mxu0 %v459
    %861 = vmatprep.subr.mxu0 %v464
    %862 = vmatpush1.msra.mxu0 %v463
    %863 = vmatprep.subr.mxu0 %v468
    %864 = vmatpush1.msra.mxu0 %v467
    %865 = vmatprep.subr.mxu0 %v472
    %866 = vmatpush1.msra.mxu0 %v471
    %867 = vmatprep.subr.mxu0 %v476
    %868 = vmatpush1.msra.mxu0 %v475
    %869 = vmatprep.subr.mxu0 %v480
    %870 = vmatpush1.msra.mxu0 %v479
    %871 = vmatprep.subr.mxu0 %v484
    %872 = vmatpush1.msra.mxu0 %v483
    %873 = vmatprep.subr.mxu0 0.0
    %874 = vmatpush1.msra.mxu0 0.0
    %875 = vmatprep.subr.mxu0 0.0
    %876 = vmatpush1.msra.mxu0 0.0
    %877 = vmatprep.subr.mxu0 0.0
    %878 = vmatpush1.msra.mxu0 0.0
    %879 = vmatprep.subr.mxu0 0.0
    %880 = vmatpush1.msra.mxu0 0.0
    %881 = vmatprep.subr.mxu0 0.0
    %882 = vmatpush1.msra.mxu0 0.0
    %883 = vmatprep.subr.mxu0 0.0
    %884 = vmatpush1.msra.mxu0 0.0
    %885 = vmatprep.subr.mxu0 0.0
    %886 = vmatpush1.msra.mxu0 0.0
    %887 = vmatprep.subr.mxu0 0.0
    %888 = vmatpush1.msra.mxu0 0.0
    %889 = vmatprep.subr.mxu0 0.0
    %890 = vmatpush1.msra.mxu0 0.0
    %891 = vmatprep.subr.mxu0 0.0
    %892 = vmatpush1.msra.mxu0 0.0
    %893 = vmatprep.subr.mxu0 0.0
    %894 = vmatpush1.msra.mxu0 0.0
    %895 = vmatprep.subr.mxu0 0.0
    %896 = vmatpush1.msra.mxu0 0.0
    %897 = vmatprep.subr.mxu0 0.0
    %898 = vmatpush1.msra.mxu0 0.0
    %899 = vmatprep.subr.mxu0 0.0
    %900 = vmatpush1.msra.mxu0 0.0
    %901 = vmatprep.subr.mxu0 0.0
    %902 = vmatpush1.msra.mxu0 0.0
    %903 = vmatprep.subr.mxu0 0.0
    %904 = vmatpush1.msra.mxu0 0.0
    %905 = vmatprep.mubr.f32.mxu0 0.0
    %906 = vmatmul.mubr.f32.gmra.mrb[0].mxu0 %v835
    %v907 = vpop.f32.mrb[0].mxu0
    %v908 = vadd.f32 0.0, %v907
    %v909 = vpop.f32.mrb[0].mxu0
    %v910 = vadd.f32 0.0, %v909
    %911 = vdwg.mxu0
    %912 = vmatprep.subr.mxu0 %v426
    %913 = vmatpush1.msra.mxu0 %v425
    %914 = vmatprep.subr.mxu0 %v430
    %915 = vmatpush1.msra.mxu0 %v429
    %916 = vmatprep.subr.mxu0 %v434
    %917 = vmatpush1.msra.mxu0 %v433
    %918 = vmatprep.subr.mxu0 %v438
    %919 = vmatpush1.msra.mxu0 %v437
    %920 = vmatprep.subr.mxu0 %v442
    %921 = vmatpush1.msra.mxu0 %v441
    %922 = vmatprep.subr.mxu0 %v446
    %923 = vmatpush1.msra.mxu0 %v445
    %924 = vmatprep.subr.mxu0 %v450
    %925 = vmatpush1.msra.mxu0 %v449
    %926 = vmatprep.subr.mxu0 %v454
    %927 = vmatpush1.msra.mxu0 %v453
    %928 = vmatprep.subr.mxu0 %v458
    %929 = vmatpush1.msra.mxu0 %v457
    %930 = vmatprep.subr.mxu0 %v462
    %931 = vmatpush1.msra.mxu0 %v461
    %932 = vmatprep.subr.mxu0 %v466
    %933 = vmatpush1.msra.mxu0 %v465
    %934 = vmatprep.subr.mxu0 %v470
    %935 = vmatpush1.msra.mxu0 %v469
    %936 = vmatprep.subr.mxu0 %v474
    %937 = vmatpush1.msra.mxu0 %v473
    %938 = vmatprep.subr.mxu0 %v478
    %939 = vmatpush1.msra.mxu0 %v477
    %940 = vmatprep.subr.mxu0 %v482
    %941 = vmatpush1.msra.mxu0 %v481
    %942 = vmatprep.subr.mxu0 %v486
    %943 = vmatpush1.msra.mxu0 %v485
    %944 = vmatprep.subr.mxu0 0.0
    %945 = vmatpush1.msra.mxu0 0.0
    %946 = vmatprep.subr.mxu0 0.0
    %947 = vmatpush1.msra.mxu0 0.0
    %948 = vmatprep.subr.mxu0 0.0
    %949 = vmatpush1.msra.mxu0 0.0
    %950 = vmatprep.subr.mxu0 0.0
    %951 = vmatpush1.msra.mxu0 0.0
    %952 = vmatprep.subr.mxu0 0.0
    %953 = vmatpush1.msra.mxu0 0.0
    %954 = vmatprep.subr.mxu0 0.0
    %955 = vmatpush1.msra.mxu0 0.0
    %956 = vmatprep.subr.mxu0 0.0
    %957 = vmatpush1.msra.mxu0 0.0
    %958 = vmatprep.subr.mxu0 0.0
    %959 = vmatpush1.msra.mxu0 0.0
    %960 = vmatprep.subr.mxu0 0.0
    %961 = vmatpush1.msra.mxu0 0.0
    %962 = vmatprep.subr.mxu0 0.0
    %963 = vmatpush1.msra.mxu0 0.0
    %964 = vmatprep.subr.mxu0 0.0
    %965 = vmatpush1.msra.mxu0 0.0
    %966 = vmatprep.subr.mxu0 0.0
    %967 = vmatpush1.msra.mxu0 0.0
    %968 = vmatprep.subr.mxu0 0.0
    %969 = vmatpush1.msra.mxu0 0.0
    %970 = vmatprep.subr.mxu0 0.0
    %971 = vmatpush1.msra.mxu0 0.0
    %972 = vmatprep.subr.mxu0 0.0
    %973 = vmatpush1.msra.mxu0 0.0
    %974 = vmatprep.subr.mxu0 0.0
    %975 = vmatpush1.msra.mxu0 0.0
    %976 = vmatprep.mubr.f32.mxu0 0.0
    %977 = vmatmul.mubr.f32.gmra.mrb[0].mxu0 %v835
    %v978 = vpop.f32.mrb[0].mxu0
    %v979 = vadd.f32 0.0, %v978
    %v980 = vpop.f32.mrb[0].mxu0
    %v981 = vadd.f32 0.0, %v980
    %982 = vdwg.mxu0
    %v983 = vadd.f32 %v837, %v908
    %v984 = vadd.f32 %v838, %v910
    %v985 = vadd.f32 %v839, %v979
    %v986 = vadd.f32 %v840, %v981
    %v987 = vxor.u32 %v983, 2147483648
    %v988 = vmul.f32 %v987, 1.442695
    %v989 = vpow.pop %v988
    %v990 = vadd.f32 %v989, 1.0
    %v991 = vrcp.pop %v990
    %v992 = vmul.f32 1.0, %v991
    %v993 = vxor.u32 %v984, 2147483648
    %v994 = vmul.f32 %v993, 1.442695
    %v995 = vpow.pop %v994
    %v996 = vadd.f32 %v995, 1.0
    %v997 = vrcp.pop %v996
    %v998 = vmul.f32 1.0, %v997
    %v999 = vtanh.pop %v985
    %v1000 = vxor.u32 %v986, 2147483648
    %v1001 = vmul.f32 %v1000, 1.442695
    %v1002 = vpow.pop %v1001
    %v1003 = vadd.f32 %v1002, 1.0
    %v1004 = vrcp.pop %v1003
    %v1005 = vmul.f32 1.0, %v1004
    %v1006 = vmul.f32 %v998, %v833
    %v1007 = vmul.f32 %v992, %v999
    %v1008 = vadd.f32 %v1006, %v1007
    %v1009 = vtanh.pop %v1008
    %v1010 = vmul.f32 %v1005, %v1009
    %1011 = vst [vmem:[#allocation2 + $0x10] sm:$0xff] %v1010
    %v1012 = vld [vmem:[#allocation3 + $0x60] sm:$0xff]
    %v1013 = vld [vmem:[#allocation3 + $0x68] sm:$0xff]
    %v1014 = vld [vmem:[#allocation3 + $0x70] sm:$0xff]
    %v1015 = vld [vmem:[#allocation3 + $0x78] sm:$0xff]
    %1016 = vmatprep.subr.mxu0 %v424
    %1017 = vmatpush1.msra.mxu0 %v423
    %1018 = vmatprep.subr.mxu0 %v428
    %1019 = vmatpush1.msra.mxu0 %v427
    %1020 = vmatprep.subr.mxu0 %v432
    %1021 = vmatpush1.msra.mxu0 %v431
    %1022 = vmatprep.subr.mxu0 %v436
    %1023 = vmatpush1.msra.mxu0 %v435
    %1024 = vmatprep.subr.mxu0 %v440
    %1025 = vmatpush1.msra.mxu0 %v439
    %1026 = vmatprep.subr.mxu0 %v444
    %1027 = vmatpush1.msra.mxu0 %v443
    %1028 = vmatprep.subr.mxu0 %v448
    %1029 = vmatpush1.msra.mxu0 %v447
    %1030 = vmatprep.subr.mxu0 %v452
    %1031 = vmatpush1.msra.mxu0 %v451
    %1032 = vmatprep.subr.mxu0 %v456
    %1033 = vmatpush1.msra.mxu0 %v455
    %1034 = vmatprep.subr.mxu0 %v460
    %1035 = vmatpush1.msra.mxu0 %v459
    %1036 = vmatprep.subr.mxu0 %v464
    %1037 = vmatpush1.msra.mxu0 %v463
    %1038 = vmatprep.subr.mxu0 %v468
    %1039 = vmatpush1.msra.mxu0 %v467
    %1040 = vmatprep.subr.mxu0 %v472
    %1041 = vmatpush1.msra.mxu0 %v471
    %1042 = vmatprep.subr.mxu0 %v476
    %1043 = vmatpush1.msra.mxu0 %v475
    %1044 = vmatprep.subr.mxu0 %v480
    %1045 = vmatpush1.msra.mxu0 %v479
    %1046 = vmatprep.subr.mxu0 %v484
    %1047 = vmatpush1.msra.mxu0 %v483
    %1048 = vmatprep.subr.mxu0 0.0
    %1049 = vmatpush1.msra.mxu0 0.0
    %1050 = vmatprep.subr.mxu0 0.0
    %1051 = vmatpush1.msra.mxu0 0.0
    %1052 = vmatprep.subr.mxu0 0.0
    %1053 = vmatpush1.msra.mxu0 0.0
    %1054 = vmatprep.subr.mxu0 0.0
    %1055 = vmatpush1.msra.mxu0 0.0
    %1056 = vmatprep.subr.mxu0 0.0
    %1057 = vmatpush1.msra.mxu0 0.0
    %1058 = vmatprep.subr.mxu0 0.0
    %1059 = vmatpush1.msra.mxu0 0.0
    %1060 = vmatprep.subr.mxu0 0.0
    %1061 = vmatpush1.msra.mxu0 0.0
    %1062 = vmatprep.subr.mxu0 0.0
    %1063 = vmatpush1.msra.mxu0 0.0
    %1064 = vmatprep.subr.mxu0 0.0
    %1065 = vmatpush1.msra.mxu0 0.0
    %1066 = vmatprep.subr.mxu0 0.0
    %1067 = vmatpush1.msra.mxu0 0.0
    %1068 = vmatprep.subr.mxu0 0.0
    %1069 = vmatpush1.msra.mxu0 0.0
    %1070 = vmatprep.subr.mxu0 0.0
    %1071 = vmatpush1.msra.mxu0 0.0
    %1072 = vmatprep.subr.mxu0 0.0
    %1073 = vmatpush1.msra.mxu0 0.0
    %1074 = vmatprep.subr.mxu0 0.0
    %1075 = vmatpush1.msra.mxu0 0.0
    %1076 = vmatprep.subr.mxu0 0.0
    %1077 = vmatpush1.msra.mxu0 0.0
    %1078 = vmatprep.subr.mxu0 0.0
    %1079 = vmatpush1.msra.mxu0 0.0
    %1080 = vmatprep.mubr.f32.mxu0 0.0
    %1081 = vmatmul.mubr.f32.gmra.mrb[0].mxu0 %v1010
    %v1082 = vpop.f32.mrb[0].mxu0
    %v1083 = vadd.f32 0.0, %v1082
    %v1084 = vpop.f32.mrb[0].mxu0
    %v1085 = vadd.f32 0.0, %v1084
    %1086 = vdwg.mxu0
    %1087 = vmatprep.subr.mxu0 %v426
    %1088 = vmatpush1.msra.mxu0 %v425
    %1089 = vmatprep.subr.mxu0 %v430
    %1090 = vmatpush1.msra.mxu0 %v429
    %1091 = vmatprep.subr.mxu0 %v434
    %1092 = vmatpush1.msra.mxu0 %v433
    %1093 = vmatprep.subr.mxu0 %v438
    %1094 = vmatpush1.msra.mxu0 %v437
    %1095 = vmatprep.subr.mxu0 %v442
    %1096 = vmatpush1.msra.mxu0 %v441
    %1097 = vmatprep.subr.mxu0 %v446
    %1098 = vmatpush1.msra.mxu0 %v445
    %1099 = vmatprep.subr.mxu0 %v450
    %1100 = vmatpush1.msra.mxu0 %v449
    %1101 = vmatprep.subr.mxu0 %v454
    %1102 = vmatpush1.msra.mxu0 %v453
    %1103 = vmatprep.subr.mxu0 %v458
    %1104 = vmatpush1.msra.mxu0 %v457
    %1105 = vmatprep.subr.mxu0 %v462
    %1106 = vmatpush1.msra.mxu0 %v461
    %1107 = vmatprep.subr.mxu0 %v466
    %1108 = vmatpush1.msra.mxu0 %v465
    %1109 = vmatprep.subr.mxu0 %v470
    %1110 = vmatpush1.msra.mxu0 %v469
    %1111 = vmatprep.subr.mxu0 %v474
    %1112 = vmatpush1.msra.mxu0 %v473
    %1113 = vmatprep.subr.mxu0 %v478
    %1114 = vmatpush1.msra.mxu0 %v477
    %1115 = vmatprep.subr.mxu0 %v482
    %1116 = vmatpush1.msra.mxu0 %v481
    %1117 = vmatprep.subr.mxu0 %v486
    %1118 = vmatpush1.msra.mxu0 %v485
    %1119 = vmatprep.subr.mxu0 0.0
    %1120 = vmatpush1.msra.mxu0 0.0
    %1121 = vmatprep.subr.mxu0 0.0
    %1122 = vmatpush1.msra.mxu0 0.0
    %1123 = vmatprep.subr.mxu0 0.0
    %1124 = vmatpush1.msra.mxu0 0.0
    %1125 = vmatprep.subr.mxu0 0.0
    %1126 = vmatpush1.msra.mxu0 0.0
    %1127 = vmatprep.subr.mxu0 0.0
    %1128 = vmatpush1.msra.mxu0 0.0
    %1129 = vmatprep.subr.mxu0 0.0
    %1130 = vmatpush1.msra.mxu0 0.0
    %1131 = vmatprep.subr.mxu0 0.0
    %1132 = vmatpush1.msra.mxu0 0.0
    %1133 = vmatprep.subr.mxu0 0.0
    %1134 = vmatpush1.msra.mxu0 0.0
    %1135 = vmatprep.subr.mxu0 0.0
    %1136 = vmatpush1.msra.mxu0 0.0
    %1137 = vmatprep.subr.mxu0 0.0
    %1138 = vmatpush1.msra.mxu0 0.0
    %1139 = vmatprep.subr.mxu0 0.0
    %1140 = vmatpush1.msra.mxu0 0.0
    %1141 = vmatprep.subr.mxu0 0.0
    %1142 = vmatpush1.msra.mxu0 0.0
    %1143 = vmatprep.subr.mxu0 0.0
    %1144 = vmatpush1.msra.mxu0 0.0
    %1145 = vmatprep.subr.mxu0 0.0
    %1146 = vmatpush1.msra.mxu0 0.0
    %1147 = vmatprep.subr.mxu0 0.0
    %1148 = vmatpush1.msra.mxu0 0.0
    %1149 = vmatprep.subr.mxu0 0.0
    %1150 = vmatpush1.msra.mxu0 0.0
    %1151 = vmatprep.mubr.f32.mxu0 0.0
    %1152 = vmatmul.mubr.f32.gmra.mrb[0].mxu0 %v1010
    %v1153 = vpop.f32.mrb[0].mxu0
    %v1154 = vadd.f32 0.0, %v1153
    %v1155 = vpop.f32.mrb[0].mxu0
    %v1156 = vadd.f32 0.0, %v1155
    %1157 = vdwg.mxu0
    %v1158 = vadd.f32 %v1012, %v1083
    %v1159 = vadd.f32 %v1013, %v1085
    %v1160 = vadd.f32 %v1014, %v1154
    %v1161 = vadd.f32 %v1015, %v1156
    %v1162 = vxor.u32 %v1158, 2147483648
    %v1163 = vmul.f32 %v1162, 1.442695
    %v1164 = vpow.pop %v1163
    %v1165 = vadd.f32 %v1164, 1.0
    %v1166 = vrcp.pop %v1165
    %v1167 = vmul.f32 1.0, %v1166
    %v1168 = vxor.u32 %v1159, 2147483648
    %v1169 = vmul.f32 %v1168, 1.442695
    %v1170 = vpow.pop %v1169
    %v1171 = vadd.f32 %v1170, 1.0
    %v1172 = vrcp.pop %v1171
    %v1173 = vmul.f32 1.0, %v1172
    %v1174 = vtanh.pop %v1160
    %v1175 = vxor.u32 %v1161, 2147483648
    %v1176 = vmul.f32 %v1175, 1.442695
    %v1177 = vpow.pop %v1176
    %v1178 = vadd.f32 %v1177, 1.0
    %v1179 = vrcp.pop %v1178
    %v1180 = vmul.f32 1.0, %v1179
    %v1181 = vmul.f32 %v1173, %v1008
    %v1182 = vmul.f32 %v1167, %v1174
    %v1183 = vadd.f32 %v1181, %v1182
    %v1184 = vtanh.pop %v1183
    %v1185 = vmul.f32 %v1180, %v1184
    %1186 = vst [vmem:[#allocation2 + $0x18] sm:$0xff] %v1185
    %v1187 = vld [vmem:[#allocation3 + $0x80] sm:$0xff]
    %v1188 = vld [vmem:[#allocation3 + $0x88] sm:$0xff]
    %v1189 = vld [vmem:[#allocation3 + $0x90] sm:$0xff]
    %v1190 = vld [vmem:[#allocation3 + $0x98] sm:$0xff]
    %1191 = vmatprep.subr.mxu0 %v424
    %1192 = vmatpush1.msra.mxu0 %v423
    %1193 = vmatprep.subr.mxu0 %v428
    %1194 = vmatpush1.msra.mxu0 %v427
    %1195 = vmatprep.subr.mxu0 %v432
    %1196 = vmatpush1.msra.mxu0 %v431
    %1197 = vmatprep.subr.mxu0 %v436
    %1198 = vmatpush1.msra.mxu0 %v435
    %1199 = vmatprep.subr.mxu0 %v440
    %1200 = vmatpush1.msra.mxu0 %v439
    %1201 = vmatprep.subr.mxu0 %v444
    %1202 = vmatpush1.msra.mxu0 %v443
    %1203 = vmatprep.subr.mxu0 %v448
    %1204 = vmatpush1.msra.mxu0 %v447
    %1205 = vmatprep.subr.mxu0 %v452
    %1206 = vmatpush1.msra.mxu0 %v451
    %1207 = vmatprep.subr.mxu0 %v456
    %1208 = vmatpush1.msra.mxu0 %v455
    %1209 = vmatprep.subr.mxu0 %v460
    %1210 = vmatpush1.msra.mxu0 %v459
    %1211 = vmatprep.subr.mxu0 %v464
    %1212 = vmatpush1.msra.mxu0 %v463
    %1213 = vmatprep.subr.mxu0 %v468
    %1214 = vmatpush1.msra.mxu0 %v467
    %1215 = vmatprep.subr.mxu0 %v472
    %1216 = vmatpush1.msra.mxu0 %v471
    %1217 = vmatprep.subr.mxu0 %v476
    %1218 = vmatpush1.msra.mxu0 %v475
    %1219 = vmatprep.subr.mxu0 %v480
    %1220 = vmatpush1.msra.mxu0 %v479
    %1221 = vmatprep.subr.mxu0 %v484
    %1222 = vmatpush1.msra.mxu0 %v483
    %1223 = vmatprep.subr.mxu0 0.0
    %1224 = vmatpush1.msra.mxu0 0.0
    %1225 = vmatprep.subr.mxu0 0.0
    %1226 = vmatpush1.msra.mxu0 0.0
    %1227 = vmatprep.subr.mxu0 0.0
    %1228 = vmatpush1.msra.mxu0 0.0
    %1229 = vmatprep.subr.mxu0 0.0
    %1230 = vmatpush1.msra.mxu0 0.0
    %1231 = vmatprep.subr.mxu0 0.0
    %1232 = vmatpush1.msra.mxu0 0.0
    %1233 = vmatprep.subr.mxu0 0.0
    %1234 = vmatpush1.msra.mxu0 0.0
    %1235 = vmatprep.subr.mxu0 0.0
    %1236 = vmatpush1.msra.mxu0 0.0
    %1237 = vmatprep.subr.mxu0 0.0
    %1238 = vmatpush1.msra.mxu0 0.0
    %1239 = vmatprep.subr.mxu0 0.0
    %1240 = vmatpush1.msra.mxu0 0.0
    %1241 = vmatprep.subr.mxu0 0.0
    %1242 = vmatpush1.msra.mxu0 0.0
    %1243 = vmatprep.subr.mxu0 0.0
    %1244 = vmatpush1.msra.mxu0 0.0
    %1245 = vmatprep.subr.mxu0 0.0
    %1246 = vmatpush1.msra.mxu0 0.0
    %1247 = vmatprep.subr.mxu0 0.0
    %1248 = vmatpush1.msra.mxu0 0.0
    %1249 = vmatprep.subr.mxu0 0.0
    %1250 = vmatpush1.msra.mxu0 0.0
    %1251 = vmatprep.subr.mxu0 0.0
    %1252 = vmatpush1.msra.mxu0 0.0
    %1253 = vmatprep.subr.mxu0 0.0
    %1254 = vmatpush1.msra.mxu0 0.0
    %1255 = vmatprep.mubr.f32.mxu0 0.0
    %1256 = vmatmul.mubr.f32.gmra.mrb[0].mxu0 %v1185
    %v1257 = vpop.f32.mrb[0].mxu0
    %v1258 = vadd.f32 0.0, %v1257
    %v1259 = vpop.f32.mrb[0].mxu0
    %v1260 = vadd.f32 0.0, %v1259
    %1261 = vdwg.mxu0
    %1262 = vmatprep.subr.mxu0 %v426
    %1263 = vmatpush1.msra.mxu0 %v425
    %1264 = vmatprep.subr.mxu0 %v430
    %1265 = vmatpush1.msra.mxu0 %v429
    %1266 = vmatprep.subr.mxu0 %v434
    %1267 = vmatpush1.msra.mxu0 %v433
    %1268 = vmatprep.subr.mxu0 %v438
    %1269 = vmatpush1.msra.mxu0 %v437
    %1270 = vmatprep.subr.mxu0 %v442
    %1271 = vmatpush1.msra.mxu0 %v441
    %1272 = vmatprep.subr.mxu0 %v446
    %1273 = vmatpush1.msra.mxu0 %v445
    %1274 = vmatprep.subr.mxu0 %v450
    %1275 = vmatpush1.msra.mxu0 %v449
    %1276 = vmatprep.subr.mxu0 %v454
    %1277 = vmatpush1.msra.mxu0 %v453
    %1278 = vmatprep.subr.mxu0 %v458
    %1279 = vmatpush1.msra.mxu0 %v457
    %1280 = vmatprep.subr.mxu0 %v462
    %1281 = vmatpush1.msra.mxu0 %v461
    %1282 = vmatprep.subr.mxu0 %v466
    %1283 = vmatpush1.msra.mxu0 %v465
    %1284 = vmatprep.subr.mxu0 %v470
    %1285 = vmatpush1.msra.mxu0 %v469
    %1286 = vmatprep.subr.mxu0 %v474
    %1287 = vmatpush1.msra.mxu0 %v473
    %1288 = vmatprep.subr.mxu0 %v478
    %1289 = vmatpush1.msra.mxu0 %v477
    %1290 = vmatprep.subr.mxu0 %v482
    %1291 = vmatpush1.msra.mxu0 %v481
    %1292 = vmatprep.subr.mxu0 %v486
    %1293 = vmatpush1.msra.mxu0 %v485
    %1294 = vmatprep.subr.mxu0 0.0
    %1295 = vmatpush1.msra.mxu0 0.0
    %1296 = vmatprep.subr.mxu0 0.0
    %1297 = vmatpush1.msra.mxu0 0.0
    %1298 = vmatprep.subr.mxu0 0.0
    %1299 = vmatpush1.msra.mxu0 0.0
    %1300 = vmatprep.subr.mxu0 0.0
    %1301 = vmatpush1.msra.mxu0 0.0
    %1302 = vmatprep.subr.mxu0 0.0
    %1303 = vmatpush1.msra.mxu0 0.0
    %1304 = vmatprep.subr.mxu0 0.0
    %1305 = vmatpush1.msra.mxu0 0.0
    %1306 = vmatprep.subr.mxu0 0.0
    %1307 = vmatpush1.msra.mxu0 0.0
    %1308 = vmatprep.subr.mxu0 0.0
    %1309 = vmatpush1.msra.mxu0 0.0
    %1310 = vmatprep.subr.mxu0 0.0
    %1311 = vmatpush1.msra.mxu0 0.0
    %1312 = vmatprep.subr.mxu0 0.0
    %1313 = vmatpush1.msra.mxu0 0.0
    %1314 = vmatprep.subr.mxu0 0.0
    %1315 = vmatpush1.msra.mxu0 0.0
    %1316 = vmatprep.subr.mxu0 0.0
    %1317 = vmatpush1.msra.mxu0 0.0
    %1318 = vmatprep.subr.mxu0 0.0
    %1319 = vmatpush1.msra.mxu0 0.0
    %1320 = vmatprep.subr.mxu0 0.0
    %1321 = vmatpush1.msra.mxu0 0.0
    %1322 = vmatprep.subr.mxu0 0.0
    %1323 = vmatpush1.msra.mxu0 0.0
    %1324 = vmatprep.subr.mxu0 0.0
    %1325 = vmatpush1.msra.mxu0 0.0
    %1326 = vmatprep.mubr.f32.mxu0 0.0
    %1327 = vmatmul.mubr.f32.gmra.mrb[0].mxu0 %v1185
    %v1328 = vpop.f32.mrb[0].mxu0
    %v1329 = vadd.f32 0.0, %v1328
    %v1330 = vpop.f32.mrb[0].mxu0
    %v1331 = vadd.f32 0.0, %v1330
    %1332 = vdwg.mxu0
    %v1333 = vadd.f32 %v1187, %v1258
    %v1334 = vadd.f32 %v1188, %v1260
    %v1335 = vadd.f32 %v1189, %v1329
    %v1336 = vadd.f32 %v1190, %v1331
    %v1337 = vxor.u32 %v1333, 2147483648
    %v1338 = vmul.f32 %v1337, 1.442695
    %v1339 = vpow.pop %v1338
    %v1340 = vadd.f32 %v1339, 1.0
    %v1341 = vrcp.pop %v1340
    %v1342 = vmul.f32 1.0, %v1341
    %v1343 = vxor.u32 %v1334, 2147483648
    %v1344 = vmul.f32 %v1343, 1.442695
    %v1345 = vpow.pop %v1344
    %v1346 = vadd.f32 %v1345, 1.0
    %v1347 = vrcp.pop %v1346
    %v1348 = vmul.f32 1.0, %v1347
    %v1349 = vtanh.pop %v1335
    %v1350 = vxor.u32 %v1336, 2147483648
    %v1351 = vmul.f32 %v1350, 1.442695
    %v1352 = vpow.pop %v1351
    %v1353 = vadd.f32 %v1352, 1.0
    %v1354 = vrcp.pop %v1353
    %v1355 = vmul.f32 1.0, %v1354
    %v1356 = vmul.f32 %v1348, %v1183
    %v1357 = vmul.f32 %v1342, %v1349
    %v1358 = vadd.f32 %v1356, %v1357
    %v1359 = vtanh.pop %v1358
    %v1360 = vmul.f32 %v1355, %v1359
    %1361 = vst [vmem:[#allocation2 + $0x20] sm:$0xff] %v1360
    %v1362 = vld [vmem:[#allocation3 + $0xa0] sm:$0xff]
    %v1363 = vld [vmem:[#allocation3 + $0xa8] sm:$0xff]
    %v1364 = vld [vmem:[#allocation3 + $0xb0] sm:$0xff]
    %v1365 = vld [vmem:[#allocation3 + $0xb8] sm:$0xff]
    %1366 = vmatprep.subr.mxu0 %v424
    %1367 = vmatpush1.msra.mxu0 %v423
    %1368 = vmatprep.subr.mxu0 %v428
    %1369 = vmatpush1.msra.mxu0 %v427
    %1370 = vmatprep.subr.mxu0 %v432
    %1371 = vmatpush1.msra.mxu0 %v431
    %1372 = vmatprep.subr.mxu0 %v436
    %1373 = vmatpush1.msra.mxu0 %v435
    %1374 = vmatprep.subr.mxu0 %v440
    %1375 = vmatpush1.msra.mxu0 %v439
    %1376 = vmatprep.subr.mxu0 %v444
    %1377 = vmatpush1.msra.mxu0 %v443
    %1378 = vmatprep.subr.mxu0 %v448
    %1379 = vmatpush1.msra.mxu0 %v447
    %1380 = vmatprep.subr.mxu0 %v452
    %1381 = vmatpush1.msra.mxu0 %v451
    %1382 = vmatprep.subr.mxu0 %v456
    %1383 = vmatpush1.msra.mxu0 %v455
    %1384 = vmatprep.subr.mxu0 %v460
    %1385 = vmatpush1.msra.mxu0 %v459
    %1386 = vmatprep.subr.mxu0 %v464
    %1387 = vmatpush1.msra.mxu0 %v463
    %1388 = vmatprep.subr.mxu0 %v468
    %1389 = vmatpush1.msra.mxu0 %v467
    %1390 = vmatprep.subr.mxu0 %v472
    %1391 = vmatpush1.msra.mxu0 %v471
    %1392 = vmatprep.subr.mxu0 %v476
    %1393 = vmatpush1.msra.mxu0 %v475
    %1394 = vmatprep.subr.mxu0 %v480
    %1395 = vmatpush1.msra.mxu0 %v479
    %1396 = vmatprep.subr.mxu0 %v484
    %1397 = vmatpush1.msra.mxu0 %v483
    %1398 = vmatprep.subr.mxu0 0.0
    %1399 = vmatpush1.msra.mxu0 0.0
    %1400 = vmatprep.subr.mxu0 0.0
    %1401 = vmatpush1.msra.mxu0 0.0
    %1402 = vmatprep.subr.mxu0 0.0
    %1403 = vmatpush1.msra.mxu0 0.0
    %1404 = vmatprep.subr.mxu0 0.0
    %1405 = vmatpush1.msra.mxu0 0.0
    %1406 = vmatprep.subr.mxu0 0.0
    %1407 = vmatpush1.msra.mxu0 0.0
    %1408 = vmatprep.subr.mxu0 0.0
    %1409 = vmatpush1.msra.mxu0 0.0
    %1410 = vmatprep.subr.mxu0 0.0
    %1411 = vmatpush1.msra.mxu0 0.0
    %1412 = vmatprep.subr.mxu0 0.0
    %1413 = vmatpush1.msra.mxu0 0.0
    %1414 = vmatprep.subr.mxu0 0.0
    %1415 = vmatpush1.msra.mxu0 0.0
    %1416 = vmatprep.subr.mxu0 0.0
    %1417 = vmatpush1.msra.mxu0 0.0
    %1418 = vmatprep.subr.mxu0 0.0
    %1419 = vmatpush1.msra.mxu0 0.0
    %1420 = vmatprep.subr.mxu0 0.0
    %1421 = vmatpush1.msra.mxu0 0.0
    %1422 = vmatprep.subr.mxu0 0.0
    %1423 = vmatpush1.msra.mxu0 0.0
    %1424 = vmatprep.subr.mxu0 0.0
    %1425 = vmatpush1.msra.mxu0 0.0
    %1426 = vmatprep.subr.mxu0 0.0
    %1427 = vmatpush1.msra.mxu0 0.0
    %1428 = vmatprep.subr.mxu0 0.0
    %1429 = vmatpush1.msra.mxu0 0.0
    %1430 = vmatprep.mubr.f32.mxu0 0.0
    %1431 = vmatmul.mubr.f32.gmra.mrb[0].mxu0 %v1360
    %v1432 = vpop.f32.mrb[0].mxu0
    %v1433 = vadd.f32 0.0, %v1432
    %v1434 = vpop.f32.mrb[0].mxu0
    %v1435 = vadd.f32 0.0, %v1434
    %1436 = vdwg.mxu0
    %1437 = vmatprep.subr.mxu0 %v426
    %1438 = vmatpush1.msra.mxu0 %v425
    %1439 = vmatprep.subr.mxu0 %v430
    %1440 = vmatpush1.msra.mxu0 %v429
    %1441 = vmatprep.subr.mxu0 %v434
    %1442 = vmatpush1.msra.mxu0 %v433
    %1443 = vmatprep.subr.mxu0 %v438
    %1444 = vmatpush1.msra.mxu0 %v437
    %1445 = vmatprep.subr.mxu0 %v442
    %1446 = vmatpush1.msra.mxu0 %v441
    %1447 = vmatprep.subr.mxu0 %v446
    %1448 = vmatpush1.msra.mxu0 %v445
    %1449 = vmatprep.subr.mxu0 %v450
    %1450 = vmatpush1.msra.mxu0 %v449
    %1451 = vmatprep.subr.mxu0 %v454
    %1452 = vmatpush1.msra.mxu0 %v453
    %1453 = vmatprep.subr.mxu0 %v458
    %1454 = vmatpush1.msra.mxu0 %v457
    %1455 = vmatprep.subr.mxu0 %v462
    %1456 = vmatpush1.msra.mxu0 %v461
    %1457 = vmatprep.subr.mxu0 %v466
    %1458 = vmatpush1.msra.mxu0 %v465
    %1459 = vmatprep.subr.mxu0 %v470
    %1460 = vmatpush1.msra.mxu0 %v469
    %1461 = vmatprep.subr.mxu0 %v474
    %1462 = vmatpush1.msra.mxu0 %v473
    %1463 = vmatprep.subr.mxu0 %v478
    %1464 = vmatpush1.msra.mxu0 %v477
    %1465 = vmatprep.subr.mxu0 %v482
    %1466 = vmatpush1.msra.mxu0 %v481
    %1467 = vmatprep.subr.mxu0 %v486
    %1468 = vmatpush1.msra.mxu0 %v485
    %1469 = vmatprep.subr.mxu0 0.0
    %1470 = vmatpush1.msra.mxu0 0.0
    %1471 = vmatprep.subr.mxu0 0.0
    %1472 = vmatpush1.msra.mxu0 0.0
    %1473 = vmatprep.subr.mxu0 0.0
    %1474 = vmatpush1.msra.mxu0 0.0
    %1475 = vmatprep.subr.mxu0 0.0
    %1476 = vmatpush1.msra.mxu0 0.0
    %1477 = vmatprep.subr.mxu0 0.0
    %1478 = vmatpush1.msra.mxu0 0.0
    %1479 = vmatprep.subr.mxu0 0.0
    %1480 = vmatpush1.msra.mxu0 0.0
    %1481 = vmatprep.subr.mxu0 0.0
    %1482 = vmatpush1.msra.mxu0 0.0
    %1483 = vmatprep.subr.mxu0 0.0
    %1484 = vmatpush1.msra.mxu0 0.0
    %1485 = vmatprep.subr.mxu0 0.0
    %1486 = vmatpush1.msra.mxu0 0.0
    %1487 = vmatprep.subr.mxu0 0.0
    %1488 = vmatpush1.msra.mxu0 0.0
    %1489 = vmatprep.subr.mxu0 0.0
    %1490 = vmatpush1.msra.mxu0 0.0
    %1491 = vmatprep.subr.mxu0 0.0
    %1492 = vmatpush1.msra.mxu0 0.0
    %1493 = vmatprep.subr.mxu0 0.0
    %1494 = vmatpush1.msra.mxu0 0.0
    %1495 = vmatprep.subr.mxu0 0.0
    %1496 = vmatpush1.msra.mxu0 0.0
    %1497 = vmatprep.subr.mxu0 0.0
    %1498 = vmatpush1.msra.mxu0 0.0
    %1499 = vmatprep.subr.mxu0 0.0
    %1500 = vmatpush1.msra.mxu0 0.0
    %1501 = vmatprep.mubr.f32.mxu0 0.0
    %1502 = vmatmul.mubr.f32.gmra.mrb[0].mxu0 %v1360
    %v1503 = vpop.f32.mrb[0].mxu0
    %v1504 = vadd.f32 0.0, %v1503
    %v1505 = vpop.f32.mrb[0].mxu0
    %v1506 = vadd.f32 0.0, %v1505
    %1507 = vdwg.mxu0
    %v1508 = vadd.f32 %v1362, %v1433
    %v1509 = vadd.f32 %v1363, %v1435
    %v1510 = vadd.f32 %v1364, %v1504
    %v1511 = vadd.f32 %v1365, %v1506
    %v1512 = vxor.u32 %v1508, 2147483648
    %v1513 = vmul.f32 %v1512, 1.442695
    %v1514 = vpow.pop %v1513
    %v1515 = vadd.f32 %v1514, 1.0
    %v1516 = vrcp.pop %v1515
    %v1517 = vmul.f32 1.0, %v1516
    %v1518 = vxor.u32 %v1509, 2147483648
    %v1519 = vmul.f32 %v1518, 1.442695
    %v1520 = vpow.pop %v1519
    %v1521 = vadd.f32 %v1520, 1.0
    %v1522 = vrcp.pop %v1521
    %v1523 = vmul.f32 1.0, %v1522
    %v1524 = vtanh.pop %v1510
    %v1525 = vxor.u32 %v1511, 2147483648
    %v1526 = vmul.f32 %v1525, 1.442695
    %v1527 = vpow.pop %v1526
    %v1528 = vadd.f32 %v1527, 1.0
    %v1529 = vrcp.pop %v1528
    %v1530 = vmul.f32 1.0, %v1529
    %v1531 = vmul.f32 %v1523, %v1358
    %v1532 = vmul.f32 %v1517, %v1524
    %v1533 = vadd.f32 %v1531, %v1532
    %v1534 = vtanh.pop %v1533
    %v1535 = vmul.f32 %v1530, %v1534
    %1536 = vst [vmem:[#allocation2 + $0x28] sm:$0xff] %v1535
    %v1537 = vld [vmem:[#allocation3 + $0xc0] sm:$0xff]
    %v1538 = vld [vmem:[#allocation3 + $0xc8] sm:$0xff]
    %v1539 = vld [vmem:[#allocation3 + $0xd0] sm:$0xff]
    %v1540 = vld [vmem:[#allocation3 + $0xd8] sm:$0xff]
    %1541 = vmatprep.subr.mxu0 %v424
    %1542 = vmatpush1.msra.mxu0 %v423
    %1543 = vmatprep.subr.mxu0 %v428
    %1544 = vmatpush1.msra.mxu0 %v427
    %1545 = vmatprep.subr.mxu0 %v432
    %1546 = vmatpush1.msra.mxu0 %v431
    %1547 = vmatprep.subr.mxu0 %v436
    %1548 = vmatpush1.msra.mxu0 %v435
    %1549 = vmatprep.subr.mxu0 %v440
    %1550 = vmatpush1.msra.mxu0 %v439
    %1551 = vmatprep.subr.mxu0 %v444
    %1552 = vmatpush1.msra.mxu0 %v443
    %1553 = vmatprep.subr.mxu0 %v448
    %1554 = vmatpush1.msra.mxu0 %v447
    %1555 = vmatprep.subr.mxu0 %v452
    %1556 = vmatpush1.msra.mxu0 %v451
    %1557 = vmatprep.subr.mxu0 %v456
    %1558 = vmatpush1.msra.mxu0 %v455
    %1559 = vmatprep.subr.mxu0 %v460
    %1560 = vmatpush1.msra.mxu0 %v459
    %1561 = vmatprep.subr.mxu0 %v464
    %1562 = vmatpush1.msra.mxu0 %v463
    %1563 = vmatprep.subr.mxu0 %v468
    %1564 = vmatpush1.msra.mxu0 %v467
    %1565 = vmatprep.subr.mxu0 %v472
    %1566 = vmatpush1.msra.mxu0 %v471
    %1567 = vmatprep.subr.mxu0 %v476
    %1568 = vmatpush1.msra.mxu0 %v475
    %1569 = vmatprep.subr.mxu0 %v480
    %1570 = vmatpush1.msra.mxu0 %v479
    %1571 = vmatprep.subr.mxu0 %v484
    %1572 = vmatpush1.msra.mxu0 %v483
    %1573 = vmatprep.subr.mxu0 0.0
    %1574 = vmatpush1.msra.mxu0 0.0
    %1575 = vmatprep.subr.mxu0 0.0
    %1576 = vmatpush1.msra.mxu0 0.0
    %1577 = vmatprep.subr.mxu0 0.0
    %1578 = vmatpush1.msra.mxu0 0.0
    %1579 = vmatprep.subr.mxu0 0.0
    %1580 = vmatpush1.msra.mxu0 0.0
    %1581 = vmatprep.subr.mxu0 0.0
    %1582 = vmatpush1.msra.mxu0 0.0
    %1583 = vmatprep.subr.mxu0 0.0
    %1584 = vmatpush1.msra.mxu0 0.0
    %1585 = vmatprep.subr.mxu0 0.0
    %1586 = vmatpush1.msra.mxu0 0.0
    %1587 = vmatprep.subr.mxu0 0.0
    %1588 = vmatpush1.msra.mxu0 0.0
    %1589 = vmatprep.subr.mxu0 0.0
    %1590 = vmatpush1.msra.mxu0 0.0
    %1591 = vmatprep.subr.mxu0 0.0
    %1592 = vmatpush1.msra.mxu0 0.0
    %1593 = vmatprep.subr.mxu0 0.0
    %1594 = vmatpush1.msra.mxu0 0.0
    %1595 = vmatprep.subr.mxu0 0.0
    %1596 = vmatpush1.msra.mxu0 0.0
    %1597 = vmatprep.subr.mxu0 0.0
    %1598 = vmatpush1.msra.mxu0 0.0
    %1599 = vmatprep.subr.mxu0 0.0
    %1600 = vmatpush1.msra.mxu0 0.0
    %1601 = vmatprep.subr.mxu0 0.0
    %1602 = vmatpush1.msra.mxu0 0.0
    %1603 = vmatprep.subr.mxu0 0.0
    %1604 = vmatpush1.msra.mxu0 0.0
    %1605 = vmatprep.mubr.f32.mxu0 0.0
    %1606 = vmatmul.mubr.f32.gmra.mrb[0].mxu0 %v1535
    %v1607 = vpop.f32.mrb[0].mxu0
    %v1608 = vadd.f32 0.0, %v1607
    %v1609 = vpop.f32.mrb[0].mxu0
    %v1610 = vadd.f32 0.0, %v1609
    %1611 = vdwg.mxu0
    %1612 = vmatprep.subr.mxu0 %v426
    %1613 = vmatpush1.msra.mxu0 %v425
    %1614 = vmatprep.subr.mxu0 %v430
    %1615 = vmatpush1.msra.mxu0 %v429
    %1616 = vmatprep.subr.mxu0 %v434
    %1617 = vmatpush1.msra.mxu0 %v433
    %1618 = vmatprep.subr.mxu0 %v438
    %1619 = vmatpush1.msra.mxu0 %v437
    %1620 = vmatprep.subr.mxu0 %v442
    %1621 = vmatpush1.msra.mxu0 %v441
    %1622 = vmatprep.subr.mxu0 %v446
    %1623 = vmatpush1.msra.mxu0 %v445
    %1624 = vmatprep.subr.mxu0 %v450
    %1625 = vmatpush1.msra.mxu0 %v449
    %1626 = vmatprep.subr.mxu0 %v454
    %1627 = vmatpush1.msra.mxu0 %v453
    %1628 = vmatprep.subr.mxu0 %v458
    %1629 = vmatpush1.msra.mxu0 %v457
    %1630 = vmatprep.subr.mxu0 %v462
    %1631 = vmatpush1.msra.mxu0 %v461
    %1632 = vmatprep.subr.mxu0 %v466
    %1633 = vmatpush1.msra.mxu0 %v465
    %1634 = vmatprep.subr.mxu0 %v470
    %1635 = vmatpush1.msra.mxu0 %v469
    %1636 = vmatprep.subr.mxu0 %v474
    %1637 = vmatpush1.msra.mxu0 %v473
    %1638 = vmatprep.subr.mxu0 %v478
    %1639 = vmatpush1.msra.mxu0 %v477
    %1640 = vmatprep.subr.mxu0 %v482
    %1641 = vmatpush1.msra.mxu0 %v481
    %1642 = vmatprep.subr.mxu0 %v486
    %1643 = vmatpush1.msra.mxu0 %v485
    %1644 = vmatprep.subr.mxu0 0.0
    %1645 = vmatpush1.msra.mxu0 0.0
    %1646 = vmatprep.subr.mxu0 0.0
    %1647 = vmatpush1.msra.mxu0 0.0
    %1648 = vmatprep.subr.mxu0 0.0
    %1649 = vmatpush1.msra.mxu0 0.0
    %1650 = vmatprep.subr.mxu0 0.0
    %1651 = vmatpush1.msra.mxu0 0.0
    %1652 = vmatprep.subr.mxu0 0.0
    %1653 = vmatpush1.msra.mxu0 0.0
    %1654 = vmatprep.subr.mxu0 0.0
    %1655 = vmatpush1.msra.mxu0 0.0
    %1656 = vmatprep.subr.mxu0 0.0
    %1657 = vmatpush1.msra.mxu0 0.0
    %1658 = vmatprep.subr.mxu0 0.0
    %1659 = vmatpush1.msra.mxu0 0.0
    %1660 = vmatprep.subr.mxu0 0.0
    %1661 = vmatpush1.msra.mxu0 0.0
    %1662 = vmatprep.subr.mxu0 0.0
    %1663 = vmatpush1.msra.mxu0 0.0
    %1664 = vmatprep.subr.mxu0 0.0
    %1665 = vmatpush1.msra.mxu0 0.0
    %1666 = vmatprep.subr.mxu0 0.0
    %1667 = vmatpush1.msra.mxu0 0.0
    %1668 = vmatprep.subr.mxu0 0.0
    %1669 = vmatpush1.msra.mxu0 0.0
    %1670 = vmatprep.subr.mxu0 0.0
    %1671 = vmatpush1.msra.mxu0 0.0
    %1672 = vmatprep.subr.mxu0 0.0
    %1673 = vmatpush1.msra.mxu0 0.0
    %1674 = vmatprep.subr.mxu0 0.0
    %1675 = vmatpush1.msra.mxu0 0.0
    %1676 = vmatprep.mubr.f32.mxu0 0.0
    %1677 = vmatmul.mubr.f32.gmra.mrb[0].mxu0 %v1535
    %v1678 = vpop.f32.mrb[0].mxu0
    %v1679 = vadd.f32 0.0, %v1678
    %v1680 = vpop.f32.mrb[0].mxu0
    %v1681 = vadd.f32 0.0, %v1680
    %1682 = vdwg.mxu0
    %v1683 = vadd.f32 %v1537, %v1608
    %v1684 = vadd.f32 %v1538, %v1610
    %v1685 = vadd.f32 %v1539, %v1679
    %v1686 = vadd.f32 %v1540, %v1681
    %v1687 = vxor.u32 %v1683, 2147483648
    %v1688 = vmul.f32 %v1687, 1.442695
    %v1689 = vpow.pop %v1688
    %v1690 = vadd.f32 %v1689, 1.0
    %v1691 = vrcp.pop %v1690
    %v1692 = vmul.f32 1.0, %v1691
    %v1693 = vxor.u32 %v1684, 2147483648
    %v1694 = vmul.f32 %v1693, 1.442695
    %v1695 = vpow.pop %v1694
    %v1696 = vadd.f32 %v1695, 1.0
    %v1697 = vrcp.pop %v1696
    %v1698 = vmul.f32 1.0, %v1697
    %v1699 = vtanh.pop %v1685
    %v1700 = vxor.u32 %v1686, 2147483648
    %v1701 = vmul.f32 %v1700, 1.442695
    %v1702 = vpow.pop %v1701
    %v1703 = vadd.f32 %v1702, 1.0
    %v1704 = vrcp.pop %v1703
    %v1705 = vmul.f32 1.0, %v1704
    %v1706 = vmul.f32 %v1698, %v1533
    %v1707 = vmul.f32 %v1692, %v1699
    %v1708 = vadd.f32 %v1706, %v1707
    %v1709 = vtanh.pop %v1708
    %v1710 = vmul.f32 %v1705, %v1709
    %1711 = vst [vmem:[#allocation2 + $0x30] sm:$0xff] %v1710
    %v1712 = vld [vmem:[#allocation3 + $0xe0] sm:$0xff]
    %v1713 = vld [vmem:[#allocation3 + $0xe8] sm:$0xff]
    %v1714 = vld [vmem:[#allocation3 + $0xf0] sm:$0xff]
    %v1715 = vld [vmem:[#allocation3 + $0xf8] sm:$0xff]
    %1716 = vmatprep.subr.mxu0 %v424
    %1717 = vmatpush1.msra.mxu0 %v423
    %1718 = vmatprep.subr.mxu0 %v428
    %1719 = vmatpush1.msra.mxu0 %v427
    %1720 = vmatprep.subr.mxu0 %v432
    %1721 = vmatpush1.msra.mxu0 %v431
    %1722 = vmatprep.subr.mxu0 %v436
    %1723 = vmatpush1.msra.mxu0 %v435
    %1724 = vmatprep.subr.mxu0 %v440
    %1725 = vmatpush1.msra.mxu0 %v439
    %1726 = vmatprep.subr.mxu0 %v444
    %1727 = vmatpush1.msra.mxu0 %v443
    %1728 = vmatprep.subr.mxu0 %v448
    %1729 = vmatpush1.msra.mxu0 %v447
    %1730 = vmatprep.subr.mxu0 %v452
    %1731 = vmatpush1.msra.mxu0 %v451
    %1732 = vmatprep.subr.mxu0 %v456
    %1733 = vmatpush1.msra.mxu0 %v455
    %1734 = vmatprep.subr.mxu0 %v460
    %1735 = vmatpush1.msra.mxu0 %v459
    %1736 = vmatprep.subr.mxu0 %v464
    %1737 = vmatpush1.msra.mxu0 %v463
    %1738 = vmatprep.subr.mxu0 %v468
    %1739 = vmatpush1.msra.mxu0 %v467
    %1740 = vmatprep.subr.mxu0 %v472
    %1741 = vmatpush1.msra.mxu0 %v471
    %1742 = vmatprep.subr.mxu0 %v476
    %1743 = vmatpush1.msra.mxu0 %v475
    %1744 = vmatprep.subr.mxu0 %v480
    %1745 = vmatpush1.msra.mxu0 %v479
    %1746 = vmatprep.subr.mxu0 %v484
    %1747 = vmatpush1.msra.mxu0 %v483
    %1748 = vmatprep.subr.mxu0 0.0
    %1749 = vmatpush1.msra.mxu0 0.0
    %1750 = vmatprep.subr.mxu0 0.0
    %1751 = vmatpush1.msra.mxu0 0.0
    %1752 = vmatprep.subr.mxu0 0.0
    %1753 = vmatpush1.msra.mxu0 0.0
    %1754 = vmatprep.subr.mxu0 0.0
    %1755 = vmatpush1.msra.mxu0 0.0
    %1756 = vmatprep.subr.mxu0 0.0
    %1757 = vmatpush1.msra.mxu0 0.0
    %1758 = vmatprep.subr.mxu0 0.0
    %1759 = vmatpush1.msra.mxu0 0.0
    %1760 = vmatprep.subr.mxu0 0.0
    %1761 = vmatpush1.msra.mxu0 0.0
    %1762 = vmatprep.subr.mxu0 0.0
    %1763 = vmatpush1.msra.mxu0 0.0
    %1764 = vmatprep.subr.mxu0 0.0
    %1765 = vmatpush1.msra.mxu0 0.0
    %1766 = vmatprep.subr.mxu0 0.0
    %1767 = vmatpush1.msra.mxu0 0.0
    %1768 = vmatprep.subr.mxu0 0.0
    %1769 = vmatpush1.msra.mxu0 0.0
    %1770 = vmatprep.subr.mxu0 0.0
    %1771 = vmatpush1.msra.mxu0 0.0
    %1772 = vmatprep.subr.mxu0 0.0
    %1773 = vmatpush1.msra.mxu0 0.0
    %1774 = vmatprep.subr.mxu0 0.0
    %1775 = vmatpush1.msra.mxu0 0.0
    %1776 = vmatprep.subr.mxu0 0.0
    %1777 = vmatpush1.msra.mxu0 0.0
    %1778 = vmatprep.subr.mxu0 0.0
    %1779 = vmatpush1.msra.mxu0 0.0
    %1780 = vmatprep.mubr.f32.mxu0 0.0
    %1781 = vmatmul.mubr.f32.gmra.mrb[0].mxu0 %v1710
    %v1782 = vpop.f32.mrb[0].mxu0
    %v1783 = vadd.f32 0.0, %v1782
    %v1784 = vpop.f32.mrb[0].mxu0
    %v1785 = vadd.f32 0.0, %v1784
    %1786 = vdwg.mxu0
    %1787 = vmatprep.subr.mxu0 %v426
    %1788 = vmatpush1.msra.mxu0 %v425
    %1789 = vmatprep.subr.mxu0 %v430
    %1790 = vmatpush1.msra.mxu0 %v429
    %1791 = vmatprep.subr.mxu0 %v434
    %1792 = vmatpush1.msra.mxu0 %v433
    %1793 = vmatprep.subr.mxu0 %v438
    %1794 = vmatpush1.msra.mxu0 %v437
    %1795 = vmatprep.subr.mxu0 %v442
    %1796 = vmatpush1.msra.mxu0 %v441
    %1797 = vmatprep.subr.mxu0 %v446
    %1798 = vmatpush1.msra.mxu0 %v445
    %1799 = vmatprep.subr.mxu0 %v450
    %1800 = vmatpush1.msra.mxu0 %v449
    %1801 = vmatprep.subr.mxu0 %v454
    %1802 = vmatpush1.msra.mxu0 %v453
    %1803 = vmatprep.subr.mxu0 %v458
    %1804 = vmatpush1.msra.mxu0 %v457
    %1805 = vmatprep.subr.mxu0 %v462
    %1806 = vmatpush1.msra.mxu0 %v461
    %1807 = vmatprep.subr.mxu0 %v466
    %1808 = vmatpush1.msra.mxu0 %v465
    %1809 = vmatprep.subr.mxu0 %v470
    %1810 = vmatpush1.msra.mxu0 %v469
    %1811 = vmatprep.subr.mxu0 %v474
    %1812 = vmatpush1.msra.mxu0 %v473
    %1813 = vmatprep.subr.mxu0 %v478
    %1814 = vmatpush1.msra.mxu0 %v477
    %1815 = vmatprep.subr.mxu0 %v482
    %1816 = vmatpush1.msra.mxu0 %v481
    %1817 = vmatprep.subr.mxu0 %v486
    %1818 = vmatpush1.msra.mxu0 %v485
    %1819 = vmatprep.subr.mxu0 0.0
    %1820 = vmatpush1.msra.mxu0 0.0
    %1821 = vmatprep.subr.mxu0 0.0
    %1822 = vmatpush1.msra.mxu0 0.0
    %1823 = vmatprep.subr.mxu0 0.0
    %1824 = vmatpush1.msra.mxu0 0.0
    %1825 = vmatprep.subr.mxu0 0.0
    %1826 = vmatpush1.msra.mxu0 0.0
    %1827 = vmatprep.subr.mxu0 0.0
    %1828 = vmatpush1.msra.mxu0 0.0
    %1829 = vmatprep.subr.mxu0 0.0
    %1830 = vmatpush1.msra.mxu0 0.0
    %1831 = vmatprep.subr.mxu0 0.0
    %1832 = vmatpush1.msra.mxu0 0.0
    %1833 = vmatprep.subr.mxu0 0.0
    %1834 = vmatpush1.msra.mxu0 0.0
    %1835 = vmatprep.subr.mxu0 0.0
    %1836 = vmatpush1.msra.mxu0 0.0
    %1837 = vmatprep.subr.mxu0 0.0
    %1838 = vmatpush1.msra.mxu0 0.0
    %1839 = vmatprep.subr.mxu0 0.0
    %1840 = vmatpush1.msra.mxu0 0.0
    %1841 = vmatprep.subr.mxu0 0.0
    %1842 = vmatpush1.msra.mxu0 0.0
    %1843 = vmatprep.subr.mxu0 0.0
    %1844 = vmatpush1.msra.mxu0 0.0
    %1845 = vmatprep.subr.mxu0 0.0
    %1846 = vmatpush1.msra.mxu0 0.0
    %1847 = vmatprep.subr.mxu0 0.0
    %1848 = vmatpush1.msra.mxu0 0.0
    %1849 = vmatprep.subr.mxu0 0.0
    %1850 = vmatpush1.msra.mxu0 0.0
    %1851 = vmatprep.mubr.f32.mxu0 0.0
    %1852 = vmatmul.mubr.f32.gmra.mrb[0].mxu0 %v1710
    %v1853 = vpop.f32.mrb[0].mxu0
    %v1854 = vadd.f32 0.0, %v1853
    %v1855 = vpop.f32.mrb[0].mxu0
    %v1856 = vadd.f32 0.0, %v1855
    %1857 = vdwg.mxu0
    %v1858 = vadd.f32 %v1712, %v1783
    %v1859 = vadd.f32 %v1713, %v1785
    %v1860 = vadd.f32 %v1714, %v1854
    %v1861 = vadd.f32 %v1715, %v1856
    %v1862 = vxor.u32 %v1858, 2147483648
    %v1863 = vmul.f32 %v1862, 1.442695
    %v1864 = vpow.pop %v1863
    %v1865 = vadd.f32 %v1864, 1.0
    %v1866 = vrcp.pop %v1865
    %v1867 = vmul.f32 1.0, %v1866
    %v1868 = vxor.u32 %v1859, 2147483648
    %v1869 = vmul.f32 %v1868, 1.442695
    %v1870 = vpow.pop %v1869
    %v1871 = vadd.f32 %v1870, 1.0
    %v1872 = vrcp.pop %v1871
    %v1873 = vmul.f32 1.0, %v1872
    %v1874 = vtanh.pop %v1860
    %v1875 = vxor.u32 %v1861, 2147483648
    %v1876 = vmul.f32 %v1875, 1.442695
    %v1877 = vpow.pop %v1876
    %v1878 = vadd.f32 %v1877, 1.0
    %v1879 = vrcp.pop %v1878
    %v1880 = vmul.f32 1.0, %v1879
    %v1881 = vmul.f32 %v1873, %v1708
    %v1882 = vmul.f32 %v1867, %v1874
    %v1883 = vadd.f32 %v1881, %v1882
    %v1884 = vtanh.pop %v1883
    %v1885 = vmul.f32 %v1880, %v1884
    %1886 = vst [vmem:[#allocation2 + $0x38] sm:$0xff] %v1885
    %1887 = vst [vmem:[#allocation10] sm:$0xff] %v1885
    %1888 = vst [vmem:[#allocation11] sm:$0xff] %v1883
    %v1889 = vld [vmem:[#allocation2] sm:$0xff]
    %v1890 = vld [vmem:[#allocation2 + $0x8] sm:$0xff]
    %v1891 = vld [vmem:[#allocation2 + $0x10] sm:$0xff]
    %v1892 = vld [vmem:[#allocation2 + $0x18] sm:$0xff]
    %v1893 = vld [vmem:[#allocation2 + $0x20] sm:$0xff]
    %v1894 = vld [vmem:[#allocation2 + $0x28] sm:$0xff]
    %v1895 = vld [vmem:[#allocation2 + $0x30] sm:$0xff]
    %v1896 = vld [vmem:[#allocation2 + $0x38] sm:$0xff]
    %v1897 = vld [vmem:[#allocation7] sm:$0xff]
    %v1898 = vld [vmem:[#allocation7 + $0x8] sm:$0xff]
    %v1899 = vld [vmem:[#allocation7 + $0x10] sm:$0xff]
    %v1900 = vld [vmem:[#allocation7 + $0x18] sm:$0xff]
    %v1901 = vld [vmem:[#allocation7 + $0x20] sm:$0xff]
    %v1902 = vld [vmem:[#allocation7 + $0x28] sm:$0xff]
    %v1903 = vld [vmem:[#allocation7 + $0x30] sm:$0xff]
    %v1904 = vld [vmem:[#allocation7 + $0x38] sm:$0xff]
    %v1905 = vld [vmem:[#allocation7 + $0x40] sm:$0xff]
    %v1906 = vld [vmem:[#allocation7 + $0x48] sm:$0xff]
    %v1907 = vld [vmem:[#allocation7 + $0x50] sm:$0xff]
    %v1908 = vld [vmem:[#allocation7 + $0x58] sm:$0xff]
    %v1909 = vld [vmem:[#allocation7 + $0x60] sm:$0xff]
    %v1910 = vld [vmem:[#allocation7 + $0x68] sm:$0xff]
    %v1911 = vld [vmem:[#allocation7 + $0x70] sm:$0xff]
    %v1912 = vld [vmem:[#allocation7 + $0x78] sm:$0xff]
    %v1913 = vld [vmem:[#allocation7 + $0x80] sm:$0xff]
    %v1914 = vld [vmem:[#allocation7 + $0x88] sm:$0xff]
    %v1915 = vld [vmem:[#allocation7 + $0x90] sm:$0xff]
    %v1916 = vld [vmem:[#allocation7 + $0x98] sm:$0xff]
    %v1917 = vld [vmem:[#allocation7 + $0xa0] sm:$0xff]
    %v1918 = vld [vmem:[#allocation7 + $0xa8] sm:$0xff]
    %v1919 = vld [vmem:[#allocation7 + $0xb0] sm:$0xff]
    %v1920 = vld [vmem:[#allocation7 + $0xb8] sm:$0xff]
    %v1921 = vld [vmem:[#allocation7 + $0xc0] sm:$0xff]
    %v1922 = vld [vmem:[#allocation7 + $0xc8] sm:$0xff]
    %v1923 = vld [vmem:[#allocation7 + $0xd0] sm:$0xff]
    %v1924 = vld [vmem:[#allocation7 + $0xd8] sm:$0xff]
    %v1925 = vld [vmem:[#allocation7 + $0xe0] sm:$0xff]
    %v1926 = vld [vmem:[#allocation7 + $0xe8] sm:$0xff]
    %v1927 = vld [vmem:[#allocation7 + $0xf0] sm:$0xff]
    %v1928 = vld [vmem:[#allocation7 + $0xf8] sm:$0xff]
    %v1929 = vld [vmem:[#allocation7 + $0x100] sm:$0xff]
    %v1930 = vld [vmem:[#allocation7 + $0x108] sm:$0xff]
    %v1931 = vld [vmem:[#allocation7 + $0x110] sm:$0xff]
    %v1932 = vld [vmem:[#allocation7 + $0x118] sm:$0xff]
    %v1933 = vld [vmem:[#allocation7 + $0x120] sm:$0xff]
    %v1934 = vld [vmem:[#allocation7 + $0x128] sm:$0xff]
    %v1935 = vld [vmem:[#allocation7 + $0x130] sm:$0xff]
    %v1936 = vld [vmem:[#allocation7 + $0x138] sm:$0xff]
    %v1937 = vld [vmem:[#allocation7 + $0x140] sm:$0xff]
    %v1938 = vld [vmem:[#allocation7 + $0x148] sm:$0xff]
    %v1939 = vld [vmem:[#allocation7 + $0x150] sm:$0xff]
    %v1940 = vld [vmem:[#allocation7 + $0x158] sm:$0xff]
    %v1941 = vld [vmem:[#allocation7 + $0x160] sm:$0xff]
    %v1942 = vld [vmem:[#allocation7 + $0x168] sm:$0xff]
    %v1943 = vld [vmem:[#allocation7 + $0x170] sm:$0xff]
    %v1944 = vld [vmem:[#allocation7 + $0x178] sm:$0xff]
    %v1945 = vld [vmem:[#allocation7 + $0x180] sm:$0xff]
    %v1946 = vld [vmem:[#allocation7 + $0x188] sm:$0xff]
    %v1947 = vld [vmem:[#allocation7 + $0x190] sm:$0xff]
    %v1948 = vld [vmem:[#allocation7 + $0x198] sm:$0xff]
    %v1949 = vld [vmem:[#allocation7 + $0x1a0] sm:$0xff]
    %v1950 = vld [vmem:[#allocation7 + $0x1a8] sm:$0xff]
    %v1951 = vld [vmem:[#allocation7 + $0x1b0] sm:$0xff]
    %v1952 = vld [vmem:[#allocation7 + $0x1b8] sm:$0xff]
    %v1953 = vld [vmem:[#allocation7 + $0x1c0] sm:$0xff]
    %v1954 = vld [vmem:[#allocation7 + $0x1c8] sm:$0xff]
    %v1955 = vld [vmem:[#allocation7 + $0x1d0] sm:$0xff]
    %v1956 = vld [vmem:[#allocation7 + $0x1d8] sm:$0xff]
    %v1957 = vld [vmem:[#allocation7 + $0x1e0] sm:$0xff]
    %v1958 = vld [vmem:[#allocation7 + $0x1e8] sm:$0xff]
    %v1959 = vld [vmem:[#allocation7 + $0x1f0] sm:$0xff]
    %v1960 = vld [vmem:[#allocation7 + $0x1f8] sm:$0xff]
    %v1961 = vld [vmem:[%s6] sm:$0xf]
    %v1963 = vlaneseq
    %v1964 = vshrl.u32 %v1963, 7
    %v1965 = vsub.s32 0, %v1964
    %v1966 = vrot.slane %v1961, %v1965
    %v1967 = vlaneseq
    %v1968 = vshrl.u32 %v1967, 7
    %v1969 = vsub.s32 1, %v1968
    %v1970 = vrot.slane %v1961, %v1969
    %v1971 = vlaneseq
    %v1972 = vshrl.u32 %v1971, 7
    %v1973 = vsub.s32 2, %v1972
    %v1974 = vrot.slane %v1961, %v1973
    %v1975 = vlaneseq
    %v1976 = vshrl.u32 %v1975, 7
    %v1977 = vsub.s32 3, %v1976
    %v1978 = vrot.slane %v1961, %v1977
    %1983 = vmatprep.subr.mxu0 %v1898
    %1984 = vmatpush1.msra.mxu0 %v1897
    %1985 = vmatprep.subr.mxu0 %v1902
    %1986 = vmatpush1.msra.mxu0 %v1901
    %1987 = vmatprep.subr.mxu0 %v1906
    %1988 = vmatpush1.msra.mxu0 %v1905
    %1989 = vmatprep.subr.mxu0 %v1910
    %1990 = vmatpush1.msra.mxu0 %v1909
    %1991 = vmatprep.subr.mxu0 %v1914
    %1992 = vmatpush1.msra.mxu0 %v1913
    %1993 = vmatprep.subr.mxu0 %v1918
    %1994 = vmatpush1.msra.mxu0 %v1917
    %1995 = vmatprep.subr.mxu0 %v1922
    %1996 = vmatpush1.msra.mxu0 %v1921
    %1997 = vmatprep.subr.mxu0 %v1926
    %1998 = vmatpush1.msra.mxu0 %v1925
    %1999 = vmatprep.subr.mxu0 %v1930
    %2000 = vmatpush1.msra.mxu0 %v1929
    %2001 = vmatprep.subr.mxu0 %v1934
    %2002 = vmatpush1.msra.mxu0 %v1933
    %2003 = vmatprep.subr.mxu0 %v1938
    %2004 = vmatpush1.msra.mxu0 %v1937
    %2005 = vmatprep.subr.mxu0 %v1942
    %2006 = vmatpush1.msra.mxu0 %v1941
    %2007 = vmatprep.subr.mxu0 %v1946
    %2008 = vmatpush1.msra.mxu0 %v1945
    %2009 = vmatprep.subr.mxu0 %v1950
    %2010 = vmatpush1.msra.mxu0 %v1949
    %2011 = vmatprep.subr.mxu0 %v1954
    %2012 = vmatpush1.msra.mxu0 %v1953
    %2013 = vmatprep.subr.mxu0 %v1958
    %2014 = vmatpush1.msra.mxu0 %v1957
    %2015 = vmatprep.subr.mxu0 0.0
    %2016 = vmatpush1.msra.mxu0 0.0
    %2017 = vmatprep.subr.mxu0 0.0
    %2018 = vmatpush1.msra.mxu0 0.0
    %2019 = vmatprep.subr.mxu0 0.0
    %2020 = vmatpush1.msra.mxu0 0.0
    %2021 = vmatprep.subr.mxu0 0.0
    %2022 = vmatpush1.msra.mxu0 0.0
    %2023 = vmatprep.subr.mxu0 0.0
    %2024 = vmatpush1.msra.mxu0 0.0
    %2025 = vmatprep.subr.mxu0 0.0
    %2026 = vmatpush1.msra.mxu0 0.0
    %2027 = vmatprep.subr.mxu0 0.0
    %2028 = vmatpush1.msra.mxu0 0.0
    %2029 = vmatprep.subr.mxu0 0.0
    %2030 = vmatpush1.msra.mxu0 0.0
    %2031 = vmatprep.subr.mxu0 0.0
    %2032 = vmatpush1.msra.mxu0 0.0
    %2033 = vmatprep.subr.mxu0 0.0
    %2034 = vmatpush1.msra.mxu0 0.0
    %2035 = vmatprep.subr.mxu0 0.0
    %2036 = vmatpush1.msra.mxu0 0.0
    %2037 = vmatprep.subr.mxu0 0.0
    %2038 = vmatpush1.msra.mxu0 0.0
    %2039 = vmatprep.subr.mxu0 0.0
    %2040 = vmatpush1.msra.mxu0 0.0
    %2041 = vmatprep.subr.mxu0 0.0
    %2042 = vmatpush1.msra.mxu0 0.0
    %2043 = vmatprep.subr.mxu0 0.0
    %2044 = vmatpush1.msra.mxu0 0.0
    %2045 = vmatprep.subr.mxu0 0.0
    %2046 = vmatpush1.msra.mxu0 0.0
    %2047 = vmatprep.mubr.f32.mxu0 0.0
    %2048 = vmatmul.mubr.f32.gmra.mrb[0].mxu0 %v1889
    %v2049 = vpop.f32.mrb[0].mxu0
    %v2050 = vadd.f32 %v1966, %v2049
    %v2051 = vpop.f32.mrb[0].mxu0
    %v2052 = vadd.f32 %v1970, %v2051
    %2053 = vmatprep.mubr.f32.mxu0 0.0
    %2054 = vmatmul.mubr.f32.gmra.mrb[0].mxu0 %v1890
    %v2055 = vpop.f32.mrb[0].mxu0
    %v2056 = vadd.f32 %v1966, %v2055
    %v2057 = vpop.f32.mrb[0].mxu0
    %v2058 = vadd.f32 %v1970, %v2057
    %2059 = vmatprep.mubr.f32.mxu0 0.0
    %2060 = vmatmul.mubr.f32.gmra.mrb[0].mxu0 %v1891
    %v2061 = vpop.f32.mrb[0].mxu0
    %v2062 = vadd.f32 %v1966, %v2061
    %v2063 = vpop.f32.mrb[0].mxu0
    %v2064 = vadd.f32 %v1970, %v2063
    %2065 = vmatprep.mubr.f32.mxu0 0.0
    %2066 = vmatmul.mubr.f32.gmra.mrb[0].mxu0 %v1892
    %v2067 = vpop.f32.mrb[0].mxu0
    %v2068 = vadd.f32 %v1966, %v2067
    %v2069 = vpop.f32.mrb[0].mxu0
    %v2070 = vadd.f32 %v1970, %v2069
    %2071 = vmatprep.mubr.f32.mxu0 0.0
    %2072 = vmatmul.mubr.f32.gmra.mrb[0].mxu0 %v1893
    %v2073 = vpop.f32.mrb[0].mxu0
    %v2074 = vadd.f32 %v1966, %v2073
    %v2075 = vpop.f32.mrb[0].mxu0
    %v2076 = vadd.f32 %v1970, %v2075
    %2077 = vmatprep.mubr.f32.mxu0 0.0
    %2078 = vmatmul.mubr.f32.gmra.mrb[0].mxu0 %v1894
    %v2079 = vpop.f32.mrb[0].mxu0
    %v2080 = vadd.f32 %v1966, %v2079
    %v2081 = vpop.f32.mrb[0].mxu0
    %v2082 = vadd.f32 %v1970, %v2081
    %2083 = vmatprep.mubr.f32.mxu0 0.0
    %2084 = vmatmul.mubr.f32.gmra.mrb[0].mxu0 %v1895
    %v2085 = vpop.f32.mrb[0].mxu0
    %v2086 = vadd.f32 %v1966, %v2085
    %v2087 = vpop.f32.mrb[0].mxu0
    %v2088 = vadd.f32 %v1970, %v2087
    %2089 = vmatprep.mubr.f32.mxu0 0.0
    %2090 = vmatmul.mubr.f32.gmra.mrb[0].mxu0 %v1896
    %v2091 = vpop.f32.mrb[0].mxu0
    %v2092 = vadd.f32 %v1966, %v2091
    %v2093 = vpop.f32.mrb[0].mxu0
    %v2094 = vadd.f32 %v1970, %v2093
    %2095 = vdwg.mxu0
    %2096 = vmatprep.subr.mxu0 %v1900
    %2097 = vmatpush1.msra.mxu0 %v1899
    %2098 = vmatprep.subr.mxu0 %v1904
    %2099 = vmatpush1.msra.mxu0 %v1903
    %2100 = vmatprep.subr.mxu0 %v1908
    %2101 = vmatpush1.msra.mxu0 %v1907
    %2102 = vmatprep.subr.mxu0 %v1912
    %2103 = vmatpush1.msra.mxu0 %v1911
    %2104 = vmatprep.subr.mxu0 %v1916
    %2105 = vmatpush1.msra.mxu0 %v1915
    %2106 = vmatprep.subr.mxu0 %v1920
    %2107 = vmatpush1.msra.mxu0 %v1919
    %2108 = vmatprep.subr.mxu0 %v1924
    %2109 = vmatpush1.msra.mxu0 %v1923
    %2110 = vmatprep.subr.mxu0 %v1928
    %2111 = vmatpush1.msra.mxu0 %v1927
    %2112 = vmatprep.subr.mxu0 %v1932
    %2113 = vmatpush1.msra.mxu0 %v1931
    %2114 = vmatprep.subr.mxu0 %v1936
    %2115 = vmatpush1.msra.mxu0 %v1935
    %2116 = vmatprep.subr.mxu0 %v1940
    %2117 = vmatpush1.msra.mxu0 %v1939
    %2118 = vmatprep.subr.mxu0 %v1944
    %2119 = vmatpush1.msra.mxu0 %v1943
    %2120 = vmatprep.subr.mxu0 %v1948
    %2121 = vmatpush1.msra.mxu0 %v1947
    %2122 = vmatprep.subr.mxu0 %v1952
    %2123 = vmatpush1.msra.mxu0 %v1951
    %2124 = vmatprep.subr.mxu0 %v1956
    %2125 = vmatpush1.msra.mxu0 %v1955
    %2126 = vmatprep.subr.mxu0 %v1960
    %2127 = vmatpush1.msra.mxu0 %v1959
    %2128 = vmatprep.subr.mxu0 0.0
    %2129 = vmatpush1.msra.mxu0 0.0
    %2130 = vmatprep.subr.mxu0 0.0
    %2131 = vmatpush1.msra.mxu0 0.0
    %2132 = vmatprep.subr.mxu0 0.0
    %2133 = vmatpush1.msra.mxu0 0.0
    %2134 = vmatprep.subr.mxu0 0.0
    %2135 = vmatpush1.msra.mxu0 0.0
    %2136 = vmatprep.subr.mxu0 0.0
    %2137 = vmatpush1.msra.mxu0 0.0
    %2138 = vmatprep.subr.mxu0 0.0
    %2139 = vmatpush1.msra.mxu0 0.0
    %2140 = vmatprep.subr.mxu0 0.0
    %2141 = vmatpush1.msra.mxu0 0.0
    %2142 = vmatprep.subr.mxu0 0.0
    %2143 = vmatpush1.msra.mxu0 0.0
    %2144 = vmatprep.subr.mxu0 0.0
    %2145 = vmatpush1.msra.mxu0 0.0
    %2146 = vmatprep.subr.mxu0 0.0
    %2147 = vmatpush1.msra.mxu0 0.0
    %2148 = vmatprep.subr.mxu0 0.0
    %2149 = vmatpush1.msra.mxu0 0.0
    %2150 = vmatprep.subr.mxu0 0.0
    %2151 = vmatpush1.msra.mxu0 0.0
    %2152 = vmatprep.subr.mxu0 0.0
    %2153 = vmatpush1.msra.mxu0 0.0
    %2154 = vmatprep.subr.mxu0 0.0
    %2155 = vmatpush1.msra.mxu0 0.0
    %2156 = vmatprep.subr.mxu0 0.0
    %2157 = vmatpush1.msra.mxu0 0.0
    %2158 = vmatprep.subr.mxu0 0.0
    %2159 = vmatpush1.msra.mxu0 0.0
    %2160 = vmatprep.mubr.f32.mxu0 0.0
    %2161 = vmatmul.mubr.f32.gmra.mrb[0].mxu0 %v1889
    %v2162 = vpop.f32.mrb[0].mxu0
    %v2163 = vadd.f32 %v1974, %v2162
    %v2164 = vpop.f32.mrb[0].mxu0
    %v2165 = vadd.f32 %v1978, %v2164
    %2166 = vmatprep.mubr.f32.mxu0 0.0
    %2167 = vmatmul.mubr.f32.gmra.mrb[0].mxu0 %v1890
    %v2168 = vpop.f32.mrb[0].mxu0
    %v2169 = vadd.f32 %v1974, %v2168
    %v2170 = vpop.f32.mrb[0].mxu0
    %v2171 = vadd.f32 %v1978, %v2170
    %2172 = vmatprep.mubr.f32.mxu0 0.0
    %2173 = vmatmul.mubr.f32.gmra.mrb[0].mxu0 %v1891
    %v2174 = vpop.f32.mrb[0].mxu0
    %v2175 = vadd.f32 %v1974, %v2174
    %v2176 = vpop.f32.mrb[0].mxu0
    %v2177 = vadd.f32 %v1978, %v2176
    %2178 = vmatprep.mubr.f32.mxu0 0.0
    %2179 = vmatmul.mubr.f32.gmra.mrb[0].mxu0 %v1892
    %v2180 = vpop.f32.mrb[0].mxu0
    %v2181 = vadd.f32 %v1974, %v2180
    %v2182 = vpop.f32.mrb[0].mxu0
    %v2183 = vadd.f32 %v1978, %v2182
    %2184 = vmatprep.mubr.f32.mxu0 0.0
    %2185 = vmatmul.mubr.f32.gmra.mrb[0].mxu0 %v1893
    %v2186 = vpop.f32.mrb[0].mxu0
    %v2187 = vadd.f32 %v1974, %v2186
    %v2188 = vpop.f32.mrb[0].mxu0
    %v2189 = vadd.f32 %v1978, %v2188
    %2190 = vmatprep.mubr.f32.mxu0 0.0
    %2191 = vmatmul.mubr.f32.gmra.mrb[0].mxu0 %v1894
    %v2192 = vpop.f32.mrb[0].mxu0
    %v2193 = vadd.f32 %v1974, %v2192
    %v2194 = vpop.f32.mrb[0].mxu0
    %v2195 = vadd.f32 %v1978, %v2194
    %2196 = vmatprep.mubr.f32.mxu0 0.0
    %2197 = vmatmul.mubr.f32.gmra.mrb[0].mxu0 %v1895
    %v2198 = vpop.f32.mrb[0].mxu0
    %v2199 = vadd.f32 %v1974, %v2198
    %v2200 = vpop.f32.mrb[0].mxu0
    %v2201 = vadd.f32 %v1978, %v2200
    %2202 = vmatprep.mubr.f32.mxu0 0.0
    %2203 = vmatmul.mubr.f32.gmra.mrb[0].mxu0 %v1896
    %v2204 = vpop.f32.mrb[0].mxu0
    %v2205 = vadd.f32 %v1974, %v2204
    %v2206 = vpop.f32.mrb[0].mxu0
    %v2207 = vadd.f32 %v1978, %v2206
    %2208 = vdwg.mxu0
    %2209 = vst [vmem:[#allocation3] sm:$0xff] %v2050
    %2210 = vst [vmem:[#allocation3 + $0x8] sm:$0xff] %v2052
    %2211 = vst [vmem:[#allocation3 + $0x10] sm:$0xff] %v2163
    %2212 = vst [vmem:[#allocation3 + $0x18] sm:$0xff] %v2165
    %2213 = vst [vmem:[#allocation3 + $0x20] sm:$0xff] %v2056
    %2214 = vst [vmem:[#allocation3 + $0x28] sm:$0xff] %v2058
    %2215 = vst [vmem:[#allocation3 + $0x30] sm:$0xff] %v2169
    %2216 = vst [vmem:[#allocation3 + $0x38] sm:$0xff] %v2171
    %2217 = vst [vmem:[#allocation3 + $0x40] sm:$0xff] %v2062
    %2218 = vst [vmem:[#allocation3 + $0x48] sm:$0xff] %v2064
    %2219 = vst [vmem:[#allocation3 + $0x50] sm:$0xff] %v2175
    %2220 = vst [vmem:[#allocation3 + $0x58] sm:$0xff] %v2177
    %2221 = vst [vmem:[#allocation3 + $0x60] sm:$0xff] %v2068
    %2222 = vst [vmem:[#allocation3 + $0x68] sm:$0xff] %v2070
    %2223 = vst [vmem:[#allocation3 + $0x70] sm:$0xff] %v2181
    %2224 = vst [vmem:[#allocation3 + $0x78] sm:$0xff] %v2183
    %2225 = vst [vmem:[#allocation3 + $0x80] sm:$0xff] %v2074
    %2226 = vst [vmem:[#allocation3 + $0x88] sm:$0xff] %v2076
    %2227 = vst [vmem:[#allocation3 + $0x90] sm:$0xff] %v2187
    %2228 = vst [vmem:[#allocation3 + $0x98] sm:$0xff] %v2189
    %2229 = vst [vmem:[#allocation3 + $0xa0] sm:$0xff] %v2080
    %2230 = vst [vmem:[#allocation3 + $0xa8] sm:$0xff] %v2082
    %2231 = vst [vmem:[#allocation3 + $0xb0] sm:$0xff] %v2193
    %2232 = vst [vmem:[#allocation3 + $0xb8] sm:$0xff] %v2195
    %2233 = vst [vmem:[#allocation3 + $0xc0] sm:$0xff] %v2086
    %2234 = vst [vmem:[#allocation3 + $0xc8] sm:$0xff] %v2088
    %2235 = vst [vmem:[#allocation3 + $0xd0] sm:$0xff] %v2199
    %2236 = vst [vmem:[#allocation3 + $0xd8] sm:$0xff] %v2201
    %2237 = vst [vmem:[#allocation3 + $0xe0] sm:$0xff] %v2092
    %2238 = vst [vmem:[#allocation3 + $0xe8] sm:$0xff] %v2094
    %2239 = vst [vmem:[#allocation3 + $0xf0] sm:$0xff] %v2205
    %2240 = vst [vmem:[#allocation3 + $0xf8] sm:$0xff] %v2207
    %v2241 = vld [vmem:[#allocation9] sm:$0xff]
    %v2242 = vld [vmem:[#allocation9 + $0x8] sm:$0xff]
    %v2243 = vld [vmem:[#allocation9 + $0x10] sm:$0xff]
    %v2244 = vld [vmem:[#allocation9 + $0x18] sm:$0xff]
    %v2245 = vld [vmem:[#allocation9 + $0x20] sm:$0xff]
    %v2246 = vld [vmem:[#allocation9 + $0x28] sm:$0xff]
    %v2247 = vld [vmem:[#allocation9 + $0x30] sm:$0xff]
    %v2248 = vld [vmem:[#allocation9 + $0x38] sm:$0xff]
    %v2249 = vld [vmem:[#allocation9 + $0x40] sm:$0xff]
    %v2250 = vld [vmem:[#allocation9 + $0x48] sm:$0xff]
    %v2251 = vld [vmem:[#allocation9 + $0x50] sm:$0xff]
    %v2252 = vld [vmem:[#allocation9 + $0x58] sm:$0xff]
    %v2253 = vld [vmem:[#allocation9 + $0x60] sm:$0xff]
    %v2254 = vld [vmem:[#allocation9 + $0x68] sm:$0xff]
    %v2255 = vld [vmem:[#allocation9 + $0x70] sm:$0xff]
    %v2256 = vld [vmem:[#allocation9 + $0x78] sm:$0xff]
    %v2257 = vld [vmem:[#allocation9 + $0x80] sm:$0xff]
    %v2258 = vld [vmem:[#allocation9 + $0x88] sm:$0xff]
    %v2259 = vld [vmem:[#allocation9 + $0x90] sm:$0xff]
    %v2260 = vld [vmem:[#allocation9 + $0x98] sm:$0xff]
    %v2261 = vld [vmem:[#allocation9 + $0xa0] sm:$0xff]
    %v2262 = vld [vmem:[#allocation9 + $0xa8] sm:$0xff]
    %v2263 = vld [vmem:[#allocation9 + $0xb0] sm:$0xff]
    %v2264 = vld [vmem:[#allocation9 + $0xb8] sm:$0xff]
    %v2265 = vld [vmem:[#allocation9 + $0xc0] sm:$0xff]
    %v2266 = vld [vmem:[#allocation9 + $0xc8] sm:$0xff]
    %v2267 = vld [vmem:[#allocation9 + $0xd0] sm:$0xff]
    %v2268 = vld [vmem:[#allocation9 + $0xd8] sm:$0xff]
    %v2269 = vld [vmem:[#allocation9 + $0xe0] sm:$0xff]
    %v2270 = vld [vmem:[#allocation9 + $0xe8] sm:$0xff]
    %v2271 = vld [vmem:[#allocation9 + $0xf0] sm:$0xff]
    %v2272 = vld [vmem:[#allocation9 + $0xf8] sm:$0xff]
    %v2273 = vld [vmem:[#allocation9 + $0x100] sm:$0xff]
    %v2274 = vld [vmem:[#allocation9 + $0x108] sm:$0xff]
    %v2275 = vld [vmem:[#allocation9 + $0x110] sm:$0xff]
    %v2276 = vld [vmem:[#allocation9 + $0x118] sm:$0xff]
    %v2277 = vld [vmem:[#allocation9 + $0x120] sm:$0xff]
    %v2278 = vld [vmem:[#allocation9 + $0x128] sm:$0xff]
    %v2279 = vld [vmem:[#allocation9 + $0x130] sm:$0xff]
    %v2280 = vld [vmem:[#allocation9 + $0x138] sm:$0xff]
    %v2281 = vld [vmem:[#allocation9 + $0x140] sm:$0xff]
    %v2282 = vld [vmem:[#allocation9 + $0x148] sm:$0xff]
    %v2283 = vld [vmem:[#allocation9 + $0x150] sm:$0xff]
    %v2284 = vld [vmem:[#allocation9 + $0x158] sm:$0xff]
    %v2285 = vld [vmem:[#allocation9 + $0x160] sm:$0xff]
    %v2286 = vld [vmem:[#allocation9 + $0x168] sm:$0xff]
    %v2287 = vld [vmem:[#allocation9 + $0x170] sm:$0xff]
    %v2288 = vld [vmem:[#allocation9 + $0x178] sm:$0xff]
    %v2289 = vld [vmem:[#allocation9 + $0x180] sm:$0xff]
    %v2290 = vld [vmem:[#allocation9 + $0x188] sm:$0xff]
    %v2291 = vld [vmem:[#allocation9 + $0x190] sm:$0xff]
    %v2292 = vld [vmem:[#allocation9 + $0x198] sm:$0xff]
    %v2293 = vld [vmem:[#allocation9 + $0x1a0] sm:$0xff]
    %v2294 = vld [vmem:[#allocation9 + $0x1a8] sm:$0xff]
    %v2295 = vld [vmem:[#allocation9 + $0x1b0] sm:$0xff]
    %v2296 = vld [vmem:[#allocation9 + $0x1b8] sm:$0xff]
    %v2297 = vld [vmem:[#allocation9 + $0x1c0] sm:$0xff]
    %v2298 = vld [vmem:[#allocation9 + $0x1c8] sm:$0xff]
    %v2299 = vld [vmem:[#allocation9 + $0x1d0] sm:$0xff]
    %v2300 = vld [vmem:[#allocation9 + $0x1d8] sm:$0xff]
    %v2301 = vld [vmem:[#allocation9 + $0x1e0] sm:$0xff]
    %v2302 = vld [vmem:[#allocation9 + $0x1e8] sm:$0xff]
    %v2303 = vld [vmem:[#allocation9 + $0x1f0] sm:$0xff]
    %v2304 = vld [vmem:[#allocation9 + $0x1f8] sm:$0xff]
    %v2305 = vld [vmem:[#allocation3] sm:$0xff]
    %v2306 = vld [vmem:[#allocation3 + $0x8] sm:$0xff]
    %v2307 = vld [vmem:[#allocation3 + $0x10] sm:$0xff]
    %v2308 = vld [vmem:[#allocation3 + $0x18] sm:$0xff]
    %2309 = vmatprep.subr.mxu0 %v2242
    %2310 = vmatpush1.msra.mxu0 %v2241
    %2311 = vmatprep.subr.mxu0 %v2246
    %2312 = vmatpush1.msra.mxu0 %v2245
    %2313 = vmatprep.subr.mxu0 %v2250
    %2314 = vmatpush1.msra.mxu0 %v2249
    %2315 = vmatprep.subr.mxu0 %v2254
    %2316 = vmatpush1.msra.mxu0 %v2253
    %2317 = vmatprep.subr.mxu0 %v2258
    %2318 = vmatpush1.msra.mxu0 %v2257
    %2319 = vmatprep.subr.mxu0 %v2262
    %2320 = vmatpush1.msra.mxu0 %v2261
    %2321 = vmatprep.subr.mxu0 %v2266
    %2322 = vmatpush1.msra.mxu0 %v2265
    %2323 = vmatprep.subr.mxu0 %v2270
    %2324 = vmatpush1.msra.mxu0 %v2269
    %2325 = vmatprep.subr.mxu0 %v2274
    %2326 = vmatpush1.msra.mxu0 %v2273
    %2327 = vmatprep.subr.mxu0 %v2278
    %2328 = vmatpush1.msra.mxu0 %v2277
    %2329 = vmatprep.subr.mxu0 %v2282
    %2330 = vmatpush1.msra.mxu0 %v2281
    %2331 = vmatprep.subr.mxu0 %v2286
    %2332 = vmatpush1.msra.mxu0 %v2285
    %2333 = vmatprep.subr.mxu0 %v2290
    %2334 = vmatpush1.msra.mxu0 %v2289
    %2335 = vmatprep.subr.mxu0 %v2294
    %2336 = vmatpush1.msra.mxu0 %v2293
    %2337 = vmatprep.subr.mxu0 %v2298
    %2338 = vmatpush1.msra.mxu0 %v2297
    %2339 = vmatprep.subr.mxu0 %v2302
    %2340 = vmatpush1.msra.mxu0 %v2301
    %2341 = vmatprep.subr.mxu0 0.0
    %2342 = vmatpush1.msra.mxu0 0.0
    %2343 = vmatprep.subr.mxu0 0.0
    %2344 = vmatpush1.msra.mxu0 0.0
    %2345 = vmatprep.subr.mxu0 0.0
    %2346 = vmatpush1.msra.mxu0 0.0
    %2347 = vmatprep.subr.mxu0 0.0
    %2348 = vmatpush1.msra.mxu0 0.0
    %2349 = vmatprep.subr.mxu0 0.0
    %2350 = vmatpush1.msra.mxu0 0.0
    %2351 = vmatprep.subr.mxu0 0.0
    %2352 = vmatpush1.msra.mxu0 0.0
    %2353 = vmatprep.subr.mxu0 0.0
    %2354 = vmatpush1.msra.mxu0 0.0
    %2355 = vmatprep.subr.mxu0 0.0
    %2356 = vmatpush1.msra.mxu0 0.0
    %2357 = vmatprep.subr.mxu0 0.0
    %2358 = vmatpush1.msra.mxu0 0.0
    %2359 = vmatprep.subr.mxu0 0.0
    %2360 = vmatpush1.msra.mxu0 0.0
    %2361 = vmatprep.subr.mxu0 0.0
    %2362 = vmatpush1.msra.mxu0 0.0
    %2363 = vmatprep.subr.mxu0 0.0
    %2364 = vmatpush1.msra.mxu0 0.0
    %2365 = vmatprep.subr.mxu0 0.0
    %2366 = vmatpush1.msra.mxu0 0.0
    %2367 = vmatprep.subr.mxu0 0.0
    %2368 = vmatpush1.msra.mxu0 0.0
    %2369 = vmatprep.subr.mxu0 0.0
    %2370 = vmatpush1.msra.mxu0 0.0
    %2371 = vmatprep.subr.mxu0 0.0
    %2372 = vmatpush1.msra.mxu0 0.0
    %2373 = vmatprep.mubr.f32.mxu0 0.0
    %2374 = vmatmul.mubr.f32.gmra.mrb[0].mxu0 0.0
    %v2375 = vpop.f32.mrb[0].mxu0
    %v2376 = vadd.f32 0.0, %v2375
    %v2377 = vpop.f32.mrb[0].mxu0
    %v2378 = vadd.f32 0.0, %v2377
    %2379 = vdwg.mxu0
    %2380 = vmatprep.subr.mxu0 %v2244
    %2381 = vmatpush1.msra.mxu0 %v2243
    %2382 = vmatprep.subr.mxu0 %v2248
    %2383 = vmatpush1.msra.mxu0 %v2247
    %2384 = vmatprep.subr.mxu0 %v2252
    %2385 = vmatpush1.msra.mxu0 %v2251
    %2386 = vmatprep.subr.mxu0 %v2256
    %2387 = vmatpush1.msra.mxu0 %v2255
    %2388 = vmatprep.subr.mxu0 %v2260
    %2389 = vmatpush1.msra.mxu0 %v2259
    %2390 = vmatprep.subr.mxu0 %v2264
    %2391 = vmatpush1.msra.mxu0 %v2263
    %2392 = vmatprep.subr.mxu0 %v2268
    %2393 = vmatpush1.msra.mxu0 %v2267
    %2394 = vmatprep.subr.mxu0 %v2272
    %2395 = vmatpush1.msra.mxu0 %v2271
    %2396 = vmatprep.subr.mxu0 %v2276
    %2397 = vmatpush1.msra.mxu0 %v2275
    %2398 = vmatprep.subr.mxu0 %v2280
    %2399 = vmatpush1.msra.mxu0 %v2279
    %2400 = vmatprep.subr.mxu0 %v2284
    %2401 = vmatpush1.msra.mxu0 %v2283
    %2402 = vmatprep.subr.mxu0 %v2288
    %2403 = vmatpush1.msra.mxu0 %v2287
    %2404 = vmatprep.subr.mxu0 %v2292
    %2405 = vmatpush1.msra.mxu0 %v2291
    %2406 = vmatprep.subr.mxu0 %v2296
    %2407 = vmatpush1.msra.mxu0 %v2295
    %2408 = vmatprep.subr.mxu0 %v2300
    %2409 = vmatpush1.msra.mxu0 %v2299
    %2410 = vmatprep.subr.mxu0 %v2304
    %2411 = vmatpush1.msra.mxu0 %v2303
    %2412 = vmatprep.subr.mxu0 0.0
    %2413 = vmatpush1.msra.mxu0 0.0
    %2414 = vmatprep.subr.mxu0 0.0
    %2415 = vmatpush1.msra.mxu0 0.0
    %2416 = vmatprep.subr.mxu0 0.0
    %2417 = vmatpush1.msra.mxu0 0.0
    %2418 = vmatprep.subr.mxu0 0.0
    %2419 = vmatpush1.msra.mxu0 0.0
    %2420 = vmatprep.subr.mxu0 0.0
    %2421 = vmatpush1.msra.mxu0 0.0
    %2422 = vmatprep.subr.mxu0 0.0
    %2423 = vmatpush1.msra.mxu0 0.0
    %2424 = vmatprep.subr.mxu0 0.0
    %2425 = vmatpush1.msra.mxu0 0.0
    %2426 = vmatprep.subr.mxu0 0.0
    %2427 = vmatpush1.msra.mxu0 0.0
    %2428 = vmatprep.subr.mxu0 0.0
    %2429 = vmatpush1.msra.mxu0 0.0
    %2430 = vmatprep.subr.mxu0 0.0
    %2431 = vmatpush1.msra.mxu0 0.0
    %2432 = vmatprep.subr.mxu0 0.0
    %2433 = vmatpush1.msra.mxu0 0.0
    %2434 = vmatprep.subr.mxu0 0.0
    %2435 = vmatpush1.msra.mxu0 0.0
    %2436 = vmatprep.subr.mxu0 0.0
    %2437 = vmatpush1.msra.mxu0 0.0
    %2438 = vmatprep.subr.mxu0 0.0
    %2439 = vmatpush1.msra.mxu0 0.0
    %2440 = vmatprep.subr.mxu0 0.0
    %2441 = vmatpush1.msra.mxu0 0.0
    %2442 = vmatprep.subr.mxu0 0.0
    %2443 = vmatpush1.msra.mxu0 0.0
    %2444 = vmatprep.mubr.f32.mxu0 0.0
    %2445 = vmatmul.mubr.f32.gmra.mrb[0].mxu0 0.0
    %v2446 = vpop.f32.mrb[0].mxu0
    %v2447 = vadd.f32 0.0, %v2446
    %v2448 = vpop.f32.mrb[0].mxu0
    %v2449 = vadd.f32 0.0, %v2448
    %2450 = vdwg.mxu0
    %v2451 = vadd.f32 %v2305, %v2376
    %v2452 = vadd.f32 %v2306, %v2378
    %v2453 = vadd.f32 %v2307, %v2447
    %v2454 = vadd.f32 %v2308, %v2449
    %v2455 = vxor.u32 %v2451, 2147483648
    %v2456 = vmul.f32 %v2455, 1.442695
    %v2457 = vpow.pop %v2456
    %v2458 = vadd.f32 %v2457, 1.0
    %v2459 = vrcp.pop %v2458
    %v2460 = vmul.f32 1.0, %v2459
    %v2461 = vxor.u32 %v2452, 2147483648
    %v2462 = vmul.f32 %v2461, 1.442695
    %v2463 = vpow.pop %v2462
    %v2464 = vadd.f32 %v2463, 1.0
    %v2465 = vrcp.pop %v2464
    %v2466 = vmul.f32 1.0, %v2465
    %v2467 = vtanh.pop %v2453
    %v2468 = vxor.u32 %v2454, 2147483648
    %v2469 = vmul.f32 %v2468, 1.442695
    %v2470 = vpow.pop %v2469
    %v2471 = vadd.f32 %v2470, 1.0
    %v2472 = vrcp.pop %v2471
    %v2473 = vmul.f32 1.0, %v2472
    %v2474 = vmul.f32 %v2466, 0.0
    %v2475 = vmul.f32 %v2460, %v2467
    %v2476 = vadd.f32 %v2474, %v2475
    %v2477 = vtanh.pop %v2476
    %v2478 = vmul.f32 %v2473, %v2477
    %v2479 = vld [vmem:[#allocation3 + $0x20] sm:$0xff]
    %v2480 = vld [vmem:[#allocation3 + $0x28] sm:$0xff]
    %v2481 = vld [vmem:[#allocation3 + $0x30] sm:$0xff]
    %v2482 = vld [vmem:[#allocation3 + $0x38] sm:$0xff]
    %2483 = vmatprep.subr.mxu0 %v2242
    %2484 = vmatpush1.msra.mxu0 %v2241
    %2485 = vmatprep.subr.mxu0 %v2246
    %2486 = vmatpush1.msra.mxu0 %v2245
    %2487 = vmatprep.subr.mxu0 %v2250
    %2488 = vmatpush1.msra.mxu0 %v2249
    %2489 = vmatprep.subr.mxu0 %v2254
    %2490 = vmatpush1.msra.mxu0 %v2253
    %2491 = vmatprep.subr.mxu0 %v2258
    %2492 = vmatpush1.msra.mxu0 %v2257
    %2493 = vmatprep.subr.mxu0 %v2262
    %2494 = vmatpush1.msra.mxu0 %v2261
    %2495 = vmatprep.subr.mxu0 %v2266
    %2496 = vmatpush1.msra.mxu0 %v2265
    %2497 = vmatprep.subr.mxu0 %v2270
    %2498 = vmatpush1.msra.mxu0 %v2269
    %2499 = vmatprep.subr.mxu0 %v2274
    %2500 = vmatpush1.msra.mxu0 %v2273
    %2501 = vmatprep.subr.mxu0 %v2278
    %2502 = vmatpush1.msra.mxu0 %v2277
    %2503 = vmatprep.subr.mxu0 %v2282
    %2504 = vmatpush1.msra.mxu0 %v2281
    %2505 = vmatprep.subr.mxu0 %v2286
    %2506 = vmatpush1.msra.mxu0 %v2285
    %2507 = vmatprep.subr.mxu0 %v2290
    %2508 = vmatpush1.msra.mxu0 %v2289
    %2509 = vmatprep.subr.mxu0 %v2294
    %2510 = vmatpush1.msra.mxu0 %v2293
    %2511 = vmatprep.subr.mxu0 %v2298
    %2512 = vmatpush1.msra.mxu0 %v2297
    %2513 = vmatprep.subr.mxu0 %v2302
    %2514 = vmatpush1.msra.mxu0 %v2301
    %2515 = vmatprep.subr.mxu0 0.0
    %2516 = vmatpush1.msra.mxu0 0.0
    %2517 = vmatprep.subr.mxu0 0.0
    %2518 = vmatpush1.msra.mxu0 0.0
    %2519 = vmatprep.subr.mxu0 0.0
    %2520 = vmatpush1.msra.mxu0 0.0
    %2521 = vmatprep.subr.mxu0 0.0
    %2522 = vmatpush1.msra.mxu0 0.0
    %2523 = vmatprep.subr.mxu0 0.0
    %2524 = vmatpush1.msra.mxu0 0.0
    %2525 = vmatprep.subr.mxu0 0.0
    %2526 = vmatpush1.msra.mxu0 0.0
    %2527 = vmatprep.subr.mxu0 0.0
    %2528 = vmatpush1.msra.mxu0 0.0
    %2529 = vmatprep.subr.mxu0 0.0
    %2530 = vmatpush1.msra.mxu0 0.0
    %2531 = vmatprep.subr.mxu0 0.0
    %2532 = vmatpush1.msra.mxu0 0.0
    %2533 = vmatprep.subr.mxu0 0.0
    %2534 = vmatpush1.msra.mxu0 0.0
    %2535 = vmatprep.subr.mxu0 0.0
    %2536 = vmatpush1.msra.mxu0 0.0
    %2537 = vmatprep.subr.mxu0 0.0
    %2538 = vmatpush1.msra.mxu0 0.0
    %2539 = vmatprep.subr.mxu0 0.0
    %2540 = vmatpush1.msra.mxu0 0.0
    %2541 = vmatprep.subr.mxu0 0.0
    %2542 = vmatpush1.msra.mxu0 0.0
    %2543 = vmatprep.subr.mxu0 0.0
    %2544 = vmatpush1.msra.mxu0 0.0
    %2545 = vmatprep.subr.mxu0 0.0
    %2546 = vmatpush1.msra.mxu0 0.0
    %2547 = vmatprep.mubr.f32.mxu0 0.0
    %2548 = vmatmul.mubr.f32.gmra.mrb[0].mxu0 %v2478
    %v2549 = vpop.f32.mrb[0].mxu0
    %v2550 = vadd.f32 0.0, %v2549
    %v2551 = vpop.f32.mrb[0].mxu0
    %v2552 = vadd.f32 0.0, %v2551
    %2553 = vdwg.mxu0
    %2554 = vmatprep.subr.mxu0 %v2244
    %2555 = vmatpush1.msra.mxu0 %v2243
    %2556 = vmatprep.subr.mxu0 %v2248
    %2557 = vmatpush1.msra.mxu0 %v2247
    %2558 = vmatprep.subr.mxu0 %v2252
    %2559 = vmatpush1.msra.mxu0 %v2251
    %2560 = vmatprep.subr.mxu0 %v2256
    %2561 = vmatpush1.msra.mxu0 %v2255
    %2562 = vmatprep.subr.mxu0 %v2260
    %2563 = vmatpush1.msra.mxu0 %v2259
    %2564 = vmatprep.subr.mxu0 %v2264
    %2565 = vmatpush1.msra.mxu0 %v2263
    %2566 = vmatprep.subr.mxu0 %v2268
    %2567 = vmatpush1.msra.mxu0 %v2267
    %2568 = vmatprep.subr.mxu0 %v2272
    %2569 = vmatpush1.msra.mxu0 %v2271
    %2570 = vmatprep.subr.mxu0 %v2276
    %2571 = vmatpush1.msra.mxu0 %v2275
    %2572 = vmatprep.subr.mxu0 %v2280
    %2573 = vmatpush1.msra.mxu0 %v2279
    %2574 = vmatprep.subr.mxu0 %v2284
    %2575 = vmatpush1.msra.mxu0 %v2283
    %2576 = vmatprep.subr.mxu0 %v2288
    %2577 = vmatpush1.msra.mxu0 %v2287
    %2578 = vmatprep.subr.mxu0 %v2292
    %2579 = vmatpush1.msra.mxu0 %v2291
    %2580 = vmatprep.subr.mxu0 %v2296
    %2581 = vmatpush1.msra.mxu0 %v2295
    %2582 = vmatprep.subr.mxu0 %v2300
    %2583 = vmatpush1.msra.mxu0 %v2299
    %2584 = vmatprep.subr.mxu0 %v2304
    %2585 = vmatpush1.msra.mxu0 %v2303
    %2586 = vmatprep.subr.mxu0 0.0
    %2587 = vmatpush1.msra.mxu0 0.0
    %2588 = vmatprep.subr.mxu0 0.0
    %2589 = vmatpush1.msra.mxu0 0.0
    %2590 = vmatprep.subr.mxu0 0.0
    %2591 = vmatpush1.msra.mxu0 0.0
    %2592 = vmatprep.subr.mxu0 0.0
    %2593 = vmatpush1.msra.mxu0 0.0
    %2594 = vmatprep.subr.mxu0 0.0
    %2595 = vmatpush1.msra.mxu0 0.0
    %2596 = vmatprep.subr.mxu0 0.0
    %2597 = vmatpush1.msra.mxu0 0.0
    %2598 = vmatprep.subr.mxu0 0.0
    %2599 = vmatpush1.msra.mxu0 0.0
    %2600 = vmatprep.subr.mxu0 0.0
    %2601 = vmatpush1.msra.mxu0 0.0
    %2602 = vmatprep.subr.mxu0 0.0
    %2603 = vmatpush1.msra.mxu0 0.0
    %2604 = vmatprep.subr.mxu0 0.0
    %2605 = vmatpush1.msra.mxu0 0.0
    %2606 = vmatprep.subr.mxu0 0.0
    %2607 = vmatpush1.msra.mxu0 0.0
    %2608 = vmatprep.subr.mxu0 0.0
    %2609 = vmatpush1.msra.mxu0 0.0
    %2610 = vmatprep.subr.mxu0 0.0
    %2611 = vmatpush1.msra.mxu0 0.0
    %2612 = vmatprep.subr.mxu0 0.0
    %2613 = vmatpush1.msra.mxu0 0.0
    %2614 = vmatprep.subr.mxu0 0.0
    %2615 = vmatpush1.msra.mxu0 0.0
    %2616 = vmatprep.subr.mxu0 0.0
    %2617 = vmatpush1.msra.mxu0 0.0
    %2618 = vmatprep.mubr.f32.mxu0 0.0
    %2619 = vmatmul.mubr.f32.gmra.mrb[0].mxu0 %v2478
    %v2620 = vpop.f32.mrb[0].mxu0
    %v2621 = vadd.f32 0.0, %v2620
    %v2622 = vpop.f32.mrb[0].mxu0
    %v2623 = vadd.f32 0.0, %v2622
    %2624 = vdwg.mxu0
    %v2625 = vadd.f32 %v2479, %v2550
    %v2626 = vadd.f32 %v2480, %v2552
    %v2627 = vadd.f32 %v2481, %v2621
    %v2628 = vadd.f32 %v2482, %v2623
    %v2629 = vxor.u32 %v2625, 2147483648
    %v2630 = vmul.f32 %v2629, 1.442695
    %v2631 = vpow.pop %v2630
    %v2632 = vadd.f32 %v2631, 1.0
    %v2633 = vrcp.pop %v2632
    %v2634 = vmul.f32 1.0, %v2633
    %v2635 = vxor.u32 %v2626, 2147483648
    %v2636 = vmul.f32 %v2635, 1.442695
    %v2637 = vpow.pop %v2636
    %v2638 = vadd.f32 %v2637, 1.0
    %v2639 = vrcp.pop %v2638
    %v2640 = vmul.f32 1.0, %v2639
    %v2641 = vtanh.pop %v2627
    %v2642 = vxor.u32 %v2628, 2147483648
    %v2643 = vmul.f32 %v2642, 1.442695
    %v2644 = vpow.pop %v2643
    %v2645 = vadd.f32 %v2644, 1.0
    %v2646 = vrcp.pop %v2645
    %v2647 = vmul.f32 1.0, %v2646
    %v2648 = vmul.f32 %v2640, %v2476
    %v2649 = vmul.f32 %v2634, %v2641
    %v2650 = vadd.f32 %v2648, %v2649
    %v2651 = vtanh.pop %v2650
    %v2652 = vmul.f32 %v2647, %v2651
    %v2653 = vld [vmem:[#allocation3 + $0x40] sm:$0xff]
    %v2654 = vld [vmem:[#allocation3 + $0x48] sm:$0xff]
    %v2655 = vld [vmem:[#allocation3 + $0x50] sm:$0xff]
    %v2656 = vld [vmem:[#allocation3 + $0x58] sm:$0xff]
    %2657 = vmatprep.subr.mxu0 %v2242
    %2658 = vmatpush1.msra.mxu0 %v2241
    %2659 = vmatprep.subr.mxu0 %v2246
    %2660 = vmatpush1.msra.mxu0 %v2245
    %2661 = vmatprep.subr.mxu0 %v2250
    %2662 = vmatpush1.msra.mxu0 %v2249
    %2663 = vmatprep.subr.mxu0 %v2254
    %2664 = vmatpush1.msra.mxu0 %v2253
    %2665 = vmatprep.subr.mxu0 %v2258
    %2666 = vmatpush1.msra.mxu0 %v2257
    %2667 = vmatprep.subr.mxu0 %v2262
    %2668 = vmatpush1.msra.mxu0 %v2261
    %2669 = vmatprep.subr.mxu0 %v2266
    %2670 = vmatpush1.msra.mxu0 %v2265
    %2671 = vmatprep.subr.mxu0 %v2270
    %2672 = vmatpush1.msra.mxu0 %v2269
    %2673 = vmatprep.subr.mxu0 %v2274
    %2674 = vmatpush1.msra.mxu0 %v2273
    %2675 = vmatprep.subr.mxu0 %v2278
    %2676 = vmatpush1.msra.mxu0 %v2277
    %2677 = vmatprep.subr.mxu0 %v2282
    %2678 = vmatpush1.msra.mxu0 %v2281
    %2679 = vmatprep.subr.mxu0 %v2286
    %2680 = vmatpush1.msra.mxu0 %v2285
    %2681 = vmatprep.subr.mxu0 %v2290
    %2682 = vmatpush1.msra.mxu0 %v2289
    %2683 = vmatprep.subr.mxu0 %v2294
    %2684 = vmatpush1.msra.mxu0 %v2293
    %2685 = vmatprep.subr.mxu0 %v2298
    %2686 = vmatpush1.msra.mxu0 %v2297
    %2687 = vmatprep.subr.mxu0 %v2302
    %2688 = vmatpush1.msra.mxu0 %v2301
    %2689 = vmatprep.subr.mxu0 0.0
    %2690 = vmatpush1.msra.mxu0 0.0
    %2691 = vmatprep.subr.mxu0 0.0
    %2692 = vmatpush1.msra.mxu0 0.0
    %2693 = vmatprep.subr.mxu0 0.0
    %2694 = vmatpush1.msra.mxu0 0.0
    %2695 = vmatprep.subr.mxu0 0.0
    %2696 = vmatpush1.msra.mxu0 0.0
    %2697 = vmatprep.subr.mxu0 0.0
    %2698 = vmatpush1.msra.mxu0 0.0
    %2699 = vmatprep.subr.mxu0 0.0
    %2700 = vmatpush1.msra.mxu0 0.0
    %2701 = vmatprep.subr.mxu0 0.0
    %2702 = vmatpush1.msra.mxu0 0.0
    %2703 = vmatprep.subr.mxu0 0.0
    %2704 = vmatpush1.msra.mxu0 0.0
    %2705 = vmatprep.subr.mxu0 0.0
    %2706 = vmatpush1.msra.mxu0 0.0
    %2707 = vmatprep.subr.mxu0 0.0
    %2708 = vmatpush1.msra.mxu0 0.0
    %2709 = vmatprep.subr.mxu0 0.0
    %2710 = vmatpush1.msra.mxu0 0.0
    %2711 = vmatprep.subr.mxu0 0.0
    %2712 = vmatpush1.msra.mxu0 0.0
    %2713 = vmatprep.subr.mxu0 0.0
    %2714 = vmatpush1.msra.mxu0 0.0
    %2715 = vmatprep.subr.mxu0 0.0
    %2716 = vmatpush1.msra.mxu0 0.0
    %2717 = vmatprep.subr.mxu0 0.0
    %2718 = vmatpush1.msra.mxu0 0.0
    %2719 = vmatprep.subr.mxu0 0.0
    %2720 = vmatpush1.msra.mxu0 0.0
    %2721 = vmatprep.mubr.f32.mxu0 0.0
    %2722 = vmatmul.mubr.f32.gmra.mrb[0].mxu0 %v2652
    %v2723 = vpop.f32.mrb[0].mxu0
    %v2724 = vadd.f32 0.0, %v2723
    %v2725 = vpop.f32.mrb[0].mxu0
    %v2726 = vadd.f32 0.0, %v2725
    %2727 = vdwg.mxu0
    %2728 = vmatprep.subr.mxu0 %v2244
    %2729 = vmatpush1.msra.mxu0 %v2243
    %2730 = vmatprep.subr.mxu0 %v2248
    %2731 = vmatpush1.msra.mxu0 %v2247
    %2732 = vmatprep.subr.mxu0 %v2252
    %2733 = vmatpush1.msra.mxu0 %v2251
    %2734 = vmatprep.subr.mxu0 %v2256
    %2735 = vmatpush1.msra.mxu0 %v2255
    %2736 = vmatprep.subr.mxu0 %v2260
    %2737 = vmatpush1.msra.mxu0 %v2259
    %2738 = vmatprep.subr.mxu0 %v2264
    %2739 = vmatpush1.msra.mxu0 %v2263
    %2740 = vmatprep.subr.mxu0 %v2268
    %2741 = vmatpush1.msra.mxu0 %v2267
    %2742 = vmatprep.subr.mxu0 %v2272
    %2743 = vmatpush1.msra.mxu0 %v2271
    %2744 = vmatprep.subr.mxu0 %v2276
    %2745 = vmatpush1.msra.mxu0 %v2275
    %2746 = vmatprep.subr.mxu0 %v2280
    %2747 = vmatpush1.msra.mxu0 %v2279
    %2748 = vmatprep.subr.mxu0 %v2284
    %2749 = vmatpush1.msra.mxu0 %v2283
    %2750 = vmatprep.subr.mxu0 %v2288
    %2751 = vmatpush1.msra.mxu0 %v2287
    %2752 = vmatprep.subr.mxu0 %v2292
    %2753 = vmatpush1.msra.mxu0 %v2291
    %2754 = vmatprep.subr.mxu0 %v2296
    %2755 = vmatpush1.msra.mxu0 %v2295
    %2756 = vmatprep.subr.mxu0 %v2300
    %2757 = vmatpush1.msra.mxu0 %v2299
    %2758 = vmatprep.subr.mxu0 %v2304
    %2759 = vmatpush1.msra.mxu0 %v2303
    %2760 = vmatprep.subr.mxu0 0.0
    %2761 = vmatpush1.msra.mxu0 0.0
    %2762 = vmatprep.subr.mxu0 0.0
    %2763 = vmatpush1.msra.mxu0 0.0
    %2764 = vmatprep.subr.mxu0 0.0
    %2765 = vmatpush1.msra.mxu0 0.0
    %2766 = vmatprep.subr.mxu0 0.0
    %2767 = vmatpush1.msra.mxu0 0.0
    %2768 = vmatprep.subr.mxu0 0.0
    %2769 = vmatpush1.msra.mxu0 0.0
    %2770 = vmatprep.subr.mxu0 0.0
    %2771 = vmatpush1.msra.mxu0 0.0
    %2772 = vmatprep.subr.mxu0 0.0
    %2773 = vmatpush1.msra.mxu0 0.0
    %2774 = vmatprep.subr.mxu0 0.0
    %2775 = vmatpush1.msra.mxu0 0.0
    %2776 = vmatprep.subr.mxu0 0.0
    %2777 = vmatpush1.msra.mxu0 0.0
    %2778 = vmatprep.subr.mxu0 0.0
    %2779 = vmatpush1.msra.mxu0 0.0
    %2780 = vmatprep.subr.mxu0 0.0
    %2781 = vmatpush1.msra.mxu0 0.0
    %2782 = vmatprep.subr.mxu0 0.0
    %2783 = vmatpush1.msra.mxu0 0.0
    %2784 = vmatprep.subr.mxu0 0.0
    %2785 = vmatpush1.msra.mxu0 0.0
    %2786 = vmatprep.subr.mxu0 0.0
    %2787 = vmatpush1.msra.mxu0 0.0
    %2788 = vmatprep.subr.mxu0 0.0
    %2789 = vmatpush1.msra.mxu0 0.0
    %2790 = vmatprep.subr.mxu0 0.0
    %2791 = vmatpush1.msra.mxu0 0.0
    %2792 = vmatprep.mubr.f32.mxu0 0.0
    %2793 = vmatmul.mubr.f32.gmra.mrb[0].mxu0 %v2652
    %v2794 = vpop.f32.mrb[0].mxu0
    %v2795 = vadd.f32 0.0, %v2794
    %v2796 = vpop.f32.mrb[0].mxu0
    %v2797 = vadd.f32 0.0, %v2796
    %2798 = vdwg.mxu0
    %v2799 = vadd.f32 %v2653, %v2724
    %v2800 = vadd.f32 %v2654, %v2726
    %v2801 = vadd.f32 %v2655, %v2795
    %v2802 = vadd.f32 %v2656, %v2797
    %v2803 = vxor.u32 %v2799, 2147483648
    %v2804 = vmul.f32 %v2803, 1.442695
    %v2805 = vpow.pop %v2804
    %v2806 = vadd.f32 %v2805, 1.0
    %v2807 = vrcp.pop %v2806
    %v2808 = vmul.f32 1.0, %v2807
    %v2809 = vxor.u32 %v2800, 2147483648
    %v2810 = vmul.f32 %v2809, 1.442695
    %v2811 = vpow.pop %v2810
    %v2812 = vadd.f32 %v2811, 1.0
    %v2813 = vrcp.pop %v2812
    %v2814 = vmul.f32 1.0, %v2813
    %v2815 = vtanh.pop %v2801
    %v2816 = vxor.u32 %v2802, 2147483648
    %v2817 = vmul.f32 %v2816, 1.442695
    %v2818 = vpow.pop %v2817
    %v2819 = vadd.f32 %v2818, 1.0
    %v2820 = vrcp.pop %v2819
    %v2821 = vmul.f32 1.0, %v2820
    %v2822 = vmul.f32 %v2814, %v2650
    %v2823 = vmul.f32 %v2808, %v2815
    %v2824 = vadd.f32 %v2822, %v2823
    %v2825 = vtanh.pop %v2824
    %v2826 = vmul.f32 %v2821, %v2825
    %v2827 = vld [vmem:[#allocation3 + $0x60] sm:$0xff]
    %v2828 = vld [vmem:[#allocation3 + $0x68] sm:$0xff]
    %v2829 = vld [vmem:[#allocation3 + $0x70] sm:$0xff]
    %v2830 = vld [vmem:[#allocation3 + $0x78] sm:$0xff]
    %2831 = vmatprep.subr.mxu0 %v2242
    %2832 = vmatpush1.msra.mxu0 %v2241
    %2833 = vmatprep.subr.mxu0 %v2246
    %2834 = vmatpush1.msra.mxu0 %v2245
    %2835 = vmatprep.subr.mxu0 %v2250
    %2836 = vmatpush1.msra.mxu0 %v2249
    %2837 = vmatprep.subr.mxu0 %v2254
    %2838 = vmatpush1.msra.mxu0 %v2253
    %2839 = vmatprep.subr.mxu0 %v2258
    %2840 = vmatpush1.msra.mxu0 %v2257
    %2841 = vmatprep.subr.mxu0 %v2262
    %2842 = vmatpush1.msra.mxu0 %v2261
    %2843 = vmatprep.subr.mxu0 %v2266
    %2844 = vmatpush1.msra.mxu0 %v2265
    %2845 = vmatprep.subr.mxu0 %v2270
    %2846 = vmatpush1.msra.mxu0 %v2269
    %2847 = vmatprep.subr.mxu0 %v2274
    %2848 = vmatpush1.msra.mxu0 %v2273
    %2849 = vmatprep.subr.mxu0 %v2278
    %2850 = vmatpush1.msra.mxu0 %v2277
    %2851 = vmatprep.subr.mxu0 %v2282
    %2852 = vmatpush1.msra.mxu0 %v2281
    %2853 = vmatprep.subr.mxu0 %v2286
    %2854 = vmatpush1.msra.mxu0 %v2285
    %2855 = vmatprep.subr.mxu0 %v2290
    %2856 = vmatpush1.msra.mxu0 %v2289
    %2857 = vmatprep.subr.mxu0 %v2294
    %2858 = vmatpush1.msra.mxu0 %v2293
    %2859 = vmatprep.subr.mxu0 %v2298
    %2860 = vmatpush1.msra.mxu0 %v2297
    %2861 = vmatprep.subr.mxu0 %v2302
    %2862 = vmatpush1.msra.mxu0 %v2301
    %2863 = vmatprep.subr.mxu0 0.0
    %2864 = vmatpush1.msra.mxu0 0.0
    %2865 = vmatprep.subr.mxu0 0.0
    %2866 = vmatpush1.msra.mxu0 0.0
    %2867 = vmatprep.subr.mxu0 0.0
    %2868 = vmatpush1.msra.mxu0 0.0
    %2869 = vmatprep.subr.mxu0 0.0
    %2870 = vmatpush1.msra.mxu0 0.0
    %2871 = vmatprep.subr.mxu0 0.0
    %2872 = vmatpush1.msra.mxu0 0.0
    %2873 = vmatprep.subr.mxu0 0.0
    %2874 = vmatpush1.msra.mxu0 0.0
    %2875 = vmatprep.subr.mxu0 0.0
    %2876 = vmatpush1.msra.mxu0 0.0
    %2877 = vmatprep.subr.mxu0 0.0
    %2878 = vmatpush1.msra.mxu0 0.0
    %2879 = vmatprep.subr.mxu0 0.0
    %2880 = vmatpush1.msra.mxu0 0.0
    %2881 = vmatprep.subr.mxu0 0.0
    %2882 = vmatpush1.msra.mxu0 0.0
    %2883 = vmatprep.subr.mxu0 0.0
    %2884 = vmatpush1.msra.mxu0 0.0
    %2885 = vmatprep.subr.mxu0 0.0
    %2886 = vmatpush1.msra.mxu0 0.0
    %2887 = vmatprep.subr.mxu0 0.0
    %2888 = vmatpush1.msra.mxu0 0.0
    %2889 = vmatprep.subr.mxu0 0.0
    %2890 = vmatpush1.msra.mxu0 0.0
    %2891 = vmatprep.subr.mxu0 0.0
    %2892 = vmatpush1.msra.mxu0 0.0
    %2893 = vmatprep.subr.mxu0 0.0
    %2894 = vmatpush1.msra.mxu0 0.0
    %2895 = vmatprep.mubr.f32.mxu0 0.0
    %2896 = vmatmul.mubr.f32.gmra.mrb[0].mxu0 %v2826
    %v2897 = vpop.f32.mrb[0].mxu0
    %v2898 = vadd.f32 0.0, %v2897
    %v2899 = vpop.f32.mrb[0].mxu0
    %v2900 = vadd.f32 0.0, %v2899
    %2901 = vdwg.mxu0
    %2902 = vmatprep.subr.mxu0 %v2244
    %2903 = vmatpush1.msra.mxu0 %v2243
    %2904 = vmatprep.subr.mxu0 %v2248
    %2905 = vmatpush1.msra.mxu0 %v2247
    %2906 = vmatprep.subr.mxu0 %v2252
    %2907 = vmatpush1.msra.mxu0 %v2251
    %2908 = vmatprep.subr.mxu0 %v2256
    %2909 = vmatpush1.msra.mxu0 %v2255
    %2910 = vmatprep.subr.mxu0 %v2260
    %2911 = vmatpush1.msra.mxu0 %v2259
    %2912 = vmatprep.subr.mxu0 %v2264
    %2913 = vmatpush1.msra.mxu0 %v2263
    %2914 = vmatprep.subr.mxu0 %v2268
    %2915 = vmatpush1.msra.mxu0 %v2267
    %2916 = vmatprep.subr.mxu0 %v2272
    %2917 = vmatpush1.msra.mxu0 %v2271
    %2918 = vmatprep.subr.mxu0 %v2276
    %2919 = vmatpush1.msra.mxu0 %v2275
    %2920 = vmatprep.subr.mxu0 %v2280
    %2921 = vmatpush1.msra.mxu0 %v2279
    %2922 = vmatprep.subr.mxu0 %v2284
    %2923 = vmatpush1.msra.mxu0 %v2283
    %2924 = vmatprep.subr.mxu0 %v2288
    %2925 = vmatpush1.msra.mxu0 %v2287
    %2926 = vmatprep.subr.mxu0 %v2292
    %2927 = vmatpush1.msra.mxu0 %v2291
    %2928 = vmatprep.subr.mxu0 %v2296
    %2929 = vmatpush1.msra.mxu0 %v2295
    %2930 = vmatprep.subr.mxu0 %v2300
    %2931 = vmatpush1.msra.mxu0 %v2299
    %2932 = vmatprep.subr.mxu0 %v2304
    %2933 = vmatpush1.msra.mxu0 %v2303
    %2934 = vmatprep.subr.mxu0 0.0
    %2935 = vmatpush1.msra.mxu0 0.0
    %2936 = vmatprep.subr.mxu0 0.0
    %2937 = vmatpush1.msra.mxu0 0.0
    %2938 = vmatprep.subr.mxu0 0.0
    %2939 = vmatpush1.msra.mxu0 0.0
    %2940 = vmatprep.subr.mxu0 0.0
    %2941 = vmatpush1.msra.mxu0 0.0
    %2942 = vmatprep.subr.mxu0 0.0
    %2943 = vmatpush1.msra.mxu0 0.0
    %2944 = vmatprep.subr.mxu0 0.0
    %2945 = vmatpush1.msra.mxu0 0.0
    %2946 = vmatprep.subr.mxu0 0.0
    %2947 = vmatpush1.msra.mxu0 0.0
    %2948 = vmatprep.subr.mxu0 0.0
    %2949 = vmatpush1.msra.mxu0 0.0
    %2950 = vmatprep.subr.mxu0 0.0
    %2951 = vmatpush1.msra.mxu0 0.0
    %2952 = vmatprep.subr.mxu0 0.0
    %2953 = vmatpush1.msra.mxu0 0.0
    %2954 = vmatprep.subr.mxu0 0.0
    %2955 = vmatpush1.msra.mxu0 0.0
    %2956 = vmatprep.subr.mxu0 0.0
    %2957 = vmatpush1.msra.mxu0 0.0
    %2958 = vmatprep.subr.mxu0 0.0
    %2959 = vmatpush1.msra.mxu0 0.0
    %2960 = vmatprep.subr.mxu0 0.0
    %2961 = vmatpush1.msra.mxu0 0.0
    %2962 = vmatprep.subr.mxu0 0.0
    %2963 = vmatpush1.msra.mxu0 0.0
    %2964 = vmatprep.subr.mxu0 0.0
    %2965 = vmatpush1.msra.mxu0 0.0
    %2966 = vmatprep.mubr.f32.mxu0 0.0
    %2967 = vmatmul.mubr.f32.gmra.mrb[0].mxu0 %v2826
    %v2968 = vpop.f32.mrb[0].mxu0
    %v2969 = vadd.f32 0.0, %v2968
    %v2970 = vpop.f32.mrb[0].mxu0
    %v2971 = vadd.f32 0.0, %v2970
    %2972 = vdwg.mxu0
    %v2973 = vadd.f32 %v2827, %v2898
    %v2974 = vadd.f32 %v2828, %v2900
    %v2975 = vadd.f32 %v2829, %v2969
    %v2976 = vadd.f32 %v2830, %v2971
    %v2977 = vxor.u32 %v2973, 2147483648
    %v2978 = vmul.f32 %v2977, 1.442695
    %v2979 = vpow.pop %v2978
    %v2980 = vadd.f32 %v2979, 1.0
    %v2981 = vrcp.pop %v2980
    %v2982 = vmul.f32 1.0, %v2981
    %v2983 = vxor.u32 %v2974, 2147483648
    %v2984 = vmul.f32 %v2983, 1.442695
    %v2985 = vpow.pop %v2984
    %v2986 = vadd.f32 %v2985, 1.0
    %v2987 = vrcp.pop %v2986
    %v2988 = vmul.f32 1.0, %v2987
    %v2989 = vtanh.pop %v2975
    %v2990 = vxor.u32 %v2976, 2147483648
    %v2991 = vmul.f32 %v2990, 1.442695
    %v2992 = vpow.pop %v2991
    %v2993 = vadd.f32 %v2992, 1.0
    %v2994 = vrcp.pop %v2993
    %v2995 = vmul.f32 1.0, %v2994
    %v2996 = vmul.f32 %v2988, %v2824
    %v2997 = vmul.f32 %v2982, %v2989
    %v2998 = vadd.f32 %v2996, %v2997
    %v2999 = vtanh.pop %v2998
    %v3000 = vmul.f32 %v2995, %v2999
    %v3001 = vld [vmem:[#allocation3 + $0x80] sm:$0xff]
    %v3002 = vld [vmem:[#allocation3 + $0x88] sm:$0xff]
    %v3003 = vld [vmem:[#allocation3 + $0x90] sm:$0xff]
    %v3004 = vld [vmem:[#allocation3 + $0x98] sm:$0xff]
    %3005 = vmatprep.subr.mxu0 %v2242
    %3006 = vmatpush1.msra.mxu0 %v2241
    %3007 = vmatprep.subr.mxu0 %v2246
    %3008 = vmatpush1.msra.mxu0 %v2245
    %3009 = vmatprep.subr.mxu0 %v2250
    %3010 = vmatpush1.msra.mxu0 %v2249
    %3011 = vmatprep.subr.mxu0 %v2254
    %3012 = vmatpush1.msra.mxu0 %v2253
    %3013 = vmatprep.subr.mxu0 %v2258
    %3014 = vmatpush1.msra.mxu0 %v2257
    %3015 = vmatprep.subr.mxu0 %v2262
    %3016 = vmatpush1.msra.mxu0 %v2261
    %3017 = vmatprep.subr.mxu0 %v2266
    %3018 = vmatpush1.msra.mxu0 %v2265
    %3019 = vmatprep.subr.mxu0 %v2270
    %3020 = vmatpush1.msra.mxu0 %v2269
    %3021 = vmatprep.subr.mxu0 %v2274
    %3022 = vmatpush1.msra.mxu0 %v2273
    %3023 = vmatprep.subr.mxu0 %v2278
    %3024 = vmatpush1.msra.mxu0 %v2277
    %3025 = vmatprep.subr.mxu0 %v2282
    %3026 = vmatpush1.msra.mxu0 %v2281
    %3027 = vmatprep.subr.mxu0 %v2286
    %3028 = vmatpush1.msra.mxu0 %v2285
    %3029 = vmatprep.subr.mxu0 %v2290
    %3030 = vmatpush1.msra.mxu0 %v2289
    %3031 = vmatprep.subr.mxu0 %v2294
    %3032 = vmatpush1.msra.mxu0 %v2293
    %3033 = vmatprep.subr.mxu0 %v2298
    %3034 = vmatpush1.msra.mxu0 %v2297
    %3035 = vmatprep.subr.mxu0 %v2302
    %3036 = vmatpush1.msra.mxu0 %v2301
    %3037 = vmatprep.subr.mxu0 0.0
    %3038 = vmatpush1.msra.mxu0 0.0
    %3039 = vmatprep.subr.mxu0 0.0
    %3040 = vmatpush1.msra.mxu0 0.0
    %3041 = vmatprep.subr.mxu0 0.0
    %3042 = vmatpush1.msra.mxu0 0.0
    %3043 = vmatprep.subr.mxu0 0.0
    %3044 = vmatpush1.msra.mxu0 0.0
    %3045 = vmatprep.subr.mxu0 0.0
    %3046 = vmatpush1.msra.mxu0 0.0
    %3047 = vmatprep.subr.mxu0 0.0
    %3048 = vmatpush1.msra.mxu0 0.0
    %3049 = vmatprep.subr.mxu0 0.0
    %3050 = vmatpush1.msra.mxu0 0.0
    %3051 = vmatprep.subr.mxu0 0.0
    %3052 = vmatpush1.msra.mxu0 0.0
    %3053 = vmatprep.subr.mxu0 0.0
    %3054 = vmatpush1.msra.mxu0 0.0
    %3055 = vmatprep.subr.mxu0 0.0
    %3056 = vmatpush1.msra.mxu0 0.0
    %3057 = vmatprep.subr.mxu0 0.0
    %3058 = vmatpush1.msra.mxu0 0.0
    %3059 = vmatprep.subr.mxu0 0.0
    %3060 = vmatpush1.msra.mxu0 0.0
    %3061 = vmatprep.subr.mxu0 0.0
    %3062 = vmatpush1.msra.mxu0 0.0
    %3063 = vmatprep.subr.mxu0 0.0
    %3064 = vmatpush1.msra.mxu0 0.0
    %3065 = vmatprep.subr.mxu0 0.0
    %3066 = vmatpush1.msra.mxu0 0.0
    %3067 = vmatprep.subr.mxu0 0.0
    %3068 = vmatpush1.msra.mxu0 0.0
    %3069 = vmatprep.mubr.f32.mxu0 0.0
    %3070 = vmatmul.mubr.f32.gmra.mrb[0].mxu0 %v3000
    %v3071 = vpop.f32.mrb[0].mxu0
    %v3072 = vadd.f32 0.0, %v3071
    %v3073 = vpop.f32.mrb[0].mxu0
    %v3074 = vadd.f32 0.0, %v3073
    %3075 = vdwg.mxu0
    %3076 = vmatprep.subr.mxu0 %v2244
    %3077 = vmatpush1.msra.mxu0 %v2243
    %3078 = vmatprep.subr.mxu0 %v2248
    %3079 = vmatpush1.msra.mxu0 %v2247
    %3080 = vmatprep.subr.mxu0 %v2252
    %3081 = vmatpush1.msra.mxu0 %v2251
    %3082 = vmatprep.subr.mxu0 %v2256
    %3083 = vmatpush1.msra.mxu0 %v2255
    %3084 = vmatprep.subr.mxu0 %v2260
    %3085 = vmatpush1.msra.mxu0 %v2259
    %3086 = vmatprep.subr.mxu0 %v2264
    %3087 = vmatpush1.msra.mxu0 %v2263
    %3088 = vmatprep.subr.mxu0 %v2268
    %3089 = vmatpush1.msra.mxu0 %v2267
    %3090 = vmatprep.subr.mxu0 %v2272
    %3091 = vmatpush1.msra.mxu0 %v2271
    %3092 = vmatprep.subr.mxu0 %v2276
    %3093 = vmatpush1.msra.mxu0 %v2275
    %3094 = vmatprep.subr.mxu0 %v2280
    %3095 = vmatpush1.msra.mxu0 %v2279
    %3096 = vmatprep.subr.mxu0 %v2284
    %3097 = vmatpush1.msra.mxu0 %v2283
    %3098 = vmatprep.subr.mxu0 %v2288
    %3099 = vmatpush1.msra.mxu0 %v2287
    %3100 = vmatprep.subr.mxu0 %v2292
    %3101 = vmatpush1.msra.mxu0 %v2291
    %3102 = vmatprep.subr.mxu0 %v2296
    %3103 = vmatpush1.msra.mxu0 %v2295
    %3104 = vmatprep.subr.mxu0 %v2300
    %3105 = vmatpush1.msra.mxu0 %v2299
    %3106 = vmatprep.subr.mxu0 %v2304
    %3107 = vmatpush1.msra.mxu0 %v2303
    %3108 = vmatprep.subr.mxu0 0.0
    %3109 = vmatpush1.msra.mxu0 0.0
    %3110 = vmatprep.subr.mxu0 0.0
    %3111 = vmatpush1.msra.mxu0 0.0
    %3112 = vmatprep.subr.mxu0 0.0
    %3113 = vmatpush1.msra.mxu0 0.0
    %3114 = vmatprep.subr.mxu0 0.0
    %3115 = vmatpush1.msra.mxu0 0.0
    %3116 = vmatprep.subr.mxu0 0.0
    %3117 = vmatpush1.msra.mxu0 0.0
    %3118 = vmatprep.subr.mxu0 0.0
    %3119 = vmatpush1.msra.mxu0 0.0
    %3120 = vmatprep.subr.mxu0 0.0
    %3121 = vmatpush1.msra.mxu0 0.0
    %3122 = vmatprep.subr.mxu0 0.0
    %3123 = vmatpush1.msra.mxu0 0.0
    %3124 = vmatprep.subr.mxu0 0.0
    %3125 = vmatpush1.msra.mxu0 0.0
    %3126 = vmatprep.subr.mxu0 0.0
    %3127 = vmatpush1.msra.mxu0 0.0
    %3128 = vmatprep.subr.mxu0 0.0
    %3129 = vmatpush1.msra.mxu0 0.0
    %3130 = vmatprep.subr.mxu0 0.0
    %3131 = vmatpush1.msra.mxu0 0.0
    %3132 = vmatprep.subr.mxu0 0.0
    %3133 = vmatpush1.msra.mxu0 0.0
    %3134 = vmatprep.subr.mxu0 0.0
    %3135 = vmatpush1.msra.mxu0 0.0
    %3136 = vmatprep.subr.mxu0 0.0
    %3137 = vmatpush1.msra.mxu0 0.0
    %3138 = vmatprep.subr.mxu0 0.0
    %3139 = vmatpush1.msra.mxu0 0.0
    %3140 = vmatprep.mubr.f32.mxu0 0.0
    %3141 = vmatmul.mubr.f32.gmra.mrb[0].mxu0 %v3000
    %v3142 = vpop.f32.mrb[0].mxu0
    %v3143 = vadd.f32 0.0, %v3142
    %v3144 = vpop.f32.mrb[0].mxu0
    %v3145 = vadd.f32 0.0, %v3144
    %3146 = vdwg.mxu0
    %v3147 = vadd.f32 %v3001, %v3072
    %v3148 = vadd.f32 %v3002, %v3074
    %v3149 = vadd.f32 %v3003, %v3143
    %v3150 = vadd.f32 %v3004, %v3145
    %v3151 = vxor.u32 %v3147, 2147483648
    %v3152 = vmul.f32 %v3151, 1.442695
    %v3153 = vpow.pop %v3152
    %v3154 = vadd.f32 %v3153, 1.0
    %v3155 = vrcp.pop %v3154
    %v3156 = vmul.f32 1.0, %v3155
    %v3157 = vxor.u32 %v3148, 2147483648
    %v3158 = vmul.f32 %v3157, 1.442695
    %v3159 = vpow.pop %v3158
    %v3160 = vadd.f32 %v3159, 1.0
    %v3161 = vrcp.pop %v3160
    %v3162 = vmul.f32 1.0, %v3161
    %v3163 = vtanh.pop %v3149
    %v3164 = vxor.u32 %v3150, 2147483648
    %v3165 = vmul.f32 %v3164, 1.442695
    %v3166 = vpow.pop %v3165
    %v3167 = vadd.f32 %v3166, 1.0
    %v3168 = vrcp.pop %v3167
    %v3169 = vmul.f32 1.0, %v3168
    %v3170 = vmul.f32 %v3162, %v2998
    %v3171 = vmul.f32 %v3156, %v3163
    %v3172 = vadd.f32 %v3170, %v3171
    %v3173 = vtanh.pop %v3172
    %v3174 = vmul.f32 %v3169, %v3173
    %v3175 = vld [vmem:[#allocation3 + $0xa0] sm:$0xff]
    %v3176 = vld [vmem:[#allocation3 + $0xa8] sm:$0xff]
    %v3177 = vld [vmem:[#allocation3 + $0xb0] sm:$0xff]
    %v3178 = vld [vmem:[#allocation3 + $0xb8] sm:$0xff]
    %3179 = vmatprep.subr.mxu0 %v2242
    %3180 = vmatpush1.msra.mxu0 %v2241
    %3181 = vmatprep.subr.mxu0 %v2246
    %3182 = vmatpush1.msra.mxu0 %v2245
    %3183 = vmatprep.subr.mxu0 %v2250
    %3184 = vmatpush1.msra.mxu0 %v2249
    %3185 = vmatprep.subr.mxu0 %v2254
    %3186 = vmatpush1.msra.mxu0 %v2253
    %3187 = vmatprep.subr.mxu0 %v2258
    %3188 = vmatpush1.msra.mxu0 %v2257
    %3189 = vmatprep.subr.mxu0 %v2262
    %3190 = vmatpush1.msra.mxu0 %v2261
    %3191 = vmatprep.subr.mxu0 %v2266
    %3192 = vmatpush1.msra.mxu0 %v2265
    %3193 = vmatprep.subr.mxu0 %v2270
    %3194 = vmatpush1.msra.mxu0 %v2269
    %3195 = vmatprep.subr.mxu0 %v2274
    %3196 = vmatpush1.msra.mxu0 %v2273
    %3197 = vmatprep.subr.mxu0 %v2278
    %3198 = vmatpush1.msra.mxu0 %v2277
    %3199 = vmatprep.subr.mxu0 %v2282
    %3200 = vmatpush1.msra.mxu0 %v2281
    %3201 = vmatprep.subr.mxu0 %v2286
    %3202 = vmatpush1.msra.mxu0 %v2285
    %3203 = vmatprep.subr.mxu0 %v2290
    %3204 = vmatpush1.msra.mxu0 %v2289
    %3205 = vmatprep.subr.mxu0 %v2294
    %3206 = vmatpush1.msra.mxu0 %v2293
    %3207 = vmatprep.subr.mxu0 %v2298
    %3208 = vmatpush1.msra.mxu0 %v2297
    %3209 = vmatprep.subr.mxu0 %v2302
    %3210 = vmatpush1.msra.mxu0 %v2301
    %3211 = vmatprep.subr.mxu0 0.0
    %3212 = vmatpush1.msra.mxu0 0.0
    %3213 = vmatprep.subr.mxu0 0.0
    %3214 = vmatpush1.msra.mxu0 0.0
    %3215 = vmatprep.subr.mxu0 0.0
    %3216 = vmatpush1.msra.mxu0 0.0
    %3217 = vmatprep.subr.mxu0 0.0
    %3218 = vmatpush1.msra.mxu0 0.0
    %3219 = vmatprep.subr.mxu0 0.0
    %3220 = vmatpush1.msra.mxu0 0.0
    %3221 = vmatprep.subr.mxu0 0.0
    %3222 = vmatpush1.msra.mxu0 0.0
    %3223 = vmatprep.subr.mxu0 0.0
    %3224 = vmatpush1.msra.mxu0 0.0
    %3225 = vmatprep.subr.mxu0 0.0
    %3226 = vmatpush1.msra.mxu0 0.0
    %3227 = vmatprep.subr.mxu0 0.0
    %3228 = vmatpush1.msra.mxu0 0.0
    %3229 = vmatprep.subr.mxu0 0.0
    %3230 = vmatpush1.msra.mxu0 0.0
    %3231 = vmatprep.subr.mxu0 0.0
    %3232 = vmatpush1.msra.mxu0 0.0
    %3233 = vmatprep.subr.mxu0 0.0
    %3234 = vmatpush1.msra.mxu0 0.0
    %3235 = vmatprep.subr.mxu0 0.0
    %3236 = vmatpush1.msra.mxu0 0.0
    %3237 = vmatprep.subr.mxu0 0.0
    %3238 = vmatpush1.msra.mxu0 0.0
    %3239 = vmatprep.subr.mxu0 0.0
    %3240 = vmatpush1.msra.mxu0 0.0
    %3241 = vmatprep.subr.mxu0 0.0
    %3242 = vmatpush1.msra.mxu0 0.0
    %3243 = vmatprep.mubr.f32.mxu0 0.0
    %3244 = vmatmul.mubr.f32.gmra.mrb[0].mxu0 %v3174
    %v3245 = vpop.f32.mrb[0].mxu0
    %v3246 = vadd.f32 0.0, %v3245
    %v3247 = vpop.f32.mrb[0].mxu0
    %v3248 = vadd.f32 0.0, %v3247
    %3249 = vdwg.mxu0
    %3250 = vmatprep.subr.mxu0 %v2244
    %3251 = vmatpush1.msra.mxu0 %v2243
    %3252 = vmatprep.subr.mxu0 %v2248
    %3253 = vmatpush1.msra.mxu0 %v2247
    %3254 = vmatprep.subr.mxu0 %v2252
    %3255 = vmatpush1.msra.mxu0 %v2251
    %3256 = vmatprep.subr.mxu0 %v2256
    %3257 = vmatpush1.msra.mxu0 %v2255
    %3258 = vmatprep.subr.mxu0 %v2260
    %3259 = vmatpush1.msra.mxu0 %v2259
    %3260 = vmatprep.subr.mxu0 %v2264
    %3261 = vmatpush1.msra.mxu0 %v2263
    %3262 = vmatprep.subr.mxu0 %v2268
    %3263 = vmatpush1.msra.mxu0 %v2267
    %3264 = vmatprep.subr.mxu0 %v2272
    %3265 = vmatpush1.msra.mxu0 %v2271
    %3266 = vmatprep.subr.mxu0 %v2276
    %3267 = vmatpush1.msra.mxu0 %v2275
    %3268 = vmatprep.subr.mxu0 %v2280
    %3269 = vmatpush1.msra.mxu0 %v2279
    %3270 = vmatprep.subr.mxu0 %v2284
    %3271 = vmatpush1.msra.mxu0 %v2283
    %3272 = vmatprep.subr.mxu0 %v2288
    %3273 = vmatpush1.msra.mxu0 %v2287
    %3274 = vmatprep.subr.mxu0 %v2292
    %3275 = vmatpush1.msra.mxu0 %v2291
    %3276 = vmatprep.subr.mxu0 %v2296
    %3277 = vmatpush1.msra.mxu0 %v2295
    %3278 = vmatprep.subr.mxu0 %v2300
    %3279 = vmatpush1.msra.mxu0 %v2299
    %3280 = vmatprep.subr.mxu0 %v2304
    %3281 = vmatpush1.msra.mxu0 %v2303
    %3282 = vmatprep.subr.mxu0 0.0
    %3283 = vmatpush1.msra.mxu0 0.0
    %3284 = vmatprep.subr.mxu0 0.0
    %3285 = vmatpush1.msra.mxu0 0.0
    %3286 = vmatprep.subr.mxu0 0.0
    %3287 = vmatpush1.msra.mxu0 0.0
    %3288 = vmatprep.subr.mxu0 0.0
    %3289 = vmatpush1.msra.mxu0 0.0
    %3290 = vmatprep.subr.mxu0 0.0
    %3291 = vmatpush1.msra.mxu0 0.0
    %3292 = vmatprep.subr.mxu0 0.0
    %3293 = vmatpush1.msra.mxu0 0.0
    %3294 = vmatprep.subr.mxu0 0.0
    %3295 = vmatpush1.msra.mxu0 0.0
    %3296 = vmatprep.subr.mxu0 0.0
    %3297 = vmatpush1.msra.mxu0 0.0
    %3298 = vmatprep.subr.mxu0 0.0
    %3299 = vmatpush1.msra.mxu0 0.0
    %3300 = vmatprep.subr.mxu0 0.0
    %3301 = vmatpush1.msra.mxu0 0.0
    %3302 = vmatprep.subr.mxu0 0.0
    %3303 = vmatpush1.msra.mxu0 0.0
    %3304 = vmatprep.subr.mxu0 0.0
    %3305 = vmatpush1.msra.mxu0 0.0
    %3306 = vmatprep.subr.mxu0 0.0
    %3307 = vmatpush1.msra.mxu0 0.0
    %3308 = vmatprep.subr.mxu0 0.0
    %3309 = vmatpush1.msra.mxu0 0.0
    %3310 = vmatprep.subr.mxu0 0.0
    %3311 = vmatpush1.msra.mxu0 0.0
    %3312 = vmatprep.subr.mxu0 0.0
    %3313 = vmatpush1.msra.mxu0 0.0
    %3314 = vmatprep.mubr.f32.mxu0 0.0
    %3315 = vmatmul.mubr.f32.gmra.mrb[0].mxu0 %v3174
    %v3316 = vpop.f32.mrb[0].mxu0
    %v3317 = vadd.f32 0.0, %v3316
    %v3318 = vpop.f32.mrb[0].mxu0
    %v3319 = vadd.f32 0.0, %v3318
    %3320 = vdwg.mxu0
    %v3321 = vadd.f32 %v3175, %v3246
    %v3322 = vadd.f32 %v3176, %v3248
    %v3323 = vadd.f32 %v3177, %v3317
    %v3324 = vadd.f32 %v3178, %v3319
    %v3325 = vxor.u32 %v3321, 2147483648
    %v3326 = vmul.f32 %v3325, 1.442695
    %v3327 = vpow.pop %v3326
    %v3328 = vadd.f32 %v3327, 1.0
    %v3329 = vrcp.pop %v3328
    %v3330 = vmul.f32 1.0, %v3329
    %v3331 = vxor.u32 %v3322, 2147483648
    %v3332 = vmul.f32 %v3331, 1.442695
    %v3333 = vpow.pop %v3332
    %v3334 = vadd.f32 %v3333, 1.0
    %v3335 = vrcp.pop %v3334
    %v3336 = vmul.f32 1.0, %v3335
    %v3337 = vtanh.pop %v3323
    %v3338 = vxor.u32 %v3324, 2147483648
    %v3339 = vmul.f32 %v3338, 1.442695
    %v3340 = vpow.pop %v3339
    %v3341 = vadd.f32 %v3340, 1.0
    %v3342 = vrcp.pop %v3341
    %v3343 = vmul.f32 1.0, %v3342
    %v3344 = vmul.f32 %v3336, %v3172
    %v3345 = vmul.f32 %v3330, %v3337
    %v3346 = vadd.f32 %v3344, %v3345
    %v3347 = vtanh.pop %v3346
    %v3348 = vmul.f32 %v3343, %v3347
    %v3349 = vld [vmem:[#allocation3 + $0xc0] sm:$0xff]
    %v3350 = vld [vmem:[#allocation3 + $0xc8] sm:$0xff]
    %v3351 = vld [vmem:[#allocation3 + $0xd0] sm:$0xff]
    %v3352 = vld [vmem:[#allocation3 + $0xd8] sm:$0xff]
    %3353 = vmatprep.subr.mxu0 %v2242
    %3354 = vmatpush1.msra.mxu0 %v2241
    %3355 = vmatprep.subr.mxu0 %v2246
    %3356 = vmatpush1.msra.mxu0 %v2245
    %3357 = vmatprep.subr.mxu0 %v2250
    %3358 = vmatpush1.msra.mxu0 %v2249
    %3359 = vmatprep.subr.mxu0 %v2254
    %3360 = vmatpush1.msra.mxu0 %v2253
    %3361 = vmatprep.subr.mxu0 %v2258
    %3362 = vmatpush1.msra.mxu0 %v2257
    %3363 = vmatprep.subr.mxu0 %v2262
    %3364 = vmatpush1.msra.mxu0 %v2261
    %3365 = vmatprep.subr.mxu0 %v2266
    %3366 = vmatpush1.msra.mxu0 %v2265
    %3367 = vmatprep.subr.mxu0 %v2270
    %3368 = vmatpush1.msra.mxu0 %v2269
    %3369 = vmatprep.subr.mxu0 %v2274
    %3370 = vmatpush1.msra.mxu0 %v2273
    %3371 = vmatprep.subr.mxu0 %v2278
    %3372 = vmatpush1.msra.mxu0 %v2277
    %3373 = vmatprep.subr.mxu0 %v2282
    %3374 = vmatpush1.msra.mxu0 %v2281
    %3375 = vmatprep.subr.mxu0 %v2286
    %3376 = vmatpush1.msra.mxu0 %v2285
    %3377 = vmatprep.subr.mxu0 %v2290
    %3378 = vmatpush1.msra.mxu0 %v2289
    %3379 = vmatprep.subr.mxu0 %v2294
    %3380 = vmatpush1.msra.mxu0 %v2293
    %3381 = vmatprep.subr.mxu0 %v2298
    %3382 = vmatpush1.msra.mxu0 %v2297
    %3383 = vmatprep.subr.mxu0 %v2302
    %3384 = vmatpush1.msra.mxu0 %v2301
    %3385 = vmatprep.subr.mxu0 0.0
    %3386 = vmatpush1.msra.mxu0 0.0
    %3387 = vmatprep.subr.mxu0 0.0
    %3388 = vmatpush1.msra.mxu0 0.0
    %3389 = vmatprep.subr.mxu0 0.0
    %3390 = vmatpush1.msra.mxu0 0.0
    %3391 = vmatprep.subr.mxu0 0.0
    %3392 = vmatpush1.msra.mxu0 0.0
    %3393 = vmatprep.subr.mxu0 0.0
    %3394 = vmatpush1.msra.mxu0 0.0
    %3395 = vmatprep.subr.mxu0 0.0
    %3396 = vmatpush1.msra.mxu0 0.0
    %3397 = vmatprep.subr.mxu0 0.0
    %3398 = vmatpush1.msra.mxu0 0.0
    %3399 = vmatprep.subr.mxu0 0.0
    %3400 = vmatpush1.msra.mxu0 0.0
    %3401 = vmatprep.subr.mxu0 0.0
    %3402 = vmatpush1.msra.mxu0 0.0
    %3403 = vmatprep.subr.mxu0 0.0
    %3404 = vmatpush1.msra.mxu0 0.0
    %3405 = vmatprep.subr.mxu0 0.0
    %3406 = vmatpush1.msra.mxu0 0.0
    %3407 = vmatprep.subr.mxu0 0.0
    %3408 = vmatpush1.msra.mxu0 0.0
    %3409 = vmatprep.subr.mxu0 0.0
    %3410 = vmatpush1.msra.mxu0 0.0
    %3411 = vmatprep.subr.mxu0 0.0
    %3412 = vmatpush1.msra.mxu0 0.0
    %3413 = vmatprep.subr.mxu0 0.0
    %3414 = vmatpush1.msra.mxu0 0.0
    %3415 = vmatprep.subr.mxu0 0.0
    %3416 = vmatpush1.msra.mxu0 0.0
    %3417 = vmatprep.mubr.f32.mxu0 0.0
    %3418 = vmatmul.mubr.f32.gmra.mrb[0].mxu0 %v3348
    %v3419 = vpop.f32.mrb[0].mxu0
    %v3420 = vadd.f32 0.0, %v3419
    %v3421 = vpop.f32.mrb[0].mxu0
    %v3422 = vadd.f32 0.0, %v3421
    %3423 = vdwg.mxu0
    %3424 = vmatprep.subr.mxu0 %v2244
    %3425 = vmatpush1.msra.mxu0 %v2243
    %3426 = vmatprep.subr.mxu0 %v2248
    %3427 = vmatpush1.msra.mxu0 %v2247
    %3428 = vmatprep.subr.mxu0 %v2252
    %3429 = vmatpush1.msra.mxu0 %v2251
    %3430 = vmatprep.subr.mxu0 %v2256
    %3431 = vmatpush1.msra.mxu0 %v2255
    %3432 = vmatprep.subr.mxu0 %v2260
    %3433 = vmatpush1.msra.mxu0 %v2259
    %3434 = vmatprep.subr.mxu0 %v2264
    %3435 = vmatpush1.msra.mxu0 %v2263
    %3436 = vmatprep.subr.mxu0 %v2268
    %3437 = vmatpush1.msra.mxu0 %v2267
    %3438 = vmatprep.subr.mxu0 %v2272
    %3439 = vmatpush1.msra.mxu0 %v2271
    %3440 = vmatprep.subr.mxu0 %v2276
    %3441 = vmatpush1.msra.mxu0 %v2275
    %3442 = vmatprep.subr.mxu0 %v2280
    %3443 = vmatpush1.msra.mxu0 %v2279
    %3444 = vmatprep.subr.mxu0 %v2284
    %3445 = vmatpush1.msra.mxu0 %v2283
    %3446 = vmatprep.subr.mxu0 %v2288
    %3447 = vmatpush1.msra.mxu0 %v2287
    %3448 = vmatprep.subr.mxu0 %v2292
    %3449 = vmatpush1.msra.mxu0 %v2291
    %3450 = vmatprep.subr.mxu0 %v2296
    %3451 = vmatpush1.msra.mxu0 %v2295
    %3452 = vmatprep.subr.mxu0 %v2300
    %3453 = vmatpush1.msra.mxu0 %v2299
    %3454 = vmatprep.subr.mxu0 %v2304
    %3455 = vmatpush1.msra.mxu0 %v2303
    %3456 = vmatprep.subr.mxu0 0.0
    %3457 = vmatpush1.msra.mxu0 0.0
    %3458 = vmatprep.subr.mxu0 0.0
    %3459 = vmatpush1.msra.mxu0 0.0
    %3460 = vmatprep.subr.mxu0 0.0
    %3461 = vmatpush1.msra.mxu0 0.0
    %3462 = vmatprep.subr.mxu0 0.0
    %3463 = vmatpush1.msra.mxu0 0.0
    %3464 = vmatprep.subr.mxu0 0.0
    %3465 = vmatpush1.msra.mxu0 0.0
    %3466 = vmatprep.subr.mxu0 0.0
    %3467 = vmatpush1.msra.mxu0 0.0
    %3468 = vmatprep.subr.mxu0 0.0
    %3469 = vmatpush1.msra.mxu0 0.0
    %3470 = vmatprep.subr.mxu0 0.0
    %3471 = vmatpush1.msra.mxu0 0.0
    %3472 = vmatprep.subr.mxu0 0.0
    %3473 = vmatpush1.msra.mxu0 0.0
    %3474 = vmatprep.subr.mxu0 0.0
    %3475 = vmatpush1.msra.mxu0 0.0
    %3476 = vmatprep.subr.mxu0 0.0
    %3477 = vmatpush1.msra.mxu0 0.0
    %3478 = vmatprep.subr.mxu0 0.0
    %3479 = vmatpush1.msra.mxu0 0.0
    %3480 = vmatprep.subr.mxu0 0.0
    %3481 = vmatpush1.msra.mxu0 0.0
    %3482 = vmatprep.subr.mxu0 0.0
    %3483 = vmatpush1.msra.mxu0 0.0
    %3484 = vmatprep.subr.mxu0 0.0
    %3485 = vmatpush1.msra.mxu0 0.0
    %3486 = vmatprep.subr.mxu0 0.0
    %3487 = vmatpush1.msra.mxu0 0.0
    %3488 = vmatprep.mubr.f32.mxu0 0.0
    %3489 = vmatmul.mubr.f32.gmra.mrb[0].mxu0 %v3348
    %v3490 = vpop.f32.mrb[0].mxu0
    %v3491 = vadd.f32 0.0, %v3490
    %v3492 = vpop.f32.mrb[0].mxu0
    %v3493 = vadd.f32 0.0, %v3492
    %3494 = vdwg.mxu0
    %v3495 = vadd.f32 %v3349, %v3420
    %v3496 = vadd.f32 %v3350, %v3422
    %v3497 = vadd.f32 %v3351, %v3491
    %v3498 = vadd.f32 %v3352, %v3493
    %v3499 = vxor.u32 %v3495, 2147483648
    %v3500 = vmul.f32 %v3499, 1.442695
    %v3501 = vpow.pop %v3500
    %v3502 = vadd.f32 %v3501, 1.0
    %v3503 = vrcp.pop %v3502
    %v3504 = vmul.f32 1.0, %v3503
    %v3505 = vxor.u32 %v3496, 2147483648
    %v3506 = vmul.f32 %v3505, 1.442695
    %v3507 = vpow.pop %v3506
    %v3508 = vadd.f32 %v3507, 1.0
    %v3509 = vrcp.pop %v3508
    %v3510 = vmul.f32 1.0, %v3509
    %v3511 = vtanh.pop %v3497
    %v3512 = vxor.u32 %v3498, 2147483648
    %v3513 = vmul.f32 %v3512, 1.442695
    %v3514 = vpow.pop %v3513
    %v3515 = vadd.f32 %v3514, 1.0
    %v3516 = vrcp.pop %v3515
    %v3517 = vmul.f32 1.0, %v3516
    %v3518 = vmul.f32 %v3510, %v3346
    %v3519 = vmul.f32 %v3504, %v3511
    %v3520 = vadd.f32 %v3518, %v3519
    %v3521 = vtanh.pop %v3520
    %v3522 = vmul.f32 %v3517, %v3521
    %v3523 = vld [vmem:[#allocation3 + $0xe0] sm:$0xff]
    %v3524 = vld [vmem:[#allocation3 + $0xe8] sm:$0xff]
    %v3525 = vld [vmem:[#allocation3 + $0xf0] sm:$0xff]
    %v3526 = vld [vmem:[#allocation3 + $0xf8] sm:$0xff]
    %3527 = vmatprep.subr.mxu0 %v2242
    %3528 = vmatpush1.msra.mxu0 %v2241
    %3529 = vmatprep.subr.mxu0 %v2246
    %3530 = vmatpush1.msra.mxu0 %v2245
    %3531 = vmatprep.subr.mxu0 %v2250
    %3532 = vmatpush1.msra.mxu0 %v2249
    %3533 = vmatprep.subr.mxu0 %v2254
    %3534 = vmatpush1.msra.mxu0 %v2253
    %3535 = vmatprep.subr.mxu0 %v2258
    %3536 = vmatpush1.msra.mxu0 %v2257
    %3537 = vmatprep.subr.mxu0 %v2262
    %3538 = vmatpush1.msra.mxu0 %v2261
    %3539 = vmatprep.subr.mxu0 %v2266
    %3540 = vmatpush1.msra.mxu0 %v2265
    %3541 = vmatprep.subr.mxu0 %v2270
    %3542 = vmatpush1.msra.mxu0 %v2269
    %3543 = vmatprep.subr.mxu0 %v2274
    %3544 = vmatpush1.msra.mxu0 %v2273
    %3545 = vmatprep.subr.mxu0 %v2278
    %3546 = vmatpush1.msra.mxu0 %v2277
    %3547 = vmatprep.subr.mxu0 %v2282
    %3548 = vmatpush1.msra.mxu0 %v2281
    %3549 = vmatprep.subr.mxu0 %v2286
    %3550 = vmatpush1.msra.mxu0 %v2285
    %3551 = vmatprep.subr.mxu0 %v2290
    %3552 = vmatpush1.msra.mxu0 %v2289
    %3553 = vmatprep.subr.mxu0 %v2294
    %3554 = vmatpush1.msra.mxu0 %v2293
    %3555 = vmatprep.subr.mxu0 %v2298
    %3556 = vmatpush1.msra.mxu0 %v2297
    %3557 = vmatprep.subr.mxu0 %v2302
    %3558 = vmatpush1.msra.mxu0 %v2301
    %3559 = vmatprep.subr.mxu0 0.0
    %3560 = vmatpush1.msra.mxu0 0.0
    %3561 = vmatprep.subr.mxu0 0.0
    %3562 = vmatpush1.msra.mxu0 0.0
    %3563 = vmatprep.subr.mxu0 0.0
    %3564 = vmatpush1.msra.mxu0 0.0
    %3565 = vmatprep.subr.mxu0 0.0
    %3566 = vmatpush1.msra.mxu0 0.0
    %3567 = vmatprep.subr.mxu0 0.0
    %3568 = vmatpush1.msra.mxu0 0.0
    %3569 = vmatprep.subr.mxu0 0.0
    %3570 = vmatpush1.msra.mxu0 0.0
    %3571 = vmatprep.subr.mxu0 0.0
    %3572 = vmatpush1.msra.mxu0 0.0
    %3573 = vmatprep.subr.mxu0 0.0
    %3574 = vmatpush1.msra.mxu0 0.0
    %3575 = vmatprep.subr.mxu0 0.0
    %3576 = vmatpush1.msra.mxu0 0.0
    %3577 = vmatprep.subr.mxu0 0.0
    %3578 = vmatpush1.msra.mxu0 0.0
    %3579 = vmatprep.subr.mxu0 0.0
    %3580 = vmatpush1.msra.mxu0 0.0
    %3581 = vmatprep.subr.mxu0 0.0
    %3582 = vmatpush1.msra.mxu0 0.0
    %3583 = vmatprep.subr.mxu0 0.0
    %3584 = vmatpush1.msra.mxu0 0.0
    %3585 = vmatprep.subr.mxu0 0.0
    %3586 = vmatpush1.msra.mxu0 0.0
    %3587 = vmatprep.subr.mxu0 0.0
    %3588 = vmatpush1.msra.mxu0 0.0
    %3589 = vmatprep.subr.mxu0 0.0
    %3590 = vmatpush1.msra.mxu0 0.0
    %3591 = vmatprep.mubr.f32.mxu0 0.0
    %3592 = vmatmul.mubr.f32.gmra.mrb[0].mxu0 %v3522
    %v3593 = vpop.f32.mrb[0].mxu0
    %v3594 = vadd.f32 0.0, %v3593
    %v3595 = vpop.f32.mrb[0].mxu0
    %v3596 = vadd.f32 0.0, %v3595
    %3597 = vdwg.mxu0
    %3598 = vmatprep.subr.mxu0 %v2244
    %3599 = vmatpush1.msra.mxu0 %v2243
    %3600 = vmatprep.subr.mxu0 %v2248
    %3601 = vmatpush1.msra.mxu0 %v2247
    %3602 = vmatprep.subr.mxu0 %v2252
    %3603 = vmatpush1.msra.mxu0 %v2251
    %3604 = vmatprep.subr.mxu0 %v2256
    %3605 = vmatpush1.msra.mxu0 %v2255
    %3606 = vmatprep.subr.mxu0 %v2260
    %3607 = vmatpush1.msra.mxu0 %v2259
    %3608 = vmatprep.subr.mxu0 %v2264
    %3609 = vmatpush1.msra.mxu0 %v2263
    %3610 = vmatprep.subr.mxu0 %v2268
    %3611 = vmatpush1.msra.mxu0 %v2267
    %3612 = vmatprep.subr.mxu0 %v2272
    %3613 = vmatpush1.msra.mxu0 %v2271
    %3614 = vmatprep.subr.mxu0 %v2276
    %3615 = vmatpush1.msra.mxu0 %v2275
    %3616 = vmatprep.subr.mxu0 %v2280
    %3617 = vmatpush1.msra.mxu0 %v2279
    %3618 = vmatprep.subr.mxu0 %v2284
    %3619 = vmatpush1.msra.mxu0 %v2283
    %3620 = vmatprep.subr.mxu0 %v2288
    %3621 = vmatpush1.msra.mxu0 %v2287
    %3622 = vmatprep.subr.mxu0 %v2292
    %3623 = vmatpush1.msra.mxu0 %v2291
    %3624 = vmatprep.subr.mxu0 %v2296
    %3625 = vmatpush1.msra.mxu0 %v2295
    %3626 = vmatprep.subr.mxu0 %v2300
    %3627 = vmatpush1.msra.mxu0 %v2299
    %3628 = vmatprep.subr.mxu0 %v2304
    %3629 = vmatpush1.msra.mxu0 %v2303
    %3630 = vmatprep.subr.mxu0 0.0
    %3631 = vmatpush1.msra.mxu0 0.0
    %3632 = vmatprep.subr.mxu0 0.0
    %3633 = vmatpush1.msra.mxu0 0.0
    %3634 = vmatprep.subr.mxu0 0.0
    %3635 = vmatpush1.msra.mxu0 0.0
    %3636 = vmatprep.subr.mxu0 0.0
    %3637 = vmatpush1.msra.mxu0 0.0
    %3638 = vmatprep.subr.mxu0 0.0
    %3639 = vmatpush1.msra.mxu0 0.0
    %3640 = vmatprep.subr.mxu0 0.0
    %3641 = vmatpush1.msra.mxu0 0.0
    %3642 = vmatprep.subr.mxu0 0.0
    %3643 = vmatpush1.msra.mxu0 0.0
    %3644 = vmatprep.subr.mxu0 0.0
    %3645 = vmatpush1.msra.mxu0 0.0
    %3646 = vmatprep.subr.mxu0 0.0
    %3647 = vmatpush1.msra.mxu0 0.0
    %3648 = vmatprep.subr.mxu0 0.0
    %3649 = vmatpush1.msra.mxu0 0.0
    %3650 = vmatprep.subr.mxu0 0.0
    %3651 = vmatpush1.msra.mxu0 0.0
    %3652 = vmatprep.subr.mxu0 0.0
    %3653 = vmatpush1.msra.mxu0 0.0
    %3654 = vmatprep.subr.mxu0 0.0
    %3655 = vmatpush1.msra.mxu0 0.0
    %3656 = vmatprep.subr.mxu0 0.0
    %3657 = vmatpush1.msra.mxu0 0.0
    %3658 = vmatprep.subr.mxu0 0.0
    %3659 = vmatpush1.msra.mxu0 0.0
    %3660 = vmatprep.subr.mxu0 0.0
    %3661 = vmatpush1.msra.mxu0 0.0
    %3662 = vmatprep.mubr.f32.mxu0 0.0
    %3663 = vmatmul.mubr.f32.gmra.mrb[0].mxu0 %v3522
    %v3664 = vpop.f32.mrb[0].mxu0
    %v3665 = vadd.f32 0.0, %v3664
    %v3666 = vpop.f32.mrb[0].mxu0
    %v3667 = vadd.f32 0.0, %v3666
    %3668 = vdwg.mxu0
    %v3669 = vadd.f32 %v3523, %v3594
    %v3670 = vadd.f32 %v3524, %v3596
    %v3671 = vadd.f32 %v3525, %v3665
    %v3672 = vadd.f32 %v3526, %v3667
    %v3673 = vxor.u32 %v3669, 2147483648
    %v3674 = vmul.f32 %v3673, 1.442695
    %v3675 = vpow.pop %v3674
    %v3676 = vadd.f32 %v3675, 1.0
    %v3677 = vrcp.pop %v3676
    %v3678 = vmul.f32 1.0, %v3677
    %v3679 = vxor.u32 %v3670, 2147483648
    %v3680 = vmul.f32 %v3679, 1.442695
    %v3681 = vpow.pop %v3680
    %v3682 = vadd.f32 %v3681, 1.0
    %v3683 = vrcp.pop %v3682
    %v3684 = vmul.f32 1.0, %v3683
    %v3685 = vtanh.pop %v3671
    %v3686 = vxor.u32 %v3672, 2147483648
    %v3687 = vmul.f32 %v3686, 1.442695
    %v3688 = vpow.pop %v3687
    %v3689 = vadd.f32 %v3688, 1.0
    %v3690 = vrcp.pop %v3689
    %v3691 = vmul.f32 1.0, %v3690
    %v3692 = vmul.f32 %v3684, %v3520
    %v3693 = vmul.f32 %v3678, %v3685
    %v3694 = vadd.f32 %v3692, %v3693
    %v3695 = vtanh.pop %v3694
    %v3696 = vmul.f32 %v3691, %v3695
    %s3697 = scalar_lea.vmem [#allocation10], 8
    %3698 = vst [vmem:[%s3697] sm:$0xff] %v3696
    %s3699 = scalar_lea.vmem [#allocation11], 8
    %3700 = vst [vmem:[%s3699] sm:$0xff] %v3694
    // Predicated region
    $region42: #{encoder_forward.1} parent=1 // pred_check
      _
    $region43: #{encoder_forward.1} parent=1 // pred_check_branch
      %3702 = sbr.rel (0) target = $region45
    $region44: #{encoder_forward.1} parent=1 // pred_region
      %s3704 = ssub.s32 256, 256
      %3705 = vsyncadd [#allocation6], %s3704
      %s3706 = sshll.u32 [#allocation10], 4
      %s3707 = int_to_ptr.vmem [resolvable:$true] %s3706
      %3712 = dma.vmem_to_hbm [thread:$0]  %s3707, 256, %s7, [#allocation6], 128, 128, 8
    $region45: #{encoder_forward.1} parent=1 // pred_fallthru
      _
    // Predicated region
    $region46: #{encoder_forward.1} parent=1 // pred_check
      _
    $region47: #{encoder_forward.1} parent=1 // pred_check_branch
      %3714 = sbr.rel (0) target = $region49
    $region48: #{encoder_forward.1} parent=1 // pred_region
      %s3716 = ssub.s32 256, 256
      %3717 = vsyncadd [#allocation12], %s3716
      %s3718 = sshll.u32 [#allocation11], 4
      %s3719 = int_to_ptr.vmem [resolvable:$true] %s3718
      %3724 = dma.vmem_to_hbm [thread:$0]  %s3719, 256, %s8, [#allocation12], 128, 128, 8
    $region49: #{encoder_forward.1} parent=1 // pred_fallthru
      _
    // Predicated region
    $region50: #{encoder_forward.1} parent=1 // pred_check
      _
    $region51: #{encoder_forward.1} parent=1 // pred_check_branch
      %3726 = sbr.rel (0) target = $region53
    $region52: #{encoder_forward.1} parent=1 // pred_region
      %3727 = dma.done [#allocation6], 256
    $region53: #{encoder_forward.1} parent=1 // pred_fallthru
      _
    // Predicated region
    $region54: #{encoder_forward.1} parent=1 // pred_check
      _
    $region55: #{encoder_forward.1} parent=1 // pred_check_branch
      %3729 = sbr.rel (0) target = $region57
    $region56: #{encoder_forward.1} parent=1 // pred_region
      %3730 = dma.done [#allocation12], 256
    $region57: #{encoder_forward.1} parent=1 // pred_fallthru
      _
    %3731 = vsyncpa [#allocation5], 1
    %3732 = vsyncpa [#allocation8], 1
    %3733 = vsyncpa [#allocation6], 1
    %3734 = vsyncpa [#allocation12], 1

</llo_original>
